<compile_context>
chip_gen: v6e
topology: v6e:2x2x1
jax: 0.10.0
libtpu: 0.0.40
codegen_flags: <defaults>
</compile_context>

<pallas_src>
import functools

import jax
import jax.numpy as jnp
from jax.experimental import pallas as pl
from jax.experimental.pallas import tpu as pltpu


# ----------------------------- Fused transformer kernel -----------------------------

def _make_transformer_kernel(*, depth, heads, dim_head, tile_b, ntok, dim,
                             embed, mean_tokens, head):
    R = tile_b * ntok                     # rows in the resident activation slab
    inner = heads * dim_head

    def _ln(x, g, b):
        mu = jnp.mean(x, axis=-1, keepdims=True)
        var = jnp.mean((x - mu) ** 2, axis=-1, keepdims=True)
        return (x - mu) * jax.lax.rsqrt(var + 1e-5) * g + b   # PyTorch LayerNorm eps

    def _bf(x):                            # matmul operands -> bf16 (f32 accumulation)
        return x.astype(jnp.bfloat16)

    def kernel(*args):
        i = 0
        x_in_ref = args[i]; i += 1
        if embed:
            pw_ref, pb_ref, pos_ref = args[i:i + 3]; i += 3
        (ln1g, ln1b, wqkv, wout, bout,
         ln2g, ln2b, wf1, bf1, wf2, bf2) = args[i:i + 11]; i += 11
        lnfg, lnfb = args[i:i + 2]; i += 2
        if head:
            hlng, hlnb, wh, bh = args[i:i + 4]; i += 4
        o_ref = args[i]; i += 1
        x_acc = args[i]

        d = pl.program_id(1)               # depth is the innermost ("arbitrary") axis

        # ---- layer 0 preamble: load (or embed) this batch tile into the VMEM slab ----
        @pl.when(d == 0)
        def _init():
            if embed:
                x0 = jnp.dot(_bf(x_in_ref[...]), pw_ref[...],
                             preferred_element_type=jnp.float32)
                x0 = x0 + pb_ref[...] + pos_ref[...]
            else:
                x0 = x_in_ref[...].astype(jnp.float32)
            x_acc[...] = x0

        x = x_acc[...]

        # ---- PreNorm + multi-head attention --------------------------------------
        # Single wide QKV matmul (lane-dense), per-batch attention via batched einsum,
        # fused output projection over all heads.
        xn = _ln(x, ln1g[0], ln1b[0])
        qkv = jnp.dot(_bf(xn), wqkv[0], preferred_element_type=jnp.float32)  # (R, 3*inner)

        head_outs = []
        for h in range(heads):             # heads is small; static lane slices
            qh = qkv[:, h * dim_head:(h + 1) * dim_head]
            kh = qkv[:, inner + h * dim_head:inner + (h + 1) * dim_head]
            vh = qkv[:, 2 * inner + h * dim_head:2 * inner + (h + 1) * dim_head]
            qh = qh.reshape(tile_b, ntok, dim_head)
            kh = kh.reshape(tile_b, ntok, dim_head)
            vh = vh.reshape(tile_b, ntok, dim_head)
            # per-batch scores (scale already folded into the Q weights at init)
            s = jnp.einsum('bqd,bkd->bqk', _bf(qh), _bf(kh),
                           preferred_element_type=jnp.float32)
            s = s - jnp.max(s, axis=-1, keepdims=True)
            p = jnp.exp(s)
            p = p * pl.reciprocal(jnp.sum(p, axis=-1, keepdims=True), approx=True)
            oh = jnp.einsum('bqk,bkd->bqd', _bf(p), _bf(vh),
                            preferred_element_type=jnp.float32)
            head_outs.append(oh.reshape(R, dim_head))
        attn = jnp.concatenate(head_outs, axis=-1)                            # (R, inner)
        x = x + jnp.dot(_bf(attn), wout[0],
                        preferred_element_type=jnp.float32) + bout[0]

        # ---- PreNorm + FeedForward (exact erf GELU) -------------------------------
        xn2 = _ln(x, ln2g[0], ln2b[0])
        h1 = jnp.dot(_bf(xn2), wf1[0], preferred_element_type=jnp.float32) + bf1[0]
        h1 = 0.5 * h1 * (1.0 + jax.lax.erf(h1 * (2.0 ** -0.5)))
        x = x + jnp.dot(_bf(h1), wf2[0], preferred_element_type=jnp.float32) + bf2[0]

        x_acc[...] = x

        # ---- last-layer epilogue: final LN (+ token mean) (+ mlp_head) -------------
        @pl.when(d == depth - 1)
        def _final():
            xf = _ln(x, lnfg[...], lnfb[...])
            if mean_tokens:
                xf = jnp.mean(xf.reshape(tile_b, ntok, dim), axis=1)          # (tile_b, dim)
            if head:
                xf = _ln(xf, hlng[...], hlnb[...])
                xf = jnp.dot(_bf(xf), wh[...],
                             preferred_element_type=jnp.float32) + bh[...]
            o_ref[...] = xf.astype(o_ref.dtype)

    return kernel


def _pick_tile_b(nbatch, ntok, mean_tokens, max_rows):
    """Largest divisor of nbatch whose tile stays layout-legal and under max_rows."""
    best = None
    for cand in range(1, nbatch + 1):
        if nbatch % cand:
            continue
        rows = cand * ntok
        if rows > max_rows:
            continue
        full = (cand == nbatch)
        rows_ok = full or (rows % 8 == 0)
        out_ok = full or ((cand % 8 == 0) if mean_tokens else (rows % 8 == 0))
        if rows_ok and out_ok:
            best = cand
    return best if best is not None else nbatch


def run_transformer(x_in, tw, *, nbatch, ntok, dim, heads, dim_head, depth,
                    embed=None, mean_tokens=False, head=None, max_tile_rows=512):
    """One fused pallas_call for a whole Transformer (optionally with embedding
    pre-amble, token-mean epilogue and mlp_head epilogue)."""
    tile_b = _pick_tile_b(nbatch, ntok, mean_tokens, max_tile_rows)
    n_tiles = nbatch // tile_b
    R = tile_b * ntok
    out_rows_tile = tile_b if mean_tokens else R
    out_rows = nbatch if mean_tokens else nbatch * ntok

    in_arrays = [x_in]
    in_specs = [pl.BlockSpec((R, x_in.shape[-1]), lambda bt, d: (bt, 0))]

    if embed is not None:
        pw, pb, pos = embed                                   # patch-embed W/b, pos rows
        in_arrays += [pw, pb, pos]
        in_specs += [pl.BlockSpec(tuple(pw.shape), lambda bt, d: (0, 0)),
                     pl.BlockSpec(tuple(pb.shape), lambda bt, d: (0, 0)),
                     pl.BlockSpec((R, dim), lambda bt, d: (bt, 0))]

    # per-layer weights stacked along a leading depth axis, prefetched per grid step
    for name in ("ln1_g", "ln1_b", "w_qkv", "w_out", "b_out",
                 "ln2_g", "ln2_b", "w_ff1", "b_ff1", "w_ff2", "b_ff2"):
        w = tw[name]
        nzero = w.ndim - 1
        in_arrays.append(w)
        in_specs.append(pl.BlockSpec((1,) + tuple(w.shape[1:]),
                                     lambda bt, d, n=nzero: (d,) + (0,) * n))

    for name in ("lnf_g", "lnf_b"):
        w = tw[name]
        in_arrays.append(w)
        in_specs.append(pl.BlockSpec(tuple(w.shape), lambda bt, d: (0, 0)))

    if head is not None:
        for a in head:                                        # (ln_g, ln_b, w_head, b_head)
            in_arrays.append(a)
            in_specs.append(pl.BlockSpec(tuple(a.shape), lambda bt, d: (0, 0)))

    kernel = _make_transformer_kernel(
        depth=depth, heads=heads, dim_head=dim_head, tile_b=tile_b, ntok=ntok,
        dim=dim, embed=embed is not None, mean_tokens=mean_tokens,
        head=head is not None)

    return pl.pallas_call(
        kernel,
        out_shape=jax.ShapeDtypeStruct((out_rows, dim), x_in.dtype),
        grid_spec=pltpu.PrefetchScalarGridSpec(
            num_scalar_prefetch=0,
            grid=(n_tiles, depth),                            # depth innermost
            in_specs=in_specs,
            out_specs=pl.BlockSpec((out_rows_tile, dim), lambda bt, d: (bt, 0)),
            scratch_shapes=[pltpu.VMEM((R, dim), jnp.float32)]),
        compiler_params=pltpu.CompilerParams(
            dimension_semantics=("parallel", "arbitrary"),    # tiles parallel, layers carry
            vmem_limit_bytes=48 * 1024 * 1024),
    )(*in_arrays)


# ----------------------------- Model glue -----------------------------

def vivit_forward(x, params, cfg):
    """x: (B, C, T, H, W) -> (B, T, dim)"""
    b, c, t, H, W = x.shape
    p = cfg["patch_size"]
    dim = cfg["dim"]
    hh, ww = H // p, W // p
    n = hh * ww
    patch_dim = c * p * p

    # x.transpose(1, 2): (b, c, t, H, W) -> (b, t, c, H, W), then
    # Rearrange 'b t c (h p1) (w p2) -> b t (h w) (p1 p2 c)'
    xr = x.transpose(0, 2, 1, 3, 4)
    xr = xr.reshape(b, t, c, hh, p, ww, p).transpose(0, 1, 3, 5, 4, 6, 2)
    patches = xr.reshape(b * t * n, patch_dim)

    # positional embedding, broadcast over batch, flattened to token rows
    pos = params["pos_embedding"][:, :, :n]                   # (1, t, n, dim)
    pos = jnp.broadcast_to(pos, (b, t, n, dim)).reshape(b * t * n, dim)

    # space transformer: embed + pos + layers + final LN + mean over patch tokens
    x_sp = run_transformer(
        patches, params["space"], nbatch=b * t, ntok=n, dim=dim,
        heads=cfg["heads"], dim_head=cfg["dim_head"], depth=cfg["depth"],
        embed=(params["w_patch"], params["b_patch"], pos),
        mean_tokens=True)                                     # (b*t, dim)

    # temporal transformer: layers + final LN + mlp_head (LN + Linear)
    x_tp = run_transformer(
        x_sp, params["temporal"], nbatch=b, ntok=t, dim=dim,
        heads=cfg["heads"], dim_head=cfg["dim_head"], depth=cfg["depth"],
        head=(params["head_ln_g"], params["head_ln_b"],
              params["w_head"], params["b_head"]))            # (b*t, dim)

    return x_tp.reshape(b, t, dim)


# ----------------------------- Parameter init -----------------------------

def _init_transformer_stacked(key, dim, depth, heads, dim_head, mlp_dim, scale=0.02):
    inner = heads * dim_head
    attn_scale = dim_head ** -0.5
    # fold the attention scale into the Q columns of w_qkv (free at init)
    col_scale = jnp.concatenate([jnp.full((inner,), attn_scale, jnp.float32),
                                 jnp.ones((2 * inner,), jnp.float32)])
    keys = jax.random.split(key, depth)
    w_qkv, w_out, b_out, w_ff1, b_ff1, w_ff2, b_ff2 = [], [], [], [], [], [], []
    for d in range(depth):
        ks = jax.random.split(keys[d], 7)
        wq = jax.random.normal(ks[0], (dim, 3 * inner), jnp.float32) * scale
        wq = wq * col_scale[None, :]
        w_qkv.append(wq.astype(jnp.bfloat16))                 # (dim, 3*inner), bf16
        w_out.append((jax.random.normal(ks[1], (inner, dim), jnp.float32) * scale
                      ).astype(jnp.bfloat16))                 # fused head projection
        b_out.append(jax.random.normal(ks[2], (1, dim), jnp.float32) * scale)
        w_ff1.append((jax.random.normal(ks[3], (dim, mlp_dim), jnp.float32) * scale
                      ).astype(jnp.bfloat16))
        b_ff1.append(jax.random.normal(ks[4], (1, mlp_dim), jnp.float32) * scale)
        w_ff2.append((jax.random.normal(ks[5], (mlp_dim, dim), jnp.float32) * scale
                      ).astype(jnp.bfloat16))
        b_ff2.append(jax.random.normal(ks[6], (1, dim), jnp.float32) * scale)
    return dict(
        ln1_g=jnp.ones((depth, 1, dim), jnp.float32),
        ln1_b=jnp.zeros((depth, 1, dim), jnp.float32),
        w_qkv=jnp.stack(w_qkv), w_out=jnp.stack(w_out), b_out=jnp.stack(b_out),
        ln2_g=jnp.ones((depth, 1, dim), jnp.float32),
        ln2_b=jnp.zeros((depth, 1, dim), jnp.float32),
        w_ff1=jnp.stack(w_ff1), b_ff1=jnp.stack(b_ff1),
        w_ff2=jnp.stack(w_ff2), b_ff2=jnp.stack(b_ff2),
        lnf_g=jnp.ones((1, dim), jnp.float32),
        lnf_b=jnp.zeros((1, dim), jnp.float32),
    )


def init_vivit_params(key, cfg):
    num_patches = (cfg["image_size"] // cfg["patch_size"]) ** 2
    patch_dim = cfg["in_channels"] * cfg["patch_size"] ** 2
    dim = cfg["dim"]
    mlp_dim = dim * cfg["scale_dim"]
    k = jax.random.split(key, 6)
    w_patch = (jax.random.normal(k[0], (patch_dim, dim), jnp.float32) * 0.02
               ).astype(jnp.bfloat16)
    b_patch = jax.random.normal(k[1], (1, dim), jnp.float32) * 0.02
    pos = jax.random.normal(k[2], (1, cfg["num_frames"], num_patches, dim), jnp.float32)
    space = _init_transformer_stacked(k[3], dim, cfg["depth"], cfg["heads"],
                                      cfg["dim_head"], mlp_dim)
    temporal = _init_transformer_stacked(k[4], dim, cfg["depth"], cfg["heads"],
                                         cfg["dim_head"], mlp_dim)
    kh1, kh2 = jax.random.split(k[5])
    w_head = (jax.random.normal(kh1, (dim, dim), jnp.float32) * 0.02
              ).astype(jnp.bfloat16)
    b_head = jax.random.normal(kh2, (1, dim), jnp.float32) * 0.02
    return dict(
        w_patch=w_patch, b_patch=b_patch, pos_embedding=pos,
        space=space, temporal=temporal,
        head_ln_g=jnp.ones((1, dim), jnp.float32),
        head_ln_b=jnp.zeros((1, dim), jnp.float32),
        w_head=w_head, b_head=b_head,
    )


# ----------------------------- Main -----------------------------

if __name__ == "__main__":
    # Toy config: at this scale the kernel is launch/DMA-latency bound; the lane-density
    # and VMEM-budget work above pays off at real ViViT shapes (dim 192-1024, n~196).
    cfg = dict(
        num_frames=4,
        image_size=16,
        patch_size=8,
        dim=32,
        depth=2,
        heads=2,
        in_channels=3,
        dim_head=16,
        scale_dim=4,
    )

    key = jax.random.PRNGKey(0)
    kx, kp = jax.random.split(key)

    # input: (B, C, T, H, W)
    B = 2
    x = jax.random.normal(
        kx, (B, cfg["in_channels"], cfg["num_frames"], cfg["image_size"], cfg["image_size"]),
        jnp.float32)

    params = init_vivit_params(kp, cfg)

    forward = jax.jit(functools.partial(vivit_forward, cfg=cfg))
    out = forward(x, params)
    out = jax.block_until_ready(out)

    assert out.shape == (B, cfg["num_frames"], cfg["dim"]), out.shape
    assert bool(jnp.all(jnp.isfinite(out)))
    print("KERNEL_OK")
</pallas_src>

<mosaic_0001>
module attributes {stable_mosaic.version = 11 : i64} {
  func.func @kernel(%arg0: i32, %arg1: i32, %arg2: memref<32x192xf32, #tpu.memory_space<vmem>>, %arg3: memref<192x32xbf16, #tpu.memory_space<vmem>>, %arg4: memref<1x32xf32, #tpu.memory_space<vmem>>, %arg5: memref<32x32xf32, #tpu.memory_space<vmem>>, %arg6: memref<1x1x32xf32, #tpu.memory_space<vmem>>, %arg7: memref<1x1x32xf32, #tpu.memory_space<vmem>>, %arg8: memref<1x32x96xbf16, #tpu.memory_space<vmem>>, %arg9: memref<1x32x32xbf16, #tpu.memory_space<vmem>>, %arg10: memref<1x1x32xf32, #tpu.memory_space<vmem>>, %arg11: memref<1x1x32xf32, #tpu.memory_space<vmem>>, %arg12: memref<1x1x32xf32, #tpu.memory_space<vmem>>, %arg13: memref<1x32x128xbf16, #tpu.memory_space<vmem>>, %arg14: memref<1x1x128xf32, #tpu.memory_space<vmem>>, %arg15: memref<1x128x32xbf16, #tpu.memory_space<vmem>>, %arg16: memref<1x1x32xf32, #tpu.memory_space<vmem>>, %arg17: memref<1x32xf32, #tpu.memory_space<vmem>>, %arg18: memref<1x32xf32, #tpu.memory_space<vmem>>, %arg19: memref<8x32xf32, #tpu.memory_space<vmem>>, %arg20: memref<32x32xf32, #tpu.memory_space<vmem>>) attributes {dimension_semantics = [#tpu.dimension_semantics<parallel>, #tpu.dimension_semantics<arbitrary>], iteration_bounds = array<i64: 1, 2>, scalar_prefetch = 0 : i64, scratch_operands = 1 : i64, tpu.core_type = #tpu.core_type<tc>, window_params = [{transform_indices = @transform_0, window_bounds = array<i64: 32, 192>}, {pipeline_mode = #tpu.pipeline_mode<synchronous>, transform_indices = @transform_1, window_bounds = array<i64: 192, 32>}, {pipeline_mode = #tpu.pipeline_mode<synchronous>, transform_indices = @transform_2, window_bounds = array<i64: 1, 32>}, {transform_indices = @transform_3, window_bounds = array<i64: 32, 32>}, {transform_indices = @transform_4, window_bounds = array<i64: 1, 1, 32>}, {transform_indices = @transform_5, window_bounds = array<i64: 1, 1, 32>}, {transform_indices = @transform_6, window_bounds = array<i64: 1, 32, 96>}, {transform_indices = @transform_7, window_bounds = array<i64: 1, 32, 32>}, {transform_indices = @transform_8, window_bounds = array<i64: 1, 1, 32>}, {transform_indices = @transform_9, window_bounds = array<i64: 1, 1, 32>}, {transform_indices = @transform_10, window_bounds = array<i64: 1, 1, 32>}, {transform_indices = @transform_11, window_bounds = array<i64: 1, 32, 128>}, {transform_indices = @transform_12, window_bounds = array<i64: 1, 1, 128>}, {transform_indices = @transform_13, window_bounds = array<i64: 1, 128, 32>}, {transform_indices = @transform_14, window_bounds = array<i64: 1, 1, 32>}, {pipeline_mode = #tpu.pipeline_mode<synchronous>, transform_indices = @transform_15, window_bounds = array<i64: 1, 32>}, {pipeline_mode = #tpu.pipeline_mode<synchronous>, transform_indices = @transform_16, window_bounds = array<i64: 1, 32>}, {transform_indices = @transform_17, window_bounds = array<i64: 8, 32>}]} {
    %c0_i32 = arith.constant 0 : i32
    %0 = arith.cmpi eq, %arg1, %c0_i32 : i32
    %1 = arith.extui %0 : i1 to i32
    %c0_i32_0 = arith.constant 0 : i32
    %2 = arith.cmpi ne, %1, %c0_i32_0 : i32
    scf.if %2 {
      %c0_62 = arith.constant 0 : index
      %c0_63 = arith.constant 0 : index
      %145 = vector.load %arg2[%c0_62, %c0_63] : memref<32x192xf32, #tpu.memory_space<vmem>>, vector<32x192xf32>
      %146 = arith.truncf %145 : vector<32x192xf32> to vector<32x192xbf16>
      %c0_64 = arith.constant 0 : index
      %c0_65 = arith.constant 0 : index
      %147 = vector.load %arg3[%c0_64, %c0_65] : memref<192x32xbf16, #tpu.memory_space<vmem>>, vector<192x32xbf16>
      %cst_66 = arith.constant dense<0.000000e+00> : vector<32x32xf32>
      %148 = tpu.matmul %146, %147, %cst_66 {dimension_numbers = #tpu.dot_dimension_numbers<[1], [0], [0], [1], [0, 0, 1, 1], [], []>} : vector<32x192xbf16>, vector<192x32xbf16>, vector<32x32xf32> -> vector<32x32xf32>
      %c0_67 = arith.constant 0 : index
      %c0_68 = arith.constant 0 : index
      %149 = vector.load %arg4[%c0_67, %c0_68] : memref<1x32xf32, #tpu.memory_space<vmem>>, vector<1x32xf32>
      %150 = vector.broadcast %149 : vector<1x32xf32> to vector<32x32xf32>
      %151 = arith.addf %148, %150 : vector<32x32xf32>
      %c0_69 = arith.constant 0 : index
      %c0_70 = arith.constant 0 : index
      %152 = vector.load %arg5[%c0_69, %c0_70] : memref<32x32xf32, #tpu.memory_space<vmem>>, vector<32x32xf32>
      %153 = arith.addf %151, %152 : vector<32x32xf32>
      %c0_71 = arith.constant 0 : index
      %c0_72 = arith.constant 0 : index
      %154 = vector.load %arg20[%c0_71, %c0_72] : memref<32x32xf32, #tpu.memory_space<vmem>>, vector<32x32xf32>
      tpu.vector_store %arg20[%c0_71, %c0_72], %153 {strides = array<i32>} : memref<32x32xf32, #tpu.memory_space<vmem>>, vector<32x32xf32>,
    } else {
    }
    %c0 = arith.constant 0 : index
    %c0_1 = arith.constant 0 : index
    %3 = vector.load %arg20[%c0, %c0_1] : memref<32x32xf32, #tpu.memory_space<vmem>>, vector<32x32xf32>
    %c0_2 = arith.constant 0 : index
    %c0_3 = arith.constant 0 : index
    %c0_4 = arith.constant 0 : index
    %4 = vector.load %arg6[%c0_2, %c0_3, %c0_4] : memref<1x1x32xf32, #tpu.memory_space<vmem>>, vector<1x1x32xf32>
    %5 = vector.shape_cast %4 : vector<1x1x32xf32> to vector<1x32xf32>
    %c0_5 = arith.constant 0 : index
    %c0_6 = arith.constant 0 : index
    %c0_7 = arith.constant 0 : index
    %6 = vector.load %arg7[%c0_5, %c0_6, %c0_7] : memref<1x1x32xf32, #tpu.memory_space<vmem>>, vector<1x1x32xf32>
    %7 = vector.shape_cast %6 : vector<1x1x32xf32> to vector<1x32xf32>
    %cst = arith.constant dense<0.000000e+00> : vector<32xf32>
    %8 = vector.multi_reduction <add>, %3, %cst [1] : vector<32x32xf32> to vector<32xf32>
    %9 = vector.shape_cast %8 : vector<32xf32> to vector<32x1xf32>
    %cst_8 = arith.constant 3.200000e+01 : f32
    %10 = vector.broadcast %cst_8 : f32 to vector<32x1xf32>
    %11 = arith.divf %9, %10 : vector<32x1xf32>
    %12 = vector.broadcast %11 : vector<32x1xf32> to vector<32x32xf32>
    %13 = arith.subf %3, %12 : vector<32x32xf32>
    %14 = arith.mulf %13, %13 : vector<32x32xf32>
    %cst_9 = arith.constant dense<0.000000e+00> : vector<32xf32>
    %15 = vector.multi_reduction <add>, %14, %cst_9 [1] : vector<32x32xf32> to vector<32xf32>
    %16 = vector.shape_cast %15 : vector<32xf32> to vector<32x1xf32>
    %cst_10 = arith.constant 3.200000e+01 : f32
    %17 = vector.broadcast %cst_10 : f32 to vector<32x1xf32>
    %18 = arith.divf %16, %17 : vector<32x1xf32>
    %19 = vector.broadcast %11 : vector<32x1xf32> to vector<32x32xf32>
    %20 = arith.subf %3, %19 : vector<32x32xf32>
    %cst_11 = arith.constant 9.99999974E-6 : f32
    %21 = vector.broadcast %cst_11 : f32 to vector<32x1xf32>
    %22 = arith.addf %18, %21 : vector<32x1xf32>
    %23 = math.rsqrt %22 : vector<32x1xf32>
    %24 = vector.broadcast %23 : vector<32x1xf32> to vector<32x32xf32>
    %25 = arith.mulf %20, %24 : vector<32x32xf32>
    %26 = vector.broadcast %5 : vector<1x32xf32> to vector<32x32xf32>
    %27 = arith.mulf %25, %26 : vector<32x32xf32>
    %28 = vector.broadcast %7 : vector<1x32xf32> to vector<32x32xf32>
    %29 = arith.addf %27, %28 : vector<32x32xf32>
    %30 = arith.truncf %29 : vector<32x32xf32> to vector<32x32xbf16>
    %c0_12 = arith.constant 0 : index
    %c0_13 = arith.constant 0 : index
    %c0_14 = arith.constant 0 : index
    %31 = vector.load %arg8[%c0_12, %c0_13, %c0_14] : memref<1x32x96xbf16, #tpu.memory_space<vmem>>, vector<1x32x96xbf16>
    %32 = vector.shape_cast %31 : vector<1x32x96xbf16> to vector<32x96xbf16>
    %cst_15 = arith.constant dense<0.000000e+00> : vector<32x96xf32>
    %33 = tpu.matmul %30, %32, %cst_15 {dimension_numbers = #tpu.dot_dimension_numbers<[1], [0], [0], [1], [0, 0, 1, 1], [], []>} : vector<32x32xbf16>, vector<32x96xbf16>, vector<32x96xf32> -> vector<32x96xf32>
    %34 = vector.extract_strided_slice %33 {offsets = [0, 0], sizes = [32, 16], strides = [1, 1]} : vector<32x96xf32> to vector<32x16xf32>
    %35 = vector.extract_strided_slice %33 {offsets = [0, 32], sizes = [32, 16], strides = [1, 1]} : vector<32x96xf32> to vector<32x16xf32>
    %36 = vector.extract_strided_slice %33 {offsets = [0, 64], sizes = [32, 16], strides = [1, 1]} : vector<32x96xf32> to vector<32x16xf32>
    %37 = vector.shape_cast %34 : vector<32x16xf32> to vector<8x4x16xf32>
    %38 = vector.shape_cast %35 : vector<32x16xf32> to vector<8x4x16xf32>
    %39 = vector.shape_cast %36 : vector<32x16xf32> to vector<8x4x16xf32>
    %40 = arith.truncf %37 : vector<8x4x16xf32> to vector<8x4x16xbf16>
    %41 = arith.truncf %38 : vector<8x4x16xf32> to vector<8x4x16xbf16>
    "tpu.trace_start"() <{level = 10 : i32, message = "bqd,bkd->bqk"}> : () -> ()
    %cst_16 = arith.constant dense<0.000000e+00> : vector<8x4x4xf32>
    %42 = tpu.matmul %40, %41, %cst_16 {dimension_numbers = #tpu.dot_dimension_numbers<[2], [2], [1], [1], [0, 0, 0, 1, 1, 1], [0], [0]>} : vector<8x4x16xbf16>, vector<8x4x16xbf16>, vector<8x4x4xf32> -> vector<8x4x4xf32>
    "tpu.trace_stop"() : () -> ()
    %cst_17 = arith.constant dense<0xFF800000> : vector<8x4xf32>
    %43 = vector.multi_reduction <maximumf>, %42, %cst_17 [2] : vector<8x4x4xf32> to vector<8x4xf32>
    %44 = vector.shape_cast %43 : vector<8x4xf32> to vector<8x4x1xf32>
    %45 = vector.broadcast %44 : vector<8x4x1xf32> to vector<8x4x4xf32>
    %46 = arith.subf %42, %45 : vector<8x4x4xf32>
    %47 = math.exp %46 : vector<8x4x4xf32>
    %cst_18 = arith.constant dense<0.000000e+00> : vector<8x4xf32>
    %48 = vector.multi_reduction <add>, %47, %cst_18 [2] : vector<8x4x4xf32> to vector<8x4xf32>
    %49 = vector.shape_cast %48 : vector<8x4xf32> to vector<8x4x1xf32>
    %50 = tpu.reciprocal %49 {approx = true} : vector<8x4x1xf32> -> vector<8x4x1xf32>
    %51 = vector.broadcast %50 : vector<8x4x1xf32> to vector<8x4x4xf32>
    %52 = arith.mulf %47, %51 : vector<8x4x4xf32>
    %53 = arith.truncf %52 : vector<8x4x4xf32> to vector<8x4x4xbf16>
    %54 = arith.truncf %39 : vector<8x4x16xf32> to vector<8x4x16xbf16>
    "tpu.trace_start"() <{level = 10 : i32, message = "bqk,bkd->bqd"}> : () -> ()
    %cst_19 = arith.constant dense<0.000000e+00> : vector<8x4x16xf32>
    %55 = tpu.matmul %53, %54, %cst_19 {dimension_numbers = #tpu.dot_dimension_numbers<[2], [1], [1], [2], [0, 0, 0, 1, 1, 2], [0], [0]>} : vector<8x4x4xbf16>, vector<8x4x16xbf16>, vector<8x4x16xf32> -> vector<8x4x16xf32>
    "tpu.trace_stop"() : () -> ()
    %56 = vector.shape_cast %55 : vector<8x4x16xf32> to vector<32x16xf32>
    %57 = vector.extract_strided_slice %33 {offsets = [0, 16], sizes = [32, 16], strides = [1, 1]} : vector<32x96xf32> to vector<32x16xf32>
    %58 = vector.extract_strided_slice %33 {offsets = [0, 48], sizes = [32, 16], strides = [1, 1]} : vector<32x96xf32> to vector<32x16xf32>
    %59 = vector.extract_strided_slice %33 {offsets = [0, 80], sizes = [32, 16], strides = [1, 1]} : vector<32x96xf32> to vector<32x16xf32>
    %60 = vector.shape_cast %57 : vector<32x16xf32> to vector<8x4x16xf32>
    %61 = vector.shape_cast %58 : vector<32x16xf32> to vector<8x4x16xf32>
    %62 = vector.shape_cast %59 : vector<32x16xf32> to vector<8x4x16xf32>
    %63 = arith.truncf %60 : vector<8x4x16xf32> to vector<8x4x16xbf16>
    %64 = arith.truncf %61 : vector<8x4x16xf32> to vector<8x4x16xbf16>
    "tpu.trace_start"() <{level = 10 : i32, message = "bqd,bkd->bqk"}> : () -> ()
    %cst_20 = arith.constant dense<0.000000e+00> : vector<8x4x4xf32>
    %65 = tpu.matmul %63, %64, %cst_20 {dimension_numbers = #tpu.dot_dimension_numbers<[2], [2], [1], [1], [0, 0, 0, 1, 1, 1], [0], [0]>} : vector<8x4x16xbf16>, vector<8x4x16xbf16>, vector<8x4x4xf32> -> vector<8x4x4xf32>
    "tpu.trace_stop"() : () -> ()
    %cst_21 = arith.constant dense<0xFF800000> : vector<8x4xf32>
    %66 = vector.multi_reduction <maximumf>, %65, %cst_21 [2] : vector<8x4x4xf32> to vector<8x4xf32>
    %67 = vector.shape_cast %66 : vector<8x4xf32> to vector<8x4x1xf32>
    %68 = vector.broadcast %67 : vector<8x4x1xf32> to vector<8x4x4xf32>
    %69 = arith.subf %65, %68 : vector<8x4x4xf32>
    %70 = math.exp %69 : vector<8x4x4xf32>
    %cst_22 = arith.constant dense<0.000000e+00> : vector<8x4xf32>
    %71 = vector.multi_reduction <add>, %70, %cst_22 [2] : vector<8x4x4xf32> to vector<8x4xf32>
    %72 = vector.shape_cast %71 : vector<8x4xf32> to vector<8x4x1xf32>
    %73 = tpu.reciprocal %72 {approx = true} : vector<8x4x1xf32> -> vector<8x4x1xf32>
    %74 = vector.broadcast %73 : vector<8x4x1xf32> to vector<8x4x4xf32>
    %75 = arith.mulf %70, %74 : vector<8x4x4xf32>
    %76 = arith.truncf %75 : vector<8x4x4xf32> to vector<8x4x4xbf16>
    %77 = arith.truncf %62 : vector<8x4x16xf32> to vector<8x4x16xbf16>
    "tpu.trace_start"() <{level = 10 : i32, message = "bqk,bkd->bqd"}> : () -> ()
    %cst_23 = arith.constant dense<0.000000e+00> : vector<8x4x16xf32>
    %78 = tpu.matmul %76, %77, %cst_23 {dimension_numbers = #tpu.dot_dimension_numbers<[2], [1], [1], [2], [0, 0, 0, 1, 1, 2], [0], [0]>} : vector<8x4x4xbf16>, vector<8x4x16xbf16>, vector<8x4x16xf32> -> vector<8x4x16xf32>
    "tpu.trace_stop"() : () -> ()
    %79 = vector.shape_cast %78 : vector<8x4x16xf32> to vector<32x16xf32>
    %80 = tpu.concatenate %56, %79 in 1 : vector<32x16xf32>, vector<32x16xf32> -> vector<32x32xf32>
    %81 = arith.truncf %80 : vector<32x32xf32> to vector<32x32xbf16>
    %c0_24 = arith.constant 0 : index
    %c0_25 = arith.constant 0 : index
    %c0_26 = arith.constant 0 : index
    %82 = vector.load %arg9[%c0_24, %c0_25, %c0_26] : memref<1x32x32xbf16, #tpu.memory_space<vmem>>, vector<1x32x32xbf16>
    %83 = vector.shape_cast %82 : vector<1x32x32xbf16> to vector<32x32xbf16>
    %cst_27 = arith.constant dense<0.000000e+00> : vector<32x32xf32>
    %84 = tpu.matmul %81, %83, %cst_27 {dimension_numbers = #tpu.dot_dimension_numbers<[1], [0], [0], [1], [0, 0, 1, 1], [], []>} : vector<32x32xbf16>, vector<32x32xbf16>, vector<32x32xf32> -> vector<32x32xf32>
    %85 = arith.addf %3, %84 : vector<32x32xf32>
    %c0_28 = arith.constant 0 : index
    %c0_29 = arith.constant 0 : index
    %c0_30 = arith.constant 0 : index
    %86 = vector.load %arg10[%c0_28, %c0_29, %c0_30] : memref<1x1x32xf32, #tpu.memory_space<vmem>>, vector<1x1x32xf32>
    %87 = vector.shape_cast %86 : vector<1x1x32xf32> to vector<1x32xf32>
    %88 = vector.broadcast %87 : vector<1x32xf32> to vector<32x32xf32>
    %89 = arith.addf %85, %88 : vector<32x32xf32>
    %c0_31 = arith.constant 0 : index
    %c0_32 = arith.constant 0 : index
    %c0_33 = arith.constant 0 : index
    %90 = vector.load %arg11[%c0_31, %c0_32, %c0_33] : memref<1x1x32xf32, #tpu.memory_space<vmem>>, vector<1x1x32xf32>
    %91 = vector.shape_cast %90 : vector<1x1x32xf32> to vector<1x32xf32>
    %c0_34 = arith.constant 0 : index
    %c0_35 = arith.constant 0 : index
    %c0_36 = arith.constant 0 : index
    %92 = vector.load %arg12[%c0_34, %c0_35, %c0_36] : memref<1x1x32xf32, #tpu.memory_space<vmem>>, vector<1x1x32xf32>
    %93 = vector.shape_cast %92 : vector<1x1x32xf32> to vector<1x32xf32>
    %cst_37 = arith.constant dense<0.000000e+00> : vector<32xf32>
    %94 = vector.multi_reduction <add>, %89, %cst_37 [1] : vector<32x32xf32> to vector<32xf32>
    %95 = vector.shape_cast %94 : vector<32xf32> to vector<32x1xf32>
    %cst_38 = arith.constant 3.200000e+01 : f32
    %96 = vector.broadcast %cst_38 : f32 to vector<32x1xf32>
    %97 = arith.divf %95, %96 : vector<32x1xf32>
    %98 = vector.broadcast %97 : vector<32x1xf32> to vector<32x32xf32>
    %99 = arith.subf %89, %98 : vector<32x32xf32>
    %100 = arith.mulf %99, %99 : vector<32x32xf32>
    %cst_39 = arith.constant dense<0.000000e+00> : vector<32xf32>
    %101 = vector.multi_reduction <add>, %100, %cst_39 [1] : vector<32x32xf32> to vector<32xf32>
    %102 = vector.shape_cast %101 : vector<32xf32> to vector<32x1xf32>
    %cst_40 = arith.constant 3.200000e+01 : f32
    %103 = vector.broadcast %cst_40 : f32 to vector<32x1xf32>
    %104 = arith.divf %102, %103 : vector<32x1xf32>
    %105 = vector.broadcast %97 : vector<32x1xf32> to vector<32x32xf32>
    %106 = arith.subf %89, %105 : vector<32x32xf32>
    %cst_41 = arith.constant 9.99999974E-6 : f32
    %107 = vector.broadcast %cst_41 : f32 to vector<32x1xf32>
    %108 = arith.addf %104, %107 : vector<32x1xf32>
    %109 = math.rsqrt %108 : vector<32x1xf32>
    %110 = vector.broadcast %109 : vector<32x1xf32> to vector<32x32xf32>
    %111 = arith.mulf %106, %110 : vector<32x32xf32>
    %112 = vector.broadcast %91 : vector<1x32xf32> to vector<32x32xf32>
    %113 = arith.mulf %111, %112 : vector<32x32xf32>
    %114 = vector.broadcast %93 : vector<1x32xf32> to vector<32x32xf32>
    %115 = arith.addf %113, %114 : vector<32x32xf32>
    %116 = arith.truncf %115 : vector<32x32xf32> to vector<32x32xbf16>
    %c0_42 = arith.constant 0 : index
    %c0_43 = arith.constant 0 : index
    %c0_44 = arith.constant 0 : index
    %117 = vector.load %arg13[%c0_42, %c0_43, %c0_44] : memref<1x32x128xbf16, #tpu.memory_space<vmem>>, vector<1x32x128xbf16>
    %118 = vector.shape_cast %117 : vector<1x32x128xbf16> to vector<32x128xbf16>
    %cst_45 = arith.constant dense<0.000000e+00> : vector<32x128xf32>
    %119 = tpu.matmul %116, %118, %cst_45 {dimension_numbers = #tpu.dot_dimension_numbers<[1], [0], [0], [1], [0, 0, 1, 1], [], []>} : vector<32x32xbf16>, vector<32x128xbf16>, vector<32x128xf32> -> vector<32x128xf32>
    %c0_46 = arith.constant 0 : index
    %c0_47 = arith.constant 0 : index
    %c0_48 = arith.constant 0 : index
    %120 = vector.load %arg14[%c0_46, %c0_47, %c0_48] : memref<1x1x128xf32, #tpu.memory_space<vmem>>, vector<1x1x128xf32>
    %121 = vector.shape_cast %120 : vector<1x1x128xf32> to vector<1x128xf32>
    %122 = vector.broadcast %121 : vector<1x128xf32> to vector<32x128xf32>
    %123 = arith.addf %119, %122 : vector<32x128xf32>
    %cst_49 = arith.constant 5.000000e-01 : f32
    %124 = vector.broadcast %cst_49 : f32 to vector<32x128xf32>
    %125 = arith.mulf %124, %123 : vector<32x128xf32>
    %cst_50 = arith.constant 0.707106769 : f32
    %126 = vector.broadcast %cst_50 : f32 to vector<32x128xf32>
    %127 = arith.mulf %123, %126 : vector<32x128xf32>
    %128 = math.erf %127 : vector<32x128xf32>
    %cst_51 = arith.constant 1.000000e+00 : f32
    %129 = vector.broadcast %cst_51 : f32 to vector<32x128xf32>
    %130 = arith.addf %129, %128 : vector<32x128xf32>
    %131 = arith.mulf %125, %130 : vector<32x128xf32>
    %132 = arith.truncf %131 : vector<32x128xf32> to vector<32x128xbf16>
    %c0_52 = arith.constant 0 : index
    %c0_53 = arith.constant 0 : index
    %c0_54 = arith.constant 0 : index
    %133 = vector.load %arg15[%c0_52, %c0_53, %c0_54] : memref<1x128x32xbf16, #tpu.memory_space<vmem>>, vector<1x128x32xbf16>
    %134 = vector.shape_cast %133 : vector<1x128x32xbf16> to vector<128x32xbf16>
    %cst_55 = arith.constant dense<0.000000e+00> : vector<32x32xf32>
    %135 = tpu.matmul %132, %134, %cst_55 {dimension_numbers = #tpu.dot_dimension_numbers<[1], [0], [0], [1], [0, 0, 1, 1], [], []>} : vector<32x128xbf16>, vector<128x32xbf16>, vector<32x32xf32> -> vector<32x32xf32>
    %136 = arith.addf %89, %135 : vector<32x32xf32>
    %c0_56 = arith.constant 0 : index
    %c0_57 = arith.constant 0 : index
    %c0_58 = arith.constant 0 : index
    %137 = vector.load %arg16[%c0_56, %c0_57, %c0_58] : memref<1x1x32xf32, #tpu.memory_space<vmem>>, vector<1x1x32xf32>
    %138 = vector.shape_cast %137 : vector<1x1x32xf32> to vector<1x32xf32>
    %139 = vector.broadcast %138 : vector<1x32xf32> to vector<32x32xf32>
    %140 = arith.addf %136, %139 : vector<32x32xf32>
    %c0_59 = arith.constant 0 : index
    %c0_60 = arith.constant 0 : index
    %141 = vector.load %arg20[%c0_59, %c0_60] : memref<32x32xf32, #tpu.memory_space<vmem>>, vector<32x32xf32>
    tpu.vector_store %arg20[%c0_59, %c0_60], %140 {strides = array<i32>} : memref<32x32xf32, #tpu.memory_space<vmem>>, vector<32x32xf32>,
    %c1_i32 = arith.constant 1 : i32
    %142 = arith.cmpi eq, %arg1, %c1_i32 : i32
    %143 = arith.extui %142 : i1 to i32
    %c0_i32_61 = arith.constant 0 : i32
    %144 = arith.cmpi ne, %143, %c0_i32_61 : i32
    scf.if %144 {
      %c0_62 = arith.constant 0 : index
      %c0_63 = arith.constant 0 : index
      %145 = vector.load %arg17[%c0_62, %c0_63] : memref<1x32xf32, #tpu.memory_space<vmem>>, vector<1x32xf32>
      %c0_64 = arith.constant 0 : index
      %c0_65 = arith.constant 0 : index
      %146 = vector.load %arg18[%c0_64, %c0_65] : memref<1x32xf32, #tpu.memory_space<vmem>>, vector<1x32xf32>
      %cst_66 = arith.constant dense<0.000000e+00> : vector<32xf32>
      %147 = vector.multi_reduction <add>, %140, %cst_66 [1] : vector<32x32xf32> to vector<32xf32>
      %148 = vector.shape_cast %147 : vector<32xf32> to vector<32x1xf32>
      %cst_67 = arith.constant 3.200000e+01 : f32
      %149 = vector.broadcast %cst_67 : f32 to vector<32x1xf32>
      %150 = arith.divf %148, %149 : vector<32x1xf32>
      %151 = vector.broadcast %150 : vector<32x1xf32> to vector<32x32xf32>
      %152 = arith.subf %140, %151 : vector<32x32xf32>
      %153 = arith.mulf %152, %152 : vector<32x32xf32>
      %cst_68 = arith.constant dense<0.000000e+00> : vector<32xf32>
      %154 = vector.multi_reduction <add>, %153, %cst_68 [1] : vector<32x32xf32> to vector<32xf32>
      %155 = vector.shape_cast %154 : vector<32xf32> to vector<32x1xf32>
      %cst_69 = arith.constant 3.200000e+01 : f32
      %156 = vector.broadcast %cst_69 : f32 to vector<32x1xf32>
      %157 = arith.divf %155, %156 : vector<32x1xf32>
      %158 = vector.broadcast %150 : vector<32x1xf32> to vector<32x32xf32>
      %159 = arith.subf %140, %158 : vector<32x32xf32>
      %cst_70 = arith.constant 9.99999974E-6 : f32
      %160 = vector.broadcast %cst_70 : f32 to vector<32x1xf32>
      %161 = arith.addf %157, %160 : vector<32x1xf32>
      %162 = math.rsqrt %161 : vector<32x1xf32>
      %163 = vector.broadcast %162 : vector<32x1xf32> to vector<32x32xf32>
      %164 = arith.mulf %159, %163 : vector<32x32xf32>
      %165 = vector.broadcast %145 : vector<1x32xf32> to vector<32x32xf32>
      %166 = arith.mulf %164, %165 : vector<32x32xf32>
      %167 = vector.broadcast %146 : vector<1x32xf32> to vector<32x32xf32>
      %168 = arith.addf %166, %167 : vector<32x32xf32>
      %169 = vector.shape_cast %168 : vector<32x32xf32> to vector<8x4x32xf32>
      %cst_71 = arith.constant dense<0.000000e+00> : vector<8x32xf32>
      %170 = vector.multi_reduction <add>, %169, %cst_71 [1] : vector<8x4x32xf32> to vector<8x32xf32>
      %cst_72 = arith.constant 4.000000e+00 : f32
      %171 = vector.broadcast %cst_72 : f32 to vector<8x32xf32>
      %172 = arith.divf %170, %171 : vector<8x32xf32>
      %c0_73 = arith.constant 0 : index
      %c0_74 = arith.constant 0 : index
      %173 = vector.load %arg19[%c0_73, %c0_74] : memref<8x32xf32, #tpu.memory_space<vmem>>, vector<8x32xf32>
      tpu.vector_store %arg19[%c0_73, %c0_74], %172 {strides = array<i32>} : memref<8x32xf32, #tpu.memory_space<vmem>>, vector<8x32xf32>,
    } else {
    }
    return
  }
  func.func @transform_0(%arg0: i32, %arg1: i32) -> (i32, i32) {
    %c0_i32 = arith.constant 0 : i32
    %c0_i32_0 = arith.constant 0 : i32
    return %arg0, %c0_i32 : i32, i32
  }
  func.func @transform_1(%arg0: i32, %arg1: i32) -> (i32, i32) {
    %c0_i32 = arith.constant 0 : i32
    %c0_i32_0 = arith.constant 0 : i32
    %c0_i32_1 = arith.constant 0 : i32
    return %c0_i32, %c0_i32_0 : i32, i32
  }
  func.func @transform_2(%arg0: i32, %arg1: i32) -> (i32, i32) {
    %c0_i32 = arith.constant 0 : i32
    %c0_i32_0 = arith.constant 0 : i32
    %c0_i32_1 = arith.constant 0 : i32
    return %c0_i32, %c0_i32_0 : i32, i32
  }
  func.func @transform_3(%arg0: i32, %arg1: i32) -> (i32, i32) {
    %c0_i32 = arith.constant 0 : i32
    %c0_i32_0 = arith.constant 0 : i32
    return %arg0, %c0_i32 : i32, i32
  }
  func.func @transform_4(%arg0: i32, %arg1: i32) -> (i32, i32, i32) {
    %c0_i32 = arith.constant 0 : i32
    %c0_i32_0 = arith.constant 0 : i32
    %c0_i32_1 = arith.constant 0 : i32
    return %arg1, %c0_i32, %c0_i32_0 : i32, i32, i32
  }
  func.func @transform_5(%arg0: i32, %arg1: i32) -> (i32, i32, i32) {
    %c0_i32 = arith.constant 0 : i32
    %c0_i32_0 = arith.constant 0 : i32
    %c0_i32_1 = arith.constant 0 : i32
    return %arg1, %c0_i32, %c0_i32_0 : i32, i32, i32
  }
  func.func @transform_6(%arg0: i32, %arg1: i32) -> (i32, i32, i32) {
    %c0_i32 = arith.constant 0 : i32
    %c0_i32_0 = arith.constant 0 : i32
    %c0_i32_1 = arith.constant 0 : i32
    return %arg1, %c0_i32, %c0_i32_0 : i32, i32, i32
  }
  func.func @transform_7(%arg0: i32, %arg1: i32) -> (i32, i32, i32) {
    %c0_i32 = arith.constant 0 : i32
    %c0_i32_0 = arith.constant 0 : i32
    %c0_i32_1 = arith.constant 0 : i32
    return %arg1, %c0_i32, %c0_i32_0 : i32, i32, i32
  }
  func.func @transform_8(%arg0: i32, %arg1: i32) -> (i32, i32, i32) {
    %c0_i32 = arith.constant 0 : i32
    %c0_i32_0 = arith.constant 0 : i32
    %c0_i32_1 = arith.constant 0 : i32
    return %arg1, %c0_i32, %c0_i32_0 : i32, i32, i32
  }
  func.func @transform_9(%arg0: i32, %arg1: i32) -> (i32, i32, i32) {
    %c0_i32 = arith.constant 0 : i32
    %c0_i32_0 = arith.constant 0 : i32
    %c0_i32_1 = arith.constant 0 : i32
    return %arg1, %c0_i32, %c0_i32_0 : i32, i32, i32
  }
  func.func @transform_10(%arg0: i32, %arg1: i32) -> (i32, i32, i32) {
    %c0_i32 = arith.constant 0 : i32
    %c0_i32_0 = arith.constant 0 : i32
    %c0_i32_1 = arith.constant 0 : i32
    return %arg1, %c0_i32, %c0_i32_0 : i32, i32, i32
  }
  func.func @transform_11(%arg0: i32, %arg1: i32) -> (i32, i32, i32) {
    %c0_i32 = arith.constant 0 : i32
    %c0_i32_0 = arith.constant 0 : i32
    %c0_i32_1 = arith.constant 0 : i32
    return %arg1, %c0_i32, %c0_i32_0 : i32, i32, i32
  }
  func.func @transform_12(%arg0: i32, %arg1: i32) -> (i32, i32, i32) {
    %c0_i32 = arith.constant 0 : i32
    %c0_i32_0 = arith.constant 0 : i32
    %c0_i32_1 = arith.constant 0 : i32
    return %arg1, %c0_i32, %c0_i32_0 : i32, i32, i32
  }
  func.func @transform_13(%arg0: i32, %arg1: i32) -> (i32, i32, i32) {
    %c0_i32 = arith.constant 0 : i32
    %c0_i32_0 = arith.constant 0 : i32
    %c0_i32_1 = arith.constant 0 : i32
    return %arg1, %c0_i32, %c0_i32_0 : i32, i32, i32
  }
  func.func @transform_14(%arg0: i32, %arg1: i32) -> (i32, i32, i32) {
    %c0_i32 = arith.constant 0 : i32
    %c0_i32_0 = arith.constant 0 : i32
    %c0_i32_1 = arith.constant 0 : i32
    return %arg1, %c0_i32, %c0_i32_0 : i32, i32, i32
  }
  func.func @transform_15(%arg0: i32, %arg1: i32) -> (i32, i32) {
    %c0_i32 = arith.constant 0 : i32
    %c0_i32_0 = arith.constant 0 : i32
    %c0_i32_1 = arith.constant 0 : i32
    return %c0_i32, %c0_i32_0 : i32, i32
  }
  func.func @transform_16(%arg0: i32, %arg1: i32) -> (i32, i32) {
    %c0_i32 = arith.constant 0 : i32
    %c0_i32_0 = arith.constant 0 : i32
    %c0_i32_1 = arith.constant 0 : i32
    return %c0_i32, %c0_i32_0 : i32, i32
  }
  func.func @transform_17(%arg0: i32, %arg1: i32) -> (i32, i32) {
    %c0_i32 = arith.constant 0 : i32
    %c0_i32_0 = arith.constant 0 : i32
    return %arg0, %c0_i32 : i32, i32
  }
}

module attributes {stable_mosaic.version = 11 : i64} {
  func.func @kernel(%arg0: i32, %arg1: i32, %arg2: memref<8x32xf32, #tpu.memory_space<vmem>>, %arg3: memref<1x1x32xf32, #tpu.memory_space<vmem>>, %arg4: memref<1x1x32xf32, #tpu.memory_space<vmem>>, %arg5: memref<1x32x96xbf16, #tpu.memory_space<vmem>>, %arg6: memref<1x32x32xbf16, #tpu.memory_space<vmem>>, %arg7: memref<1x1x32xf32, #tpu.memory_space<vmem>>, %arg8: memref<1x1x32xf32, #tpu.memory_space<vmem>>, %arg9: memref<1x1x32xf32, #tpu.memory_space<vmem>>, %arg10: memref<1x32x128xbf16, #tpu.memory_space<vmem>>, %arg11: memref<1x1x128xf32, #tpu.memory_space<vmem>>, %arg12: memref<1x128x32xbf16, #tpu.memory_space<vmem>>, %arg13: memref<1x1x32xf32, #tpu.memory_space<vmem>>, %arg14: memref<1x32xf32, #tpu.memory_space<vmem>>, %arg15: memref<1x32xf32, #tpu.memory_space<vmem>>, %arg16: memref<1x32xf32, #tpu.memory_space<vmem>>, %arg17: memref<1x32xf32, #tpu.memory_space<vmem>>, %arg18: memref<32x32xbf16, #tpu.memory_space<vmem>>, %arg19: memref<1x32xf32, #tpu.memory_space<vmem>>, %arg20: memref<8x32xf32, #tpu.memory_space<vmem>>, %arg21: memref<8x32xf32, #tpu.memory_space<vmem>>) attributes {dimension_semantics = [#tpu.dimension_semantics<parallel>, #tpu.dimension_semantics<arbitrary>], iteration_bounds = array<i64: 1, 2>, scalar_prefetch = 0 : i64, scratch_operands = 1 : i64, tpu.core_type = #tpu.core_type<tc>, window_params = [{transform_indices = @transform_0, window_bounds = array<i64: 8, 32>}, {transform_indices = @transform_1, window_bounds = array<i64: 1, 1, 32>}, {transform_indices = @transform_2, window_bounds = array<i64: 1, 1, 32>}, {transform_indices = @transform_3, window_bounds = array<i64: 1, 32, 96>}, {transform_indices = @transform_4, window_bounds = array<i64: 1, 32, 32>}, {transform_indices = @transform_5, window_bounds = array<i64: 1, 1, 32>}, {transform_indices = @transform_6, window_bounds = array<i64: 1, 1, 32>}, {transform_indices = @transform_7, window_bounds = array<i64: 1, 1, 32>}, {transform_indices = @transform_8, window_bounds = array<i64: 1, 32, 128>}, {transform_indices = @transform_9, window_bounds = array<i64: 1, 1, 128>}, {transform_indices = @transform_10, window_bounds = array<i64: 1, 128, 32>}, {transform_indices = @transform_11, window_bounds = array<i64: 1, 1, 32>}, {pipeline_mode = #tpu.pipeline_mode<synchronous>, transform_indices = @transform_12, window_bounds = array<i64: 1, 32>}, {pipeline_mode = #tpu.pipeline_mode<synchronous>, transform_indices = @transform_13, window_bounds = array<i64: 1, 32>}, {pipeline_mode = #tpu.pipeline_mode<synchronous>, transform_indices = @transform_14, window_bounds = array<i64: 1, 32>}, {pipeline_mode = #tpu.pipeline_mode<synchronous>, transform_indices = @transform_15, window_bounds = array<i64: 1, 32>}, {pipeline_mode = #tpu.pipeline_mode<synchronous>, transform_indices = @transform_16, window_bounds = array<i64: 32, 32>}, {pipeline_mode = #tpu.pipeline_mode<synchronous>, transform_indices = @transform_17, window_bounds = array<i64: 1, 32>}, {transform_indices = @transform_18, window_bounds = array<i64: 8, 32>}]} {
    %c0_i32 = arith.constant 0 : i32
    %0 = arith.cmpi eq, %arg1, %c0_i32 : i32
    %1 = arith.extui %0 : i1 to i32
    %c0_i32_0 = arith.constant 0 : i32
    %2 = arith.cmpi ne, %1, %c0_i32_0 : i32
    scf.if %2 {
      %c0_62 = arith.constant 0 : index
      %c0_63 = arith.constant 0 : index
      %145 = vector.load %arg2[%c0_62, %c0_63] : memref<8x32xf32, #tpu.memory_space<vmem>>, vector<8x32xf32>
      %c0_64 = arith.constant 0 : index
      %c0_65 = arith.constant 0 : index
      %146 = vector.load %arg21[%c0_64, %c0_65] : memref<8x32xf32, #tpu.memory_space<vmem>>, vector<8x32xf32>
      tpu.vector_store %arg21[%c0_64, %c0_65], %145 {strides = array<i32>} : memref<8x32xf32, #tpu.memory_space<vmem>>, vector<8x32xf32>,
    } else {
    }
    %c0 = arith.constant 0 : index
    %c0_1 = arith.constant 0 : index
    %3 = vector.load %arg21[%c0, %c0_1] : memref<8x32xf32, #tpu.memory_space<vmem>>, vector<8x32xf32>
    %c0_2 = arith.constant 0 : index
    %c0_3 = arith.constant 0 : index
    %c0_4 = arith.constant 0 : index
    %4 = vector.load %arg3[%c0_2, %c0_3, %c0_4] : memref<1x1x32xf32, #tpu.memory_space<vmem>>, vector<1x1x32xf32>
    %5 = vector.shape_cast %4 : vector<1x1x32xf32> to vector<1x32xf32>
    %c0_5 = arith.constant 0 : index
    %c0_6 = arith.constant 0 : index
    %c0_7 = arith.constant 0 : index
    %6 = vector.load %arg4[%c0_5, %c0_6, %c0_7] : memref<1x1x32xf32, #tpu.memory_space<vmem>>, vector<1x1x32xf32>
    %7 = vector.shape_cast %6 : vector<1x1x32xf32> to vector<1x32xf32>
    %cst = arith.constant dense<0.000000e+00> : vector<8xf32>
    %8 = vector.multi_reduction <add>, %3, %cst [1] : vector<8x32xf32> to vector<8xf32>
    %9 = vector.shape_cast %8 : vector<8xf32> to vector<8x1xf32>
    %cst_8 = arith.constant 3.200000e+01 : f32
    %10 = vector.broadcast %cst_8 : f32 to vector<8x1xf32>
    %11 = arith.divf %9, %10 : vector<8x1xf32>
    %12 = vector.broadcast %11 : vector<8x1xf32> to vector<8x32xf32>
    %13 = arith.subf %3, %12 : vector<8x32xf32>
    %14 = arith.mulf %13, %13 : vector<8x32xf32>
    %cst_9 = arith.constant dense<0.000000e+00> : vector<8xf32>
    %15 = vector.multi_reduction <add>, %14, %cst_9 [1] : vector<8x32xf32> to vector<8xf32>
    %16 = vector.shape_cast %15 : vector<8xf32> to vector<8x1xf32>
    %cst_10 = arith.constant 3.200000e+01 : f32
    %17 = vector.broadcast %cst_10 : f32 to vector<8x1xf32>
    %18 = arith.divf %16, %17 : vector<8x1xf32>
    %19 = vector.broadcast %11 : vector<8x1xf32> to vector<8x32xf32>
    %20 = arith.subf %3, %19 : vector<8x32xf32>
    %cst_11 = arith.constant 9.99999974E-6 : f32
    %21 = vector.broadcast %cst_11 : f32 to vector<8x1xf32>
    %22 = arith.addf %18, %21 : vector<8x1xf32>
    %23 = math.rsqrt %22 : vector<8x1xf32>
    %24 = vector.broadcast %23 : vector<8x1xf32> to vector<8x32xf32>
    %25 = arith.mulf %20, %24 : vector<8x32xf32>
    %26 = vector.broadcast %5 : vector<1x32xf32> to vector<8x32xf32>
    %27 = arith.mulf %25, %26 : vector<8x32xf32>
    %28 = vector.broadcast %7 : vector<1x32xf32> to vector<8x32xf32>
    %29 = arith.addf %27, %28 : vector<8x32xf32>
    %30 = arith.truncf %29 : vector<8x32xf32> to vector<8x32xbf16>
    %c0_12 = arith.constant 0 : index
    %c0_13 = arith.constant 0 : index
    %c0_14 = arith.constant 0 : index
    %31 = vector.load %arg5[%c0_12, %c0_13, %c0_14] : memref<1x32x96xbf16, #tpu.memory_space<vmem>>, vector<1x32x96xbf16>
    %32 = vector.shape_cast %31 : vector<1x32x96xbf16> to vector<32x96xbf16>
    %cst_15 = arith.constant dense<0.000000e+00> : vector<8x96xf32>
    %33 = tpu.matmul %30, %32, %cst_15 {dimension_numbers = #tpu.dot_dimension_numbers<[1], [0], [0], [1], [0, 0, 1, 1], [], []>} : vector<8x32xbf16>, vector<32x96xbf16>, vector<8x96xf32> -> vector<8x96xf32>
    %34 = vector.extract_strided_slice %33 {offsets = [0, 0], sizes = [8, 16], strides = [1, 1]} : vector<8x96xf32> to vector<8x16xf32>
    %35 = vector.extract_strided_slice %33 {offsets = [0, 32], sizes = [8, 16], strides = [1, 1]} : vector<8x96xf32> to vector<8x16xf32>
    %36 = vector.extract_strided_slice %33 {offsets = [0, 64], sizes = [8, 16], strides = [1, 1]} : vector<8x96xf32> to vector<8x16xf32>
    %37 = vector.shape_cast %34 : vector<8x16xf32> to vector<2x4x16xf32>
    %38 = vector.shape_cast %35 : vector<8x16xf32> to vector<2x4x16xf32>
    %39 = vector.shape_cast %36 : vector<8x16xf32> to vector<2x4x16xf32>
    %40 = arith.truncf %37 : vector<2x4x16xf32> to vector<2x4x16xbf16>
    %41 = arith.truncf %38 : vector<2x4x16xf32> to vector<2x4x16xbf16>
    "tpu.trace_start"() <{level = 10 : i32, message = "bqd,bkd->bqk"}> : () -> ()
    %cst_16 = arith.constant dense<0.000000e+00> : vector<2x4x4xf32>
    %42 = tpu.matmul %40, %41, %cst_16 {dimension_numbers = #tpu.dot_dimension_numbers<[2], [2], [1], [1], [0, 0, 0, 1, 1, 1], [0], [0]>} : vector<2x4x16xbf16>, vector<2x4x16xbf16>, vector<2x4x4xf32> -> vector<2x4x4xf32>
    "tpu.trace_stop"() : () -> ()
    %cst_17 = arith.constant dense<0xFF800000> : vector<2x4xf32>
    %43 = vector.multi_reduction <maximumf>, %42, %cst_17 [2] : vector<2x4x4xf32> to vector<2x4xf32>
    %44 = vector.shape_cast %43 : vector<2x4xf32> to vector<2x4x1xf32>
    %45 = vector.broadcast %44 : vector<2x4x1xf32> to vector<2x4x4xf32>
    %46 = arith.subf %42, %45 : vector<2x4x4xf32>
    %47 = math.exp %46 : vector<2x4x4xf32>
    %cst_18 = arith.constant dense<0.000000e+00> : vector<2x4xf32>
    %48 = vector.multi_reduction <add>, %47, %cst_18 [2] : vector<2x4x4xf32> to vector<2x4xf32>
    %49 = vector.shape_cast %48 : vector<2x4xf32> to vector<2x4x1xf32>
    %50 = tpu.reciprocal %49 {approx = true} : vector<2x4x1xf32> -> vector<2x4x1xf32>
    %51 = vector.broadcast %50 : vector<2x4x1xf32> to vector<2x4x4xf32>
    %52 = arith.mulf %47, %51 : vector<2x4x4xf32>
    %53 = arith.truncf %52 : vector<2x4x4xf32> to vector<2x4x4xbf16>
    %54 = arith.truncf %39 : vector<2x4x16xf32> to vector<2x4x16xbf16>
    "tpu.trace_start"() <{level = 10 : i32, message = "bqk,bkd->bqd"}> : () -> ()
    %cst_19 = arith.constant dense<0.000000e+00> : vector<2x4x16xf32>
    %55 = tpu.matmul %53, %54, %cst_19 {dimension_numbers = #tpu.dot_dimension_numbers<[2], [1], [1], [2], [0, 0, 0, 1, 1, 2], [0], [0]>} : vector<2x4x4xbf16>, vector<2x4x16xbf16>, vector<2x4x16xf32> -> vector<2x4x16xf32>
    "tpu.trace_stop"() : () -> ()
    %56 = vector.shape_cast %55 : vector<2x4x16xf32> to vector<8x16xf32>
    %57 = vector.extract_strided_slice %33 {offsets = [0, 16], sizes = [8, 16], strides = [1, 1]} : vector<8x96xf32> to vector<8x16xf32>
    %58 = vector.extract_strided_slice %33 {offsets = [0, 48], sizes = [8, 16], strides = [1, 1]} : vector<8x96xf32> to vector<8x16xf32>
    %59 = vector.extract_strided_slice %33 {offsets = [0, 80], sizes = [8, 16], strides = [1, 1]} : vector<8x96xf32> to vector<8x16xf32>
    %60 = vector.shape_cast %57 : vector<8x16xf32> to vector<2x4x16xf32>
    %61 = vector.shape_cast %58 : vector<8x16xf32> to vector<2x4x16xf32>
    %62 = vector.shape_cast %59 : vector<8x16xf32> to vector<2x4x16xf32>
    %63 = arith.truncf %60 : vector<2x4x16xf32> to vector<2x4x16xbf16>
    %64 = arith.truncf %61 : vector<2x4x16xf32> to vector<2x4x16xbf16>
    "tpu.trace_start"() <{level = 10 : i32, message = "bqd,bkd->bqk"}> : () -> ()
    %cst_20 = arith.constant dense<0.000000e+00> : vector<2x4x4xf32>
    %65 = tpu.matmul %63, %64, %cst_20 {dimension_numbers = #tpu.dot_dimension_numbers<[2], [2], [1], [1], [0, 0, 0, 1, 1, 1], [0], [0]>} : vector<2x4x16xbf16>, vector<2x4x16xbf16>, vector<2x4x4xf32> -> vector<2x4x4xf32>
    "tpu.trace_stop"() : () -> ()
    %cst_21 = arith.constant dense<0xFF800000> : vector<2x4xf32>
    %66 = vector.multi_reduction <maximumf>, %65, %cst_21 [2] : vector<2x4x4xf32> to vector<2x4xf32>
    %67 = vector.shape_cast %66 : vector<2x4xf32> to vector<2x4x1xf32>
    %68 = vector.broadcast %67 : vector<2x4x1xf32> to vector<2x4x4xf32>
    %69 = arith.subf %65, %68 : vector<2x4x4xf32>
    %70 = math.exp %69 : vector<2x4x4xf32>
    %cst_22 = arith.constant dense<0.000000e+00> : vector<2x4xf32>
    %71 = vector.multi_reduction <add>, %70, %cst_22 [2] : vector<2x4x4xf32> to vector<2x4xf32>
    %72 = vector.shape_cast %71 : vector<2x4xf32> to vector<2x4x1xf32>
    %73 = tpu.reciprocal %72 {approx = true} : vector<2x4x1xf32> -> vector<2x4x1xf32>
    %74 = vector.broadcast %73 : vector<2x4x1xf32> to vector<2x4x4xf32>
    %75 = arith.mulf %70, %74 : vector<2x4x4xf32>
    %76 = arith.truncf %75 : vector<2x4x4xf32> to vector<2x4x4xbf16>
    %77 = arith.truncf %62 : vector<2x4x16xf32> to vector<2x4x16xbf16>
    "tpu.trace_start"() <{level = 10 : i32, message = "bqk,bkd->bqd"}> : () -> ()
    %cst_23 = arith.constant dense<0.000000e+00> : vector<2x4x16xf32>
    %78 = tpu.matmul %76, %77, %cst_23 {dimension_numbers = #tpu.dot_dimension_numbers<[2], [1], [1], [2], [0, 0, 0, 1, 1, 2], [0], [0]>} : vector<2x4x4xbf16>, vector<2x4x16xbf16>, vector<2x4x16xf32> -> vector<2x4x16xf32>
    "tpu.trace_stop"() : () -> ()
    %79 = vector.shape_cast %78 : vector<2x4x16xf32> to vector<8x16xf32>
    %80 = tpu.concatenate %56, %79 in 1 : vector<8x16xf32>, vector<8x16xf32> -> vector<8x32xf32>
    %81 = arith.truncf %80 : vector<8x32xf32> to vector<8x32xbf16>
    %c0_24 = arith.constant 0 : index
    %c0_25 = arith.constant 0 : index
    %c0_26 = arith.constant 0 : index
    %82 = vector.load %arg6[%c0_24, %c0_25, %c0_26] : memref<1x32x32xbf16, #tpu.memory_space<vmem>>, vector<1x32x32xbf16>
    %83 = vector.shape_cast %82 : vector<1x32x32xbf16> to vector<32x32xbf16>
    %cst_27 = arith.constant dense<0.000000e+00> : vector<8x32xf32>
    %84 = tpu.matmul %81, %83, %cst_27 {dimension_numbers = #tpu.dot_dimension_numbers<[1], [0], [0], [1], [0, 0, 1, 1], [], []>} : vector<8x32xbf16>, vector<32x32xbf16>, vector<8x32xf32> -> vector<8x32xf32>
    %85 = arith.addf %3, %84 : vector<8x32xf32>
    %c0_28 = arith.constant 0 : index
    %c0_29 = arith.constant 0 : index
    %c0_30 = arith.constant 0 : index
    %86 = vector.load %arg7[%c0_28, %c0_29, %c0_30] : memref<1x1x32xf32, #tpu.memory_space<vmem>>, vector<1x1x32xf32>
    %87 = vector.shape_cast %86 : vector<1x1x32xf32> to vector<1x32xf32>
    %88 = vector.broadcast %87 : vector<1x32xf32> to vector<8x32xf32>
    %89 = arith.addf %85, %88 : vector<8x32xf32>
    %c0_31 = arith.constant 0 : index
    %c0_32 = arith.constant 0 : index
    %c0_33 = arith.constant 0 : index
    %90 = vector.load %arg8[%c0_31, %c0_32, %c0_33] : memref<1x1x32xf32, #tpu.memory_space<vmem>>, vector<1x1x32xf32>
    %91 = vector.shape_cast %90 : vector<1x1x32xf32> to vector<1x32xf32>
    %c0_34 = arith.constant 0 : index
    %c0_35 = arith.constant 0 : index
    %c0_36 = arith.constant 0 : index
    %92 = vector.load %arg9[%c0_34, %c0_35, %c0_36] : memref<1x1x32xf32, #tpu.memory_space<vmem>>, vector<1x1x32xf32>
    %93 = vector.shape_cast %92 : vector<1x1x32xf32> to vector<1x32xf32>
    %cst_37 = arith.constant dense<0.000000e+00> : vector<8xf32>
    %94 = vector.multi_reduction <add>, %89, %cst_37 [1] : vector<8x32xf32> to vector<8xf32>
    %95 = vector.shape_cast %94 : vector<8xf32> to vector<8x1xf32>
    %cst_38 = arith.constant 3.200000e+01 : f32
    %96 = vector.broadcast %cst_38 : f32 to vector<8x1xf32>
    %97 = arith.divf %95, %96 : vector<8x1xf32>
    %98 = vector.broadcast %97 : vector<8x1xf32> to vector<8x32xf32>
    %99 = arith.subf %89, %98 : vector<8x32xf32>
    %100 = arith.mulf %99, %99 : vector<8x32xf32>
    %cst_39 = arith.constant dense<0.000000e+00> : vector<8xf32>
    %101 = vector.multi_reduction <add>, %100, %cst_39 [1] : vector<8x32xf32> to vector<8xf32>
    %102 = vector.shape_cast %101 : vector<8xf32> to vector<8x1xf32>
    %cst_40 = arith.constant 3.200000e+01 : f32
    %103 = vector.broadcast %cst_40 : f32 to vector<8x1xf32>
    %104 = arith.divf %102, %103 : vector<8x1xf32>
    %105 = vector.broadcast %97 : vector<8x1xf32> to vector<8x32xf32>
    %106 = arith.subf %89, %105 : vector<8x32xf32>
    %cst_41 = arith.constant 9.99999974E-6 : f32
    %107 = vector.broadcast %cst_41 : f32 to vector<8x1xf32>
    %108 = arith.addf %104, %107 : vector<8x1xf32>
    %109 = math.rsqrt %108 : vector<8x1xf32>
    %110 = vector.broadcast %109 : vector<8x1xf32> to vector<8x32xf32>
    %111 = arith.mulf %106, %110 : vector<8x32xf32>
    %112 = vector.broadcast %91 : vector<1x32xf32> to vector<8x32xf32>
    %113 = arith.mulf %111, %112 : vector<8x32xf32>
    %114 = vector.broadcast %93 : vector<1x32xf32> to vector<8x32xf32>
    %115 = arith.addf %113, %114 : vector<8x32xf32>
    %116 = arith.truncf %115 : vector<8x32xf32> to vector<8x32xbf16>
    %c0_42 = arith.constant 0 : index
    %c0_43 = arith.constant 0 : index
    %c0_44 = arith.constant 0 : index
    %117 = vector.load %arg10[%c0_42, %c0_43, %c0_44] : memref<1x32x128xbf16, #tpu.memory_space<vmem>>, vector<1x32x128xbf16>
    %118 = vector.shape_cast %117 : vector<1x32x128xbf16> to vector<32x128xbf16>
    %cst_45 = arith.constant dense<0.000000e+00> : vector<8x128xf32>
    %119 = tpu.matmul %116, %118, %cst_45 {dimension_numbers = #tpu.dot_dimension_numbers<[1], [0], [0], [1], [0, 0, 1, 1], [], []>} : vector<8x32xbf16>, vector<32x128xbf16>, vector<8x128xf32> -> vector<8x128xf32>
    %c0_46 = arith.constant 0 : index
    %c0_47 = arith.constant 0 : index
    %c0_48 = arith.constant 0 : index
    %120 = vector.load %arg11[%c0_46, %c0_47, %c0_48] : memref<1x1x128xf32, #tpu.memory_space<vmem>>, vector<1x1x128xf32>
    %121 = vector.shape_cast %120 : vector<1x1x128xf32> to vector<1x128xf32>
    %122 = vector.broadcast %121 : vector<1x128xf32> to vector<8x128xf32>
    %123 = arith.addf %119, %122 : vector<8x128xf32>
    %cst_49 = arith.constant 5.000000e-01 : f32
    %124 = vector.broadcast %cst_49 : f32 to vector<8x128xf32>
    %125 = arith.mulf %124, %123 : vector<8x128xf32>
    %cst_50 = arith.constant 0.707106769 : f32
    %126 = vector.broadcast %cst_50 : f32 to vector<8x128xf32>
    %127 = arith.mulf %123, %126 : vector<8x128xf32>
    %128 = math.erf %127 : vector<8x128xf32>
    %cst_51 = arith.constant 1.000000e+00 : f32
    %129 = vector.broadcast %cst_51 : f32 to vector<8x128xf32>
    %130 = arith.addf %129, %128 : vector<8x128xf32>
    %131 = arith.mulf %125, %130 : vector<8x128xf32>
    %132 = arith.truncf %131 : vector<8x128xf32> to vector<8x128xbf16>
    %c0_52 = arith.constant 0 : index
    %c0_53 = arith.constant 0 : index
    %c0_54 = arith.constant 0 : index
    %133 = vector.load %arg12[%c0_52, %c0_53, %c0_54] : memref<1x128x32xbf16, #tpu.memory_space<vmem>>, vector<1x128x32xbf16>
    %134 = vector.shape_cast %133 : vector<1x128x32xbf16> to vector<128x32xbf16>
    %cst_55 = arith.constant dense<0.000000e+00> : vector<8x32xf32>
    %135 = tpu.matmul %132, %134, %cst_55 {dimension_numbers = #tpu.dot_dimension_numbers<[1], [0], [0], [1], [0, 0, 1, 1], [], []>} : vector<8x128xbf16>, vector<128x32xbf16>, vector<8x32xf32> -> vector<8x32xf32>
    %136 = arith.addf %89, %135 : vector<8x32xf32>
    %c0_56 = arith.constant 0 : index
    %c0_57 = arith.constant 0 : index
    %c0_58 = arith.constant 0 : index
    %137 = vector.load %arg13[%c0_56, %c0_57, %c0_58] : memref<1x1x32xf32, #tpu.memory_space<vmem>>, vector<1x1x32xf32>
    %138 = vector.shape_cast %137 : vector<1x1x32xf32> to vector<1x32xf32>
    %139 = vector.broadcast %138 : vector<1x32xf32> to vector<8x32xf32>
    %140 = arith.addf %136, %139 : vector<8x32xf32>
    %c0_59 = arith.constant 0 : index
    %c0_60 = arith.constant 0 : index
    %141 = vector.load %arg21[%c0_59, %c0_60] : memref<8x32xf32, #tpu.memory_space<vmem>>, vector<8x32xf32>
    tpu.vector_store %arg21[%c0_59, %c0_60], %140 {strides = array<i32>} : memref<8x32xf32, #tpu.memory_space<vmem>>, vector<8x32xf32>,
    %c1_i32 = arith.constant 1 : i32
    %142 = arith.cmpi eq, %arg1, %c1_i32 : i32
    %143 = arith.extui %142 : i1 to i32
    %c0_i32_61 = arith.constant 0 : i32
    %144 = arith.cmpi ne, %143, %c0_i32_61 : i32
    scf.if %144 {
      %c0_62 = arith.constant 0 : index
      %c0_63 = arith.constant 0 : index
      %145 = vector.load %arg14[%c0_62, %c0_63] : memref<1x32xf32, #tpu.memory_space<vmem>>, vector<1x32xf32>
      %c0_64 = arith.constant 0 : index
      %c0_65 = arith.constant 0 : index
      %146 = vector.load %arg15[%c0_64, %c0_65] : memref<1x32xf32, #tpu.memory_space<vmem>>, vector<1x32xf32>
      %cst_66 = arith.constant dense<0.000000e+00> : vector<8xf32>
      %147 = vector.multi_reduction <add>, %140, %cst_66 [1] : vector<8x32xf32> to vector<8xf32>
      %148 = vector.shape_cast %147 : vector<8xf32> to vector<8x1xf32>
      %cst_67 = arith.constant 3.200000e+01 : f32
      %149 = vector.broadcast %cst_67 : f32 to vector<8x1xf32>
      %150 = arith.divf %148, %149 : vector<8x1xf32>
      %151 = vector.broadcast %150 : vector<8x1xf32> to vector<8x32xf32>
      %152 = arith.subf %140, %151 : vector<8x32xf32>
      %153 = arith.mulf %152, %152 : vector<8x32xf32>
      %cst_68 = arith.constant dense<0.000000e+00> : vector<8xf32>
      %154 = vector.multi_reduction <add>, %153, %cst_68 [1] : vector<8x32xf32> to vector<8xf32>
      %155 = vector.shape_cast %154 : vector<8xf32> to vector<8x1xf32>
      %cst_69 = arith.constant 3.200000e+01 : f32
      %156 = vector.broadcast %cst_69 : f32 to vector<8x1xf32>
      %157 = arith.divf %155, %156 : vector<8x1xf32>
      %158 = vector.broadcast %150 : vector<8x1xf32> to vector<8x32xf32>
      %159 = arith.subf %140, %158 : vector<8x32xf32>
      %cst_70 = arith.constant 9.99999974E-6 : f32
      %160 = vector.broadcast %cst_70 : f32 to vector<8x1xf32>
      %161 = arith.addf %157, %160 : vector<8x1xf32>
      %162 = math.rsqrt %161 : vector<8x1xf32>
      %163 = vector.broadcast %162 : vector<8x1xf32> to vector<8x32xf32>
      %164 = arith.mulf %159, %163 : vector<8x32xf32>
      %165 = vector.broadcast %145 : vector<1x32xf32> to vector<8x32xf32>
      %166 = arith.mulf %164, %165 : vector<8x32xf32>
      %167 = vector.broadcast %146 : vector<1x32xf32> to vector<8x32xf32>
      %168 = arith.addf %166, %167 : vector<8x32xf32>
      %c0_71 = arith.constant 0 : index
      %c0_72 = arith.constant 0 : index
      %169 = vector.load %arg16[%c0_71, %c0_72] : memref<1x32xf32, #tpu.memory_space<vmem>>, vector<1x32xf32>
      %c0_73 = arith.constant 0 : index
      %c0_74 = arith.constant 0 : index
      %170 = vector.load %arg17[%c0_73, %c0_74] : memref<1x32xf32, #tpu.memory_space<vmem>>, vector<1x32xf32>
      %cst_75 = arith.constant dense<0.000000e+00> : vector<8xf32>
      %171 = vector.multi_reduction <add>, %168, %cst_75 [1] : vector<8x32xf32> to vector<8xf32>
      %172 = vector.shape_cast %171 : vector<8xf32> to vector<8x1xf32>
      %cst_76 = arith.constant 3.200000e+01 : f32
      %173 = vector.broadcast %cst_76 : f32 to vector<8x1xf32>
      %174 = arith.divf %172, %173 : vector<8x1xf32>
      %175 = vector.broadcast %174 : vector<8x1xf32> to vector<8x32xf32>
      %176 = arith.subf %168, %175 : vector<8x32xf32>
      %177 = arith.mulf %176, %176 : vector<8x32xf32>
      %cst_77 = arith.constant dense<0.000000e+00> : vector<8xf32>
      %178 = vector.multi_reduction <add>, %177, %cst_77 [1] : vector<8x32xf32> to vector<8xf32>
      %179 = vector.shape_cast %178 : vector<8xf32> to vector<8x1xf32>
      %cst_78 = arith.constant 3.200000e+01 : f32
      %180 = vector.broadcast %cst_78 : f32 to vector<8x1xf32>
      %181 = arith.divf %179, %180 : vector<8x1xf32>
      %182 = vector.broadcast %174 : vector<8x1xf32> to vector<8x32xf32>
      %183 = arith.subf %168, %182 : vector<8x32xf32>
      %cst_79 = arith.constant 9.99999974E-6 : f32
      %184 = vector.broadcast %cst_79 : f32 to vector<8x1xf32>
      %185 = arith.addf %181, %184 : vector<8x1xf32>
      %186 = math.rsqrt %185 : vector<8x1xf32>
      %187 = vector.broadcast %186 : vector<8x1xf32> to vector<8x32xf32>
      %188 = arith.mulf %183, %187 : vector<8x32xf32>
      %189 = vector.broadcast %169 : vector<1x32xf32> to vector<8x32xf32>
      %190 = arith.mulf %188, %189 : vector<8x32xf32>
      %191 = vector.broadcast %170 : vector<1x32xf32> to vector<8x32xf32>
      %192 = arith.addf %190, %191 : vector<8x32xf32>
      %193 = arith.truncf %192 : vector<8x32xf32> to vector<8x32xbf16>
      %c0_80 = arith.constant 0 : index
      %c0_81 = arith.constant 0 : index
      %194 = vector.load %arg18[%c0_80, %c0_81] : memref<32x32xbf16, #tpu.memory_space<vmem>>, vector<32x32xbf16>
      %cst_82 = arith.constant dense<0.000000e+00> : vector<8x32xf32>
      %195 = tpu.matmul %193, %194, %cst_82 {dimension_numbers = #tpu.dot_dimension_numbers<[1], [0], [0], [1], [0, 0, 1, 1], [], []>} : vector<8x32xbf16>, vector<32x32xbf16>, vector<8x32xf32> -> vector<8x32xf32>
      %c0_83 = arith.constant 0 : index
      %c0_84 = arith.constant 0 : index
      %196 = vector.load %arg19[%c0_83, %c0_84] : memref<1x32xf32, #tpu.memory_space<vmem>>, vector<1x32xf32>
      %197 = vector.broadcast %196 : vector<1x32xf32> to vector<8x32xf32>
      %198 = arith.addf %195, %197 : vector<8x32xf32>
      %c0_85 = arith.constant 0 : index
      %c0_86 = arith.constant 0 : index
      %199 = vector.load %arg20[%c0_85, %c0_86] : memref<8x32xf32, #tpu.memory_space<vmem>>, vector<8x32xf32>
      tpu.vector_store %arg20[%c0_85, %c0_86], %198 {strides = array<i32>} : memref<8x32xf32, #tpu.memory_space<vmem>>, vector<8x32xf32>,
    } else {
    }
    return
  }
  func.func @transform_0(%arg0: i32, %arg1: i32) -> (i32, i32) {
    %c0_i32 = arith.constant 0 : i32
    %c0_i32_0 = arith.constant 0 : i32
    return %arg0, %c0_i32 : i32, i32
  }
  func.func @transform_1(%arg0: i32, %arg1: i32) -> (i32, i32, i32) {
    %c0_i32 = arith.constant 0 : i32
    %c0_i32_0 = arith.constant 0 : i32
    %c0_i32_1 = arith.constant 0 : i32
    return %arg1, %c0_i32, %c0_i32_0 : i32, i32, i32
  }
  func.func @transform_2(%arg0: i32, %arg1: i32) -> (i32, i32, i32) {
    %c0_i32 = arith.constant 0 : i32
    %c0_i32_0 = arith.constant 0 : i32
    %c0_i32_1 = arith.constant 0 : i32
    return %arg1, %c0_i32, %c0_i32_0 : i32, i32, i32
  }
  func.func @transform_3(%arg0: i32, %arg1: i32) -> (i32, i32, i32) {
    %c0_i32 = arith.constant 0 : i32
    %c0_i32_0 = arith.constant 0 : i32
    %c0_i32_1 = arith.constant 0 : i32
    return %arg1, %c0_i32, %c0_i32_0 : i32, i32, i32
  }
  func.func @transform_4(%arg0: i32, %arg1: i32) -> (i32, i32, i32) {
    %c0_i32 = arith.constant 0 : i32
    %c0_i32_0 = arith.constant 0 : i32
    %c0_i32_1 = arith.constant 0 : i32
    return %arg1, %c0_i32, %c0_i32_0 : i32, i32, i32
  }
  func.func @transform_5(%arg0: i32, %arg1: i32) -> (i32, i32, i32) {
    %c0_i32 = arith.constant 0 : i32
    %c0_i32_0 = arith.constant 0 : i32
    %c0_i32_1 = arith.constant 0 : i32
    return %arg1, %c0_i32, %c0_i32_0 : i32, i32, i32
  }
  func.func @transform_6(%arg0: i32, %arg1: i32) -> (i32, i32, i32) {
    %c0_i32 = arith.constant 0 : i32
    %c0_i32_0 = arith.constant 0 : i32
    %c0_i32_1 = arith.constant 0 : i32
    return %arg1, %c0_i32, %c0_i32_0 : i32, i32, i32
  }
  func.func @transform_7(%arg0: i32, %arg1: i32) -> (i32, i32, i32) {
    %c0_i32 = arith.constant 0 : i32
    %c0_i32_0 = arith.constant 0 : i32
    %c0_i32_1 = arith.constant 0 : i32
    return %arg1, %c0_i32, %c0_i32_0 : i32, i32, i32
  }
  func.func @transform_8(%arg0: i32, %arg1: i32) -> (i32, i32, i32) {
    %c0_i32 = arith.constant 0 : i32
    %c0_i32_0 = arith.constant 0 : i32
    %c0_i32_1 = arith.constant 0 : i32
    return %arg1, %c0_i32, %c0_i32_0 : i32, i32, i32
  }
  func.func @transform_9(%arg0: i32, %arg1: i32) -> (i32, i32, i32) {
    %c0_i32 = arith.constant 0 : i32
    %c0_i32_0 = arith.constant 0 : i32
    %c0_i32_1 = arith.constant 0 : i32
    return %arg1, %c0_i32, %c0_i32_0 : i32, i32, i32
  }
  func.func @transform_10(%arg0: i32, %arg1: i32) -> (i32, i32, i32) {
    %c0_i32 = arith.constant 0 : i32
    %c0_i32_0 = arith.constant 0 : i32
    %c0_i32_1 = arith.constant 0 : i32
    return %arg1, %c0_i32, %c0_i32_0 : i32, i32, i32
  }
  func.func @transform_11(%arg0: i32, %arg1: i32) -> (i32, i32, i32) {
    %c0_i32 = arith.constant 0 : i32
    %c0_i32_0 = arith.constant 0 : i32
    %c0_i32_1 = arith.constant 0 : i32
    return %arg1, %c0_i32, %c0_i32_0 : i32, i32, i32
  }
  func.func @transform_12(%arg0: i32, %arg1: i32) -> (i32, i32) {
    %c0_i32 = arith.constant 0 : i32
    %c0_i32_0 = arith.constant 0 : i32
    %c0_i32_1 = arith.constant 0 : i32
    return %c0_i32, %c0_i32_0 : i32, i32
  }
  func.func @transform_13(%arg0: i32, %arg1: i32) -> (i32, i32) {
    %c0_i32 = arith.constant 0 : i32
    %c0_i32_0 = arith.constant 0 : i32
    %c0_i32_1 = arith.constant 0 : i32
    return %c0_i32, %c0_i32_0 : i32, i32
  }
  func.func @transform_14(%arg0: i32, %arg1: i32) -> (i32, i32) {
    %c0_i32 = arith.constant 0 : i32
    %c0_i32_0 = arith.constant 0 : i32
    %c0_i32_1 = arith.constant 0 : i32
    return %c0_i32, %c0_i32_0 : i32, i32
  }
  func.func @transform_15(%arg0: i32, %arg1: i32) -> (i32, i32) {
    %c0_i32 = arith.constant 0 : i32
    %c0_i32_0 = arith.constant 0 : i32
    %c0_i32_1 = arith.constant 0 : i32
    return %c0_i32, %c0_i32_0 : i32, i32
  }
  func.func @transform_16(%arg0: i32, %arg1: i32) -> (i32, i32) {
    %c0_i32 = arith.constant 0 : i32
    %c0_i32_0 = arith.constant 0 : i32
    %c0_i32_1 = arith.constant 0 : i32
    return %c0_i32, %c0_i32_0 : i32, i32
  }
  func.func @transform_17(%arg0: i32, %arg1: i32) -> (i32, i32) {
    %c0_i32 = arith.constant 0 : i32
    %c0_i32_0 = arith.constant 0 : i32
    %c0_i32_1 = arith.constant 0 : i32
    return %c0_i32, %c0_i32_0 : i32, i32
  }
  func.func @transform_18(%arg0: i32, %arg1: i32) -> (i32, i32) {
    %c0_i32 = arith.constant 0 : i32
    %c0_i32_0 = arith.constant 0 : i32
    return %arg0, %c0_i32 : i32, i32
  }
}

</mosaic_0001>

<llo_original>
// kernel: vivit_forward.3
$region0: #{vivit_forward.3}
  #allocation0 [shape = 'u32[]', space=smem, size = 0x4, offset = 0x4, fixed_abs, tag = 'smem constant byte address 0x4 - core index']
  #allocation1 [shape = 'u32[144,128]{1,0:T(1,128)}', space=vmem, size = 0x12000, scoped, tag = 'internal scratch']
  #allocation2 [shape = 'f32[8,32]{1,0:T(8,128)}', space=vmem, size = 0x1000, scoped, tag = 'scratch operand']
  %s0 = inlined_call_operand.vmem [shape: f32[8,32], index: 0, kind: input, shape index: {}]
  %s1 = inlined_call_operand.vmem [shape: f32[2,1,32], index: 1, kind: input, shape index: {}]
  %s2 = inlined_call_operand.vmem [shape: f32[2,1,32], index: 2, kind: input, shape index: {}]
  %s3 = inlined_call_operand.vmem [shape: bf16[2,32,96], index: 3, kind: input, shape index: {}]
  %s4 = inlined_call_operand.vmem [shape: bf16[2,32,32], index: 4, kind: input, shape index: {}]
  %s5 = inlined_call_operand.vmem [shape: f32[2,1,32], index: 5, kind: input, shape index: {}]
  %s6 = inlined_call_operand.vmem [shape: f32[2,1,32], index: 6, kind: input, shape index: {}]
  %s7 = inlined_call_operand.vmem [shape: f32[2,1,32], index: 7, kind: input, shape index: {}]
  %s8 = inlined_call_operand.vmem [shape: bf16[2,32,128], index: 8, kind: input, shape index: {}]
  %s9 = inlined_call_operand.vmem [shape: f32[2,1,128], index: 9, kind: input, shape index: {}]
  %s10 = inlined_call_operand.vmem [shape: bf16[2,128,32], index: 10, kind: input, shape index: {}]
  %s11 = inlined_call_operand.vmem [shape: f32[2,1,32], index: 11, kind: input, shape index: {}]
  %s12 = inlined_call_operand.vmem [shape: f32[1,32], index: 12, kind: input, shape index: {}]
  %s13 = inlined_call_operand.vmem [shape: f32[1,32], index: 13, kind: input, shape index: {}]
  %s14 = inlined_call_operand.vmem [shape: f32[1,32], index: 14, kind: input, shape index: {}]
  %s15 = inlined_call_operand.vmem [shape: f32[1,32], index: 15, kind: input, shape index: {}]
  %s16 = inlined_call_operand.vmem [shape: bf16[32,32], index: 16, kind: input, shape index: {}]
  %s17 = inlined_call_operand.vmem [shape: f32[1,32], index: 17, kind: input, shape index: {}]
  %s18 = inlined_call_operand.hbm [shape: f32[8,32], index: 18, kind: output, shape index: {}]
  %s19 = sld [smem:[#allocation0]]
  $region113: #{vivit_forward.3} parent=0
    _
  %s21 = ssub.s32 1, %s19
  %s22 = scalar_select 0, %s21, %s19
  $region1: #{vivit_forward.3} parent=0
    #allocation3 [shape = 'u8[4096]{0}', space=vmem, size = 0x1000, scoped, tag = 'output window, operand 0, single buffered']
    #allocation4 [shape = 's32[2]{0}', space=sflag, size = 0x8, scoped, tag = 'scoped memory for vivit_forward.3']
    %23 = vsyncpa [#allocation4], 0
    loop: start=0, step=1, limit=4
    $region2: #{vivit_forward.3} parent=1 // loop_pre_header
      _
    $region3: #{vivit_forward.3} parent=1 // loop_header
      %s25 = sphi 0, %s29
      %p26 = scmp.ge.s32.totalorder %s25, 4
      %s32 = sphi 0, %s44
      %s33 = sphi 0, %s40
      %s34 = sphi 0, %s32
      %s35 = sphi 0, %s33
      %s36 = sphi 0, %s34
      %s37 = sphi 0, %s35
      %s47 = sphi 0, %s49
      %s50 = sphi 0, %s47
      %s51 = sphi 0, %s50
      %s67 = sphi 0, %s51
      %s73 = sphi 0, %s75
      %s76 = sphi 0, %s73
      %s77 = sphi 0, %s76
      %s93 = sphi 0, %s77
      %s99 = sphi 0, %s101
      %s102 = sphi 0, %s99
      %s103 = sphi 0, %s102
      %s119 = sphi 0, %s103
      %s125 = sphi 0, %s127
      %s128 = sphi 0, %s125
      %s129 = sphi 0, %s128
      %s145 = sphi 0, %s129
      %s151 = sphi 0, %s153
      %s154 = sphi 0, %s151
      %s155 = sphi 0, %s154
      %s171 = sphi 0, %s155
      %s177 = sphi 0, %s179
      %s180 = sphi 0, %s177
      %s181 = sphi 0, %s180
      %s197 = sphi 0, %s181
      %s203 = sphi 0, %s205
      %s206 = sphi 0, %s203
      %s207 = sphi 0, %s206
      %s223 = sphi 0, %s207
      %s229 = sphi 0, %s231
      %s232 = sphi 0, %s229
      %s233 = sphi 0, %s232
      %s249 = sphi 0, %s233
      %s255 = sphi 0, %s257
      %s258 = sphi 0, %s255
      %s259 = sphi 0, %s258
      %s275 = sphi 0, %s259
      %s281 = sphi 0, %s283
      %s284 = sphi 0, %s281
      %s285 = sphi 0, %s284
      %s301 = sphi 0, %s285
      %s307 = sphi 0, %s309
      %s310 = sphi 0, %s307
      %s311 = sphi 0, %s310
      %s327 = sphi 0, %s311
      %s333 = sphi 0, %s335
      %s336 = sphi 0, %s333
      %s337 = sphi 0, %s336
      %s353 = sphi 0, %s337
      %s357 = sphi 0, %s357
      %s359 = sphi 0, %s357
      %s360 = sphi 0, %s359
      %s374 = sphi 0, %s360
      %s378 = sphi 0, %s378
      %s380 = sphi 0, %s378
      %s381 = sphi 0, %s380
      %s395 = sphi 0, %s381
      %s399 = sphi 0, %s399
      %s401 = sphi 0, %s399
      %s402 = sphi 0, %s401
      %s416 = sphi 0, %s402
      %s420 = sphi 0, %s420
      %s422 = sphi 0, %s420
      %s423 = sphi 0, %s422
      %s437 = sphi 0, %s423
      %s441 = sphi 0, %s441
      %s443 = sphi 0, %s441
      %s444 = sphi 0, %s443
      %s458 = sphi 0, %s444
      %s462 = sphi 0, %s462
      %s464 = sphi 0, %s462
      %s465 = sphi 0, %s464
      %s479 = sphi 0, %s465
      %s485 = sphi 0, %s487
      %s488 = sphi 0, %s485
      %s489 = sphi 0, %s488
      %s505 = sphi 0, %s489
    $region4: #{vivit_forward.3} parent=1 // loop_header_branch
      %28 = sbr.rel (%p26) target = $region8
    $region5: #{vivit_forward.3} parent=1 // loop_body
      %s30 = ssub.s32 %s25, 1
      %s31 = ssub.s32 %s25, 2
      %s38 = sadd.s32 1, %s33
      %p39 = scmp.ge.s32.totalorder %s38, 2
      %s40 = scalar_select %p39, 0, %s38
      %s41 = sadd.s32 1, %s32
      %s42 = scalar_select %p39, %s41, %s32
      %p43 = scmp.ge.s32.totalorder %s42, 1
      %s44 = scalar_select %p43, 0, %s42
      %s45 = ssub.s32 %s32, %s44
      %p46 = scmp.eq.s32.totalorder %s45, 0
      %s48 = sadd.s32 %s47, 1
      %s49 = scalar_select %p46, %s47, %s48
      %p52 = pneg %p46
      %p53 = scmp.eq.s32.totalorder %s25, 1
      %p54 = por %p52, %p53
      %p55 = scmp.ne.s32.totalorder %s47, %s50
      %p56 = scmp.eq.s32.totalorder %s25, 0
      %p57 = por %p55, %p56
      %p58 = scmp.ne.s32.totalorder %s47, %s50
      %p59 = scmp.eq.s32.totalorder %s30, 1
      %p60 = por %p58, %p59
      %p61 = scmp.ne.s32.totalorder %s50, %s51
      %p62 = scmp.eq.s32.totalorder %s30, 0
      %p63 = por %p61, %p62
      %p64 = scmp.ne.s32.totalorder %s50, %s51
      %p65 = scmp.eq.s32.totalorder %s31, 1
      %p66 = por %p64, %p65
      %p68 = scmp.ne.s32.totalorder %s51, %s67
      %p69 = scmp.eq.s32.totalorder %s31, 0
      %p70 = por %p68, %p69
      %s71 = ssub.s32 %s33, %s40
      %p72 = scmp.eq.s32.totalorder %s71, 0
      %s74 = sadd.s32 %s73, 1
      %s75 = scalar_select %p72, %s73, %s74
      %p78 = pneg %p72
      %p79 = scmp.eq.s32.totalorder %s25, 1
      %p80 = por %p78, %p79
      %p81 = scmp.ne.s32.totalorder %s73, %s76
      %p82 = scmp.eq.s32.totalorder %s25, 0
      %p83 = por %p81, %p82
      %p84 = scmp.ne.s32.totalorder %s73, %s76
      %p85 = scmp.eq.s32.totalorder %s30, 1
      %p86 = por %p84, %p85
      %p87 = scmp.ne.s32.totalorder %s76, %s77
      %p88 = scmp.eq.s32.totalorder %s30, 0
      %p89 = por %p87, %p88
      %p90 = scmp.ne.s32.totalorder %s76, %s77
      %p91 = scmp.eq.s32.totalorder %s31, 1
      %p92 = por %p90, %p91
      %p94 = scmp.ne.s32.totalorder %s77, %s93
      %p95 = scmp.eq.s32.totalorder %s31, 0
      %p96 = por %p94, %p95
      %s97 = ssub.s32 %s33, %s40
      %p98 = scmp.eq.s32.totalorder %s97, 0
      %s100 = sadd.s32 %s99, 1
      %s101 = scalar_select %p98, %s99, %s100
      %p104 = pneg %p98
      %p105 = scmp.eq.s32.totalorder %s25, 1
      %p106 = por %p104, %p105
      %p107 = scmp.ne.s32.totalorder %s99, %s102
      %p108 = scmp.eq.s32.totalorder %s25, 0
      %p109 = por %p107, %p108
      %p110 = scmp.ne.s32.totalorder %s99, %s102
      %p111 = scmp.eq.s32.totalorder %s30, 1
      %p112 = por %p110, %p111
      %p113 = scmp.ne.s32.totalorder %s102, %s103
      %p114 = scmp.eq.s32.totalorder %s30, 0
      %p115 = por %p113, %p114
      %p116 = scmp.ne.s32.totalorder %s102, %s103
      %p117 = scmp.eq.s32.totalorder %s31, 1
      %p118 = por %p116, %p117
      %p120 = scmp.ne.s32.totalorder %s103, %s119
      %p121 = scmp.eq.s32.totalorder %s31, 0
      %p122 = por %p120, %p121
      %s123 = ssub.s32 %s33, %s40
      %p124 = scmp.eq.s32.totalorder %s123, 0
      %s126 = sadd.s32 %s125, 1
      %s127 = scalar_select %p124, %s125, %s126
      %p130 = pneg %p124
      %p131 = scmp.eq.s32.totalorder %s25, 1
      %p132 = por %p130, %p131
      %p133 = scmp.ne.s32.totalorder %s125, %s128
      %p134 = scmp.eq.s32.totalorder %s25, 0
      %p135 = por %p133, %p134
      %p136 = scmp.ne.s32.totalorder %s125, %s128
      %p137 = scmp.eq.s32.totalorder %s30, 1
      %p138 = por %p136, %p137
      %p139 = scmp.ne.s32.totalorder %s128, %s129
      %p140 = scmp.eq.s32.totalorder %s30, 0
      %p141 = por %p139, %p140
      %p142 = scmp.ne.s32.totalorder %s128, %s129
      %p143 = scmp.eq.s32.totalorder %s31, 1
      %p144 = por %p142, %p143
      %p146 = scmp.ne.s32.totalorder %s129, %s145
      %p147 = scmp.eq.s32.totalorder %s31, 0
      %p148 = por %p146, %p147
      %s149 = ssub.s32 %s33, %s40
      %p150 = scmp.eq.s32.totalorder %s149, 0
      %s152 = sadd.s32 %s151, 1
      %s153 = scalar_select %p150, %s151, %s152
      %p156 = pneg %p150
      %p157 = scmp.eq.s32.totalorder %s25, 1
      %p158 = por %p156, %p157
      %p159 = scmp.ne.s32.totalorder %s151, %s154
      %p160 = scmp.eq.s32.totalorder %s25, 0
      %p161 = por %p159, %p160
      %p162 = scmp.ne.s32.totalorder %s151, %s154
      %p163 = scmp.eq.s32.totalorder %s30, 1
      %p164 = por %p162, %p163
      %p165 = scmp.ne.s32.totalorder %s154, %s155
      %p166 = scmp.eq.s32.totalorder %s30, 0
      %p167 = por %p165, %p166
      %p168 = scmp.ne.s32.totalorder %s154, %s155
      %p169 = scmp.eq.s32.totalorder %s31, 1
      %p170 = por %p168, %p169
      %p172 = scmp.ne.s32.totalorder %s155, %s171
      %p173 = scmp.eq.s32.totalorder %s31, 0
      %p174 = por %p172, %p173
      %s175 = ssub.s32 %s33, %s40
      %p176 = scmp.eq.s32.totalorder %s175, 0
      %s178 = sadd.s32 %s177, 1
      %s179 = scalar_select %p176, %s177, %s178
      %p182 = pneg %p176
      %p183 = scmp.eq.s32.totalorder %s25, 1
      %p184 = por %p182, %p183
      %p185 = scmp.ne.s32.totalorder %s177, %s180
      %p186 = scmp.eq.s32.totalorder %s25, 0
      %p187 = por %p185, %p186
      %p188 = scmp.ne.s32.totalorder %s177, %s180
      %p189 = scmp.eq.s32.totalorder %s30, 1
      %p190 = por %p188, %p189
      %p191 = scmp.ne.s32.totalorder %s180, %s181
      %p192 = scmp.eq.s32.totalorder %s30, 0
      %p193 = por %p191, %p192
      %p194 = scmp.ne.s32.totalorder %s180, %s181
      %p195 = scmp.eq.s32.totalorder %s31, 1
      %p196 = por %p194, %p195
      %p198 = scmp.ne.s32.totalorder %s181, %s197
      %p199 = scmp.eq.s32.totalorder %s31, 0
      %p200 = por %p198, %p199
      %s201 = ssub.s32 %s33, %s40
      %p202 = scmp.eq.s32.totalorder %s201, 0
      %s204 = sadd.s32 %s203, 1
      %s205 = scalar_select %p202, %s203, %s204
      %p208 = pneg %p202
      %p209 = scmp.eq.s32.totalorder %s25, 1
      %p210 = por %p208, %p209
      %p211 = scmp.ne.s32.totalorder %s203, %s206
      %p212 = scmp.eq.s32.totalorder %s25, 0
      %p213 = por %p211, %p212
      %p214 = scmp.ne.s32.totalorder %s203, %s206
      %p215 = scmp.eq.s32.totalorder %s30, 1
      %p216 = por %p214, %p215
      %p217 = scmp.ne.s32.totalorder %s206, %s207
      %p218 = scmp.eq.s32.totalorder %s30, 0
      %p219 = por %p217, %p218
      %p220 = scmp.ne.s32.totalorder %s206, %s207
      %p221 = scmp.eq.s32.totalorder %s31, 1
      %p222 = por %p220, %p221
      %p224 = scmp.ne.s32.totalorder %s207, %s223
      %p225 = scmp.eq.s32.totalorder %s31, 0
      %p226 = por %p224, %p225
      %s227 = ssub.s32 %s33, %s40
      %p228 = scmp.eq.s32.totalorder %s227, 0
      %s230 = sadd.s32 %s229, 1
      %s231 = scalar_select %p228, %s229, %s230
      %p234 = pneg %p228
      %p235 = scmp.eq.s32.totalorder %s25, 1
      %p236 = por %p234, %p235
      %p237 = scmp.ne.s32.totalorder %s229, %s232
      %p238 = scmp.eq.s32.totalorder %s25, 0
      %p239 = por %p237, %p238
      %p240 = scmp.ne.s32.totalorder %s229, %s232
      %p241 = scmp.eq.s32.totalorder %s30, 1
      %p242 = por %p240, %p241
      %p243 = scmp.ne.s32.totalorder %s232, %s233
      %p244 = scmp.eq.s32.totalorder %s30, 0
      %p245 = por %p243, %p244
      %p246 = scmp.ne.s32.totalorder %s232, %s233
      %p247 = scmp.eq.s32.totalorder %s31, 1
      %p248 = por %p246, %p247
      %p250 = scmp.ne.s32.totalorder %s233, %s249
      %p251 = scmp.eq.s32.totalorder %s31, 0
      %p252 = por %p250, %p251
      %s253 = ssub.s32 %s33, %s40
      %p254 = scmp.eq.s32.totalorder %s253, 0
      %s256 = sadd.s32 %s255, 1
      %s257 = scalar_select %p254, %s255, %s256
      %p260 = pneg %p254
      %p261 = scmp.eq.s32.totalorder %s25, 1
      %p262 = por %p260, %p261
      %p263 = scmp.ne.s32.totalorder %s255, %s258
      %p264 = scmp.eq.s32.totalorder %s25, 0
      %p265 = por %p263, %p264
      %p266 = scmp.ne.s32.totalorder %s255, %s258
      %p267 = scmp.eq.s32.totalorder %s30, 1
      %p268 = por %p266, %p267
      %p269 = scmp.ne.s32.totalorder %s258, %s259
      %p270 = scmp.eq.s32.totalorder %s30, 0
      %p271 = por %p269, %p270
      %p272 = scmp.ne.s32.totalorder %s258, %s259
      %p273 = scmp.eq.s32.totalorder %s31, 1
      %p274 = por %p272, %p273
      %p276 = scmp.ne.s32.totalorder %s259, %s275
      %p277 = scmp.eq.s32.totalorder %s31, 0
      %p278 = por %p276, %p277
      %s279 = ssub.s32 %s33, %s40
      %p280 = scmp.eq.s32.totalorder %s279, 0
      %s282 = sadd.s32 %s281, 1
      %s283 = scalar_select %p280, %s281, %s282
      %p286 = pneg %p280
      %p287 = scmp.eq.s32.totalorder %s25, 1
      %p288 = por %p286, %p287
      %p289 = scmp.ne.s32.totalorder %s281, %s284
      %p290 = scmp.eq.s32.totalorder %s25, 0
      %p291 = por %p289, %p290
      %p292 = scmp.ne.s32.totalorder %s281, %s284
      %p293 = scmp.eq.s32.totalorder %s30, 1
      %p294 = por %p292, %p293
      %p295 = scmp.ne.s32.totalorder %s284, %s285
      %p296 = scmp.eq.s32.totalorder %s30, 0
      %p297 = por %p295, %p296
      %p298 = scmp.ne.s32.totalorder %s284, %s285
      %p299 = scmp.eq.s32.totalorder %s31, 1
      %p300 = por %p298, %p299
      %p302 = scmp.ne.s32.totalorder %s285, %s301
      %p303 = scmp.eq.s32.totalorder %s31, 0
      %p304 = por %p302, %p303
      %s305 = ssub.s32 %s33, %s40
      %p306 = scmp.eq.s32.totalorder %s305, 0
      %s308 = sadd.s32 %s307, 1
      %s309 = scalar_select %p306, %s307, %s308
      %p312 = pneg %p306
      %p313 = scmp.eq.s32.totalorder %s25, 1
      %p314 = por %p312, %p313
      %p315 = scmp.ne.s32.totalorder %s307, %s310
      %p316 = scmp.eq.s32.totalorder %s25, 0
      %p317 = por %p315, %p316
      %p318 = scmp.ne.s32.totalorder %s307, %s310
      %p319 = scmp.eq.s32.totalorder %s30, 1
      %p320 = por %p318, %p319
      %p321 = scmp.ne.s32.totalorder %s310, %s311
      %p322 = scmp.eq.s32.totalorder %s30, 0
      %p323 = por %p321, %p322
      %p324 = scmp.ne.s32.totalorder %s310, %s311
      %p325 = scmp.eq.s32.totalorder %s31, 1
      %p326 = por %p324, %p325
      %p328 = scmp.ne.s32.totalorder %s311, %s327
      %p329 = scmp.eq.s32.totalorder %s31, 0
      %p330 = por %p328, %p329
      %s331 = ssub.s32 %s33, %s40
      %p332 = scmp.eq.s32.totalorder %s331, 0
      %s334 = sadd.s32 %s333, 1
      %s335 = scalar_select %p332, %s333, %s334
      %p338 = pneg %p332
      %p339 = scmp.eq.s32.totalorder %s25, 1
      %p340 = por %p338, %p339
      %p341 = scmp.ne.s32.totalorder %s333, %s336
      %p342 = scmp.eq.s32.totalorder %s25, 0
      %p343 = por %p341, %p342
      %p344 = scmp.ne.s32.totalorder %s333, %s336
      %p345 = scmp.eq.s32.totalorder %s30, 1
      %p346 = por %p344, %p345
      %p347 = scmp.ne.s32.totalorder %s336, %s337
      %p348 = scmp.eq.s32.totalorder %s30, 0
      %p349 = por %p347, %p348
      %p350 = scmp.ne.s32.totalorder %s336, %s337
      %p351 = scmp.eq.s32.totalorder %s31, 1
      %p352 = por %p350, %p351
      %p354 = scmp.ne.s32.totalorder %s337, %s353
      %p355 = scmp.eq.s32.totalorder %s31, 0
      %p356 = por %p354, %p355
      %s358 = sadd.s32 %s357, 1
      %p361 = scmp.eq.s32.totalorder %s25, 1
      %p362 = scmp.ne.s32.totalorder %s357, %s359
      %p363 = scmp.eq.s32.totalorder %s25, 0
      %p364 = por %p362, %p363
      %p365 = scmp.ne.s32.totalorder %s357, %s359
      %p366 = scmp.eq.s32.totalorder %s30, 1
      %p367 = por %p365, %p366
      %p368 = scmp.ne.s32.totalorder %s359, %s360
      %p369 = scmp.eq.s32.totalorder %s30, 0
      %p370 = por %p368, %p369
      %p371 = scmp.ne.s32.totalorder %s359, %s360
      %p372 = scmp.eq.s32.totalorder %s31, 1
      %p373 = por %p371, %p372
      %p375 = scmp.ne.s32.totalorder %s360, %s374
      %p376 = scmp.eq.s32.totalorder %s31, 0
      %p377 = por %p375, %p376
      %s379 = sadd.s32 %s378, 1
      %p382 = scmp.eq.s32.totalorder %s25, 1
      %p383 = scmp.ne.s32.totalorder %s378, %s380
      %p384 = scmp.eq.s32.totalorder %s25, 0
      %p385 = por %p383, %p384
      %p386 = scmp.ne.s32.totalorder %s378, %s380
      %p387 = scmp.eq.s32.totalorder %s30, 1
      %p388 = por %p386, %p387
      %p389 = scmp.ne.s32.totalorder %s380, %s381
      %p390 = scmp.eq.s32.totalorder %s30, 0
      %p391 = por %p389, %p390
      %p392 = scmp.ne.s32.totalorder %s380, %s381
      %p393 = scmp.eq.s32.totalorder %s31, 1
      %p394 = por %p392, %p393
      %p396 = scmp.ne.s32.totalorder %s381, %s395
      %p397 = scmp.eq.s32.totalorder %s31, 0
      %p398 = por %p396, %p397
      %s400 = sadd.s32 %s399, 1
      %p403 = scmp.eq.s32.totalorder %s25, 1
      %p404 = scmp.ne.s32.totalorder %s399, %s401
      %p405 = scmp.eq.s32.totalorder %s25, 0
      %p406 = por %p404, %p405
      %p407 = scmp.ne.s32.totalorder %s399, %s401
      %p408 = scmp.eq.s32.totalorder %s30, 1
      %p409 = por %p407, %p408
      %p410 = scmp.ne.s32.totalorder %s401, %s402
      %p411 = scmp.eq.s32.totalorder %s30, 0
      %p412 = por %p410, %p411
      %p413 = scmp.ne.s32.totalorder %s401, %s402
      %p414 = scmp.eq.s32.totalorder %s31, 1
      %p415 = por %p413, %p414
      %p417 = scmp.ne.s32.totalorder %s402, %s416
      %p418 = scmp.eq.s32.totalorder %s31, 0
      %p419 = por %p417, %p418
      %s421 = sadd.s32 %s420, 1
      %p424 = scmp.eq.s32.totalorder %s25, 1
      %p425 = scmp.ne.s32.totalorder %s420, %s422
      %p426 = scmp.eq.s32.totalorder %s25, 0
      %p427 = por %p425, %p426
      %p428 = scmp.ne.s32.totalorder %s420, %s422
      %p429 = scmp.eq.s32.totalorder %s30, 1
      %p430 = por %p428, %p429
      %p431 = scmp.ne.s32.totalorder %s422, %s423
      %p432 = scmp.eq.s32.totalorder %s30, 0
      %p433 = por %p431, %p432
      %p434 = scmp.ne.s32.totalorder %s422, %s423
      %p435 = scmp.eq.s32.totalorder %s31, 1
      %p436 = por %p434, %p435
      %p438 = scmp.ne.s32.totalorder %s423, %s437
      %p439 = scmp.eq.s32.totalorder %s31, 0
      %p440 = por %p438, %p439
      %s442 = sadd.s32 %s441, 1
      %p445 = scmp.eq.s32.totalorder %s25, 1
      %p446 = scmp.ne.s32.totalorder %s441, %s443
      %p447 = scmp.eq.s32.totalorder %s25, 0
      %p448 = por %p446, %p447
      %p449 = scmp.ne.s32.totalorder %s441, %s443
      %p450 = scmp.eq.s32.totalorder %s30, 1
      %p451 = por %p449, %p450
      %p452 = scmp.ne.s32.totalorder %s443, %s444
      %p453 = scmp.eq.s32.totalorder %s30, 0
      %p454 = por %p452, %p453
      %p455 = scmp.ne.s32.totalorder %s443, %s444
      %p456 = scmp.eq.s32.totalorder %s31, 1
      %p457 = por %p455, %p456
      %p459 = scmp.ne.s32.totalorder %s444, %s458
      %p460 = scmp.eq.s32.totalorder %s31, 0
      %p461 = por %p459, %p460
      %s463 = sadd.s32 %s462, 1
      %p466 = scmp.eq.s32.totalorder %s25, 1
      %p467 = scmp.ne.s32.totalorder %s462, %s464
      %p468 = scmp.eq.s32.totalorder %s25, 0
      %p469 = por %p467, %p468
      %p470 = scmp.ne.s32.totalorder %s462, %s464
      %p471 = scmp.eq.s32.totalorder %s30, 1
      %p472 = por %p470, %p471
      %p473 = scmp.ne.s32.totalorder %s464, %s465
      %p474 = scmp.eq.s32.totalorder %s30, 0
      %p475 = por %p473, %p474
      %p476 = scmp.ne.s32.totalorder %s464, %s465
      %p477 = scmp.eq.s32.totalorder %s31, 1
      %p478 = por %p476, %p477
      %p480 = scmp.ne.s32.totalorder %s465, %s479
      %p481 = scmp.eq.s32.totalorder %s31, 0
      %p482 = por %p480, %p481
      %s483 = ssub.s32 %s32, %s44
      %p484 = scmp.eq.s32.totalorder %s483, 0
      %s486 = sadd.s32 %s485, 1
      %s487 = scalar_select %p484, %s485, %s486
      %p490 = pneg %p484
      %p491 = scmp.eq.s32.totalorder %s25, 1
      %p492 = por %p490, %p491
      %p493 = scmp.ne.s32.totalorder %s485, %s488
      %p494 = scmp.eq.s32.totalorder %s25, 0
      %p495 = por %p493, %p494
      %p496 = scmp.ne.s32.totalorder %s485, %s488
      %p497 = scmp.eq.s32.totalorder %s30, 1
      %p498 = por %p496, %p497
      %p499 = scmp.ne.s32.totalorder %s488, %s489
      %p500 = scmp.eq.s32.totalorder %s30, 0
      %p501 = por %p499, %p500
      %p502 = scmp.ne.s32.totalorder %s488, %s489
      %p503 = scmp.eq.s32.totalorder %s31, 1
      %p504 = por %p502, %p503
      %p506 = scmp.ne.s32.totalorder %s489, %s505
      %p507 = scmp.eq.s32.totalorder %s31, 0
      %p508 = por %p506, %p507
      %p509 = scmp.le.s32.totalorder 1, %s25
      %p510 = scmp.lt.s32.totalorder %s25, 3
      %p511 = pnand %p509, %p510
      %p512 = pneg %p511
      // Predicated region
      $region9: #{vivit_forward.3} parent=5 // pred_check
        _
      $region10: #{vivit_forward.3} parent=5 // pred_check_branch
        %514 = sbr.rel (%p511) target = $region12
      $region11: #{vivit_forward.3} parent=5 // pred_region
        %s515 = ssub.s32 %s25, 1
        // Predicated region
        $region13: #{vivit_forward.3} parent=11 // pred_check
          %p516 = pneg %p63
        $region14: #{vivit_forward.3} parent=11 // pred_check_branch
          %518 = sbr.rel (%p516) target = $region16
        $region15: #{vivit_forward.3} parent=11 // pred_region
          %p519 = scmp.lt.s32.totalorder %s34, 0
          %s520 = scalar_select %p519, %s34, 0
          %s521 = smul.addr %s520, 8
          %s522 = scalar_lea.vmem %s0, %s521
        $region16: #{vivit_forward.3} parent=11 // pred_fallthru
          _
        // Predicated region
        $region17: #{vivit_forward.3} parent=11 // pred_check
          %p523 = pneg %p370
        $region18: #{vivit_forward.3} parent=11 // pred_check_branch
          %525 = sbr.rel (%p523) target = $region20
        $region19: #{vivit_forward.3} parent=11 // pred_region
          _
        $region20: #{vivit_forward.3} parent=11 // pred_fallthru
          _
        // Predicated region
        $region21: #{vivit_forward.3} parent=11 // pred_check
          %p526 = pneg %p391
        $region22: #{vivit_forward.3} parent=11 // pred_check_branch
          %528 = sbr.rel (%p526) target = $region24
        $region23: #{vivit_forward.3} parent=11 // pred_region
          _
        $region24: #{vivit_forward.3} parent=11 // pred_fallthru
          _
        // Predicated region
        $region25: #{vivit_forward.3} parent=11 // pred_check
          %p529 = pneg %p412
        $region26: #{vivit_forward.3} parent=11 // pred_check_branch
          %531 = sbr.rel (%p529) target = $region28
        $region27: #{vivit_forward.3} parent=11 // pred_region
          _
        $region28: #{vivit_forward.3} parent=11 // pred_fallthru
          _
        // Predicated region
        $region29: #{vivit_forward.3} parent=11 // pred_check
          %p532 = pneg %p433
        $region30: #{vivit_forward.3} parent=11 // pred_check_branch
          %534 = sbr.rel (%p532) target = $region32
        $region31: #{vivit_forward.3} parent=11 // pred_region
          _
        $region32: #{vivit_forward.3} parent=11 // pred_fallthru
          _
        // Predicated region
        $region33: #{vivit_forward.3} parent=11 // pred_check
          %p535 = pneg %p454
        $region34: #{vivit_forward.3} parent=11 // pred_check_branch
          %537 = sbr.rel (%p535) target = $region36
        $region35: #{vivit_forward.3} parent=11 // pred_region
          _
        $region36: #{vivit_forward.3} parent=11 // pred_fallthru
          _
        // Predicated region
        $region37: #{vivit_forward.3} parent=11 // pred_check
          %p538 = pneg %p475
        $region38: #{vivit_forward.3} parent=11 // pred_check_branch
          %540 = sbr.rel (%p538) target = $region40
        $region39: #{vivit_forward.3} parent=11 // pred_region
          _
        $region40: #{vivit_forward.3} parent=11 // pred_fallthru
          _
      $region12: #{vivit_forward.3} parent=5 // pred_fallthru
        _
      %p541 = scmp.lt.s32.totalorder %s25, 2
      // Predicated region
      $region41: #{vivit_forward.3} parent=5 // pred_check
        %p542 = pneg %p541
      $region42: #{vivit_forward.3} parent=5 // pred_check_branch
        %544 = sbr.rel (%p542) target = $region44
      $region43: #{vivit_forward.3} parent=5 // pred_region
        // Predicated region
        $region45: #{vivit_forward.3} parent=43 // pred_check
          %p545 = pneg %p83
        $region46: #{vivit_forward.3} parent=43 // pred_check_branch
          %547 = sbr.rel (%p545) target = $region48
        $region47: #{vivit_forward.3} parent=43 // pred_region
          %p548 = scmp.lt.s32.totalorder %s33, 1
          %s549 = scalar_select %p548, %s33, 1
          %s550 = scalar_lea.vmem %s1, %s549
        $region48: #{vivit_forward.3} parent=43 // pred_fallthru
          _
        // Predicated region
        $region49: #{vivit_forward.3} parent=43 // pred_check
          %p551 = pneg %p109
        $region50: #{vivit_forward.3} parent=43 // pred_check_branch
          %553 = sbr.rel (%p551) target = $region52
        $region51: #{vivit_forward.3} parent=43 // pred_region
          %p554 = scmp.lt.s32.totalorder %s33, 1
          %s555 = scalar_select %p554, %s33, 1
          %s556 = scalar_lea.vmem %s2, %s555
        $region52: #{vivit_forward.3} parent=43 // pred_fallthru
          _
        // Predicated region
        $region53: #{vivit_forward.3} parent=43 // pred_check
          %p557 = pneg %p135
        $region54: #{vivit_forward.3} parent=43 // pred_check_branch
          %559 = sbr.rel (%p557) target = $region56
        $region55: #{vivit_forward.3} parent=43 // pred_region
          %p560 = scmp.lt.s32.totalorder %s33, 1
          %s561 = scalar_select %p560, %s33, 1
          %s562 = smul.addr %s561, 4
          %s563 = smul.addr %s562, 4
          %s564 = scalar_lea.vmem %s3, %s563
        $region56: #{vivit_forward.3} parent=43 // pred_fallthru
          _
        // Predicated region
        $region57: #{vivit_forward.3} parent=43 // pred_check
          %p565 = pneg %p161
        $region58: #{vivit_forward.3} parent=43 // pred_check_branch
          %567 = sbr.rel (%p565) target = $region60
        $region59: #{vivit_forward.3} parent=43 // pred_region
          %p568 = scmp.lt.s32.totalorder %s33, 1
          %s569 = scalar_select %p568, %s33, 1
          %s570 = smul.addr %s569, 4
          %s571 = smul.addr %s570, 4
          %s572 = scalar_lea.vmem %s4, %s571
        $region60: #{vivit_forward.3} parent=43 // pred_fallthru
          _
        // Predicated region
        $region61: #{vivit_forward.3} parent=43 // pred_check
          %p573 = pneg %p187
        $region62: #{vivit_forward.3} parent=43 // pred_check_branch
          %575 = sbr.rel (%p573) target = $region64
        $region63: #{vivit_forward.3} parent=43 // pred_region
          %p576 = scmp.lt.s32.totalorder %s33, 1
          %s577 = scalar_select %p576, %s33, 1
          %s578 = scalar_lea.vmem %s5, %s577
        $region64: #{vivit_forward.3} parent=43 // pred_fallthru
          _
        // Predicated region
        $region65: #{vivit_forward.3} parent=43 // pred_check
          %p579 = pneg %p213
        $region66: #{vivit_forward.3} parent=43 // pred_check_branch
          %581 = sbr.rel (%p579) target = $region68
        $region67: #{vivit_forward.3} parent=43 // pred_region
          %p582 = scmp.lt.s32.totalorder %s33, 1
          %s583 = scalar_select %p582, %s33, 1
          %s584 = scalar_lea.vmem %s6, %s583
        $region68: #{vivit_forward.3} parent=43 // pred_fallthru
          _
        // Predicated region
        $region69: #{vivit_forward.3} parent=43 // pred_check
          %p585 = pneg %p239
        $region70: #{vivit_forward.3} parent=43 // pred_check_branch
          %587 = sbr.rel (%p585) target = $region72
        $region71: #{vivit_forward.3} parent=43 // pred_region
          %p588 = scmp.lt.s32.totalorder %s33, 1
          %s589 = scalar_select %p588, %s33, 1
          %s590 = scalar_lea.vmem %s7, %s589
        $region72: #{vivit_forward.3} parent=43 // pred_fallthru
          _
        // Predicated region
        $region73: #{vivit_forward.3} parent=43 // pred_check
          %p591 = pneg %p265
        $region74: #{vivit_forward.3} parent=43 // pred_check_branch
          %593 = sbr.rel (%p591) target = $region76
        $region75: #{vivit_forward.3} parent=43 // pred_region
          %p594 = scmp.lt.s32.totalorder %s33, 1
          %s595 = scalar_select %p594, %s33, 1
          %s596 = smul.addr %s595, 4
          %s597 = smul.addr %s596, 4
          %s598 = scalar_lea.vmem %s8, %s597
        $region76: #{vivit_forward.3} parent=43 // pred_fallthru
          _
        // Predicated region
        $region77: #{vivit_forward.3} parent=43 // pred_check
          %p599 = pneg %p291
        $region78: #{vivit_forward.3} parent=43 // pred_check_branch
          %601 = sbr.rel (%p599) target = $region80
        $region79: #{vivit_forward.3} parent=43 // pred_region
          %p602 = scmp.lt.s32.totalorder %s33, 1
          %s603 = scalar_select %p602, %s33, 1
          %s604 = scalar_lea.vmem %s9, %s603
        $region80: #{vivit_forward.3} parent=43 // pred_fallthru
          _
        // Predicated region
        $region81: #{vivit_forward.3} parent=43 // pred_check
          %p605 = pneg %p317
        $region82: #{vivit_forward.3} parent=43 // pred_check_branch
          %607 = sbr.rel (%p605) target = $region84
        $region83: #{vivit_forward.3} parent=43 // pred_region
          %p608 = scmp.lt.s32.totalorder %s33, 1
          %s609 = scalar_select %p608, %s33, 1
          %s610 = smul.addr %s609, 16
          %s611 = smul.addr %s610, 4
          %s612 = scalar_lea.vmem %s10, %s611
        $region84: #{vivit_forward.3} parent=43 // pred_fallthru
          _
        // Predicated region
        $region85: #{vivit_forward.3} parent=43 // pred_check
          %p613 = pneg %p343
        $region86: #{vivit_forward.3} parent=43 // pred_check_branch
          %615 = sbr.rel (%p613) target = $region88
        $region87: #{vivit_forward.3} parent=43 // pred_region
          %p616 = scmp.lt.s32.totalorder %s33, 1
          %s617 = scalar_select %p616, %s33, 1
          %s618 = scalar_lea.vmem %s11, %s617
        $region88: #{vivit_forward.3} parent=43 // pred_fallthru
          _
      $region44: #{vivit_forward.3} parent=5 // pred_fallthru
        _
      %p619 = scmp.le.s32.totalorder 1, %s25
      %p620 = scmp.lt.s32.totalorder %s25, 3
      %p621 = pnand %p619, %p620
      %p622 = pneg %p621
      // Predicated region
      $region89: #{vivit_forward.3} parent=5 // pred_check
        _
      $region90: #{vivit_forward.3} parent=5 // pred_check_branch
        %624 = sbr.rel (%p621) target = $region92
      $region91: #{vivit_forward.3} parent=5 // pred_region
        %s625 = ssub.s32 %s25, 1
        %p626 = scmp.lt.s32.totalorder %s34, 0
        %s627 = scalar_select %p626, %s34, 0
        %s628 = smul.addr %s627, 8
        %s629 = scalar_lea.vmem %s0, %s628
        %p630 = pneg %p63
        %p631 = pneg %p60
        %p632 = scmp.lt.s32.totalorder %s35, 1
        %s633 = scalar_select %p632, %s35, 1
        %s634 = scalar_lea.vmem %s1, %s633
        %p635 = pneg %p89
        %p636 = pneg %p86
        %p637 = scmp.lt.s32.totalorder %s35, 1
        %s638 = scalar_select %p637, %s35, 1
        %s639 = scalar_lea.vmem %s2, %s638
        %p640 = pneg %p115
        %p641 = pneg %p112
        %p642 = scmp.lt.s32.totalorder %s35, 1
        %s643 = scalar_select %p642, %s35, 1
        %s644 = smul.addr %s643, 4
        %s645 = smul.addr %s644, 4
        %s646 = scalar_lea.vmem %s3, %s645
        %p647 = pneg %p141
        %p648 = pneg %p138
        %p649 = scmp.lt.s32.totalorder %s35, 1
        %s650 = scalar_select %p649, %s35, 1
        %s651 = smul.addr %s650, 4
        %s652 = smul.addr %s651, 4
        %s653 = scalar_lea.vmem %s4, %s652
        %p654 = pneg %p167
        %p655 = pneg %p164
        %p656 = scmp.lt.s32.totalorder %s35, 1
        %s657 = scalar_select %p656, %s35, 1
        %s658 = scalar_lea.vmem %s5, %s657
        %p659 = pneg %p193
        %p660 = pneg %p190
        %p661 = scmp.lt.s32.totalorder %s35, 1
        %s662 = scalar_select %p661, %s35, 1
        %s663 = scalar_lea.vmem %s6, %s662
        %p664 = pneg %p219
        %p665 = pneg %p216
        %p666 = scmp.lt.s32.totalorder %s35, 1
        %s667 = scalar_select %p666, %s35, 1
        %s668 = scalar_lea.vmem %s7, %s667
        %p669 = pneg %p245
        %p670 = pneg %p242
        %p671 = scmp.lt.s32.totalorder %s35, 1
        %s672 = scalar_select %p671, %s35, 1
        %s673 = smul.addr %s672, 4
        %s674 = smul.addr %s673, 4
        %s675 = scalar_lea.vmem %s8, %s674
        %p676 = pneg %p271
        %p677 = pneg %p268
        %p678 = scmp.lt.s32.totalorder %s35, 1
        %s679 = scalar_select %p678, %s35, 1
        %s680 = scalar_lea.vmem %s9, %s679
        %p681 = pneg %p297
        %p682 = pneg %p294
        %p683 = scmp.lt.s32.totalorder %s35, 1
        %s684 = scalar_select %p683, %s35, 1
        %s685 = smul.addr %s684, 16
        %s686 = smul.addr %s685, 4
        %s687 = scalar_lea.vmem %s10, %s686
        %p688 = pneg %p323
        %p689 = pneg %p320
        %p690 = scmp.lt.s32.totalorder %s35, 1
        %s691 = scalar_select %p690, %s35, 1
        %s692 = scalar_lea.vmem %s11, %s691
        %p693 = pneg %p349
        %p694 = pneg %p346
        %p695 = pneg %p370
        %p696 = pneg %p367
        %p697 = pneg %p391
        %p698 = pneg %p388
        %p699 = pneg %p412
        %p700 = pneg %p409
        %p701 = pneg %p433
        %p702 = pneg %p430
        %p703 = pneg %p454
        %p704 = pneg %p451
        %p705 = pneg %p475
        %p706 = pneg %p472
        %p707 = pneg %p501
        %p708 = pneg %p498
        %p709 = scmp.lt.s32.totalorder %s34, 0
        %s710 = scalar_select %p709, %s34, 0
        %s711 = smul.addr %s710, 8
        %s712 = scalar_lea.vmem %s0, %s711
        %p713 = scmp.lt.s32.totalorder %s35, 1
        %s714 = scalar_select %p713, %s35, 1
        %s715 = scalar_lea.vmem %s1, %s714
        %p716 = scmp.lt.s32.totalorder %s35, 1
        %s717 = scalar_select %p716, %s35, 1
        %s718 = scalar_lea.vmem %s2, %s717
        %p719 = scmp.lt.s32.totalorder %s35, 1
        %s720 = scalar_select %p719, %s35, 1
        %s721 = smul.addr %s720, 4
        %s722 = smul.addr %s721, 4
        %s723 = scalar_lea.vmem %s3, %s722
        %p724 = scmp.lt.s32.totalorder %s35, 1
        %s725 = scalar_select %p724, %s35, 1
        %s726 = smul.addr %s725, 4
        %s727 = smul.addr %s726, 4
        %s728 = scalar_lea.vmem %s4, %s727
        %p729 = scmp.lt.s32.totalorder %s35, 1
        %s730 = scalar_select %p729, %s35, 1
        %s731 = scalar_lea.vmem %s5, %s730
        %p732 = scmp.lt.s32.totalorder %s35, 1
        %s733 = scalar_select %p732, %s35, 1
        %s734 = scalar_lea.vmem %s6, %s733
        %p735 = scmp.lt.s32.totalorder %s35, 1
        %s736 = scalar_select %p735, %s35, 1
        %s737 = scalar_lea.vmem %s7, %s736
        %p738 = scmp.lt.s32.totalorder %s35, 1
        %s739 = scalar_select %p738, %s35, 1
        %s740 = smul.addr %s739, 4
        %s741 = smul.addr %s740, 4
        %s742 = scalar_lea.vmem %s8, %s741
        %p743 = scmp.lt.s32.totalorder %s35, 1
        %s744 = scalar_select %p743, %s35, 1
        %s745 = scalar_lea.vmem %s9, %s744
        %p746 = scmp.lt.s32.totalorder %s35, 1
        %s747 = scalar_select %p746, %s35, 1
        %s748 = smul.addr %s747, 16
        %s749 = smul.addr %s748, 4
        %s750 = scalar_lea.vmem %s10, %s749
        %p751 = scmp.lt.s32.totalorder %s35, 1
        %s752 = scalar_select %p751, %s35, 1
        %s753 = scalar_lea.vmem %s11, %s752
        %p755 = scmp.eq.s32.totalorder %s35, 0
        // Predicated region
        $region93: #{vivit_forward.3} parent=91 // pred_check
          %p756 = pneg %p755
        $region94: #{vivit_forward.3} parent=91 // pred_check_branch
          %758 = sbr.rel (%p756) target = $region96
        $region95: #{vivit_forward.3} parent=91 // pred_region
          %v759 = vld [vmem:[%s712] sm:$0xff]
          %vm760 = vcmask 261120
          %761 = vst.msk [vmem:[#allocation2] sm:$0xff] %vm760, %v759
        $region96: #{vivit_forward.3} parent=91 // pred_fallthru
          _
        %v762 = vld [vmem:[#allocation2] sm:$0xff]
        %v763 = vld [vmem:[%s715] sm:$0x1]
        %v764 = vld [vmem:[%s718] sm:$0x1]
        %vm765 = vcmask 261120
        %v766 = vsel %vm765, %v762, 0.0
        %767 = vadd.xlane.f32.xlu0 %v766
        %v768 = vpop.xlane.xlu0 %767
        %v769 = vrcp.pop 32.0
        %v770 = vmul.f32 %v768, %v769
        %v771 = vsub.f32 %v762, %v770
        %v772 = vmul.f32 %v771, %v771
        %v773 = vsel %vm765, %v772, 0.0
        %774 = vadd.xlane.f32.xlu0 %v773
        %v775 = vpop.xlane.xlu0 %774
        %v776 = vmul.f32 %v775, %v769
        %v777 = vadd.f32 %v776, 1e-05
        %v778 = vrsqrt.pop %v777
        %v779 = vmul.f32 %v771, %v778
        %v781 = vlaneseq
        %v782 = vshrl.u32 %v781, 7
        %v783 = vsub.s32 0, %v782
        %v784 = vrot.slane %v763, %v783
        %v786 = vmul.f32 %v779, %v784
        %v788 = vlaneseq
        %v789 = vshrl.u32 %v788, 7
        %v790 = vsub.s32 0, %v789
        %v791 = vrot.slane %v764, %v790
        %v793 = vadd.f32 %v786, %v791
        %v794 = vpack.c.bf16 %v793, %v793
        %v795 = vld [vmem:[%s723] sm:$0xf]
        %v796 = vld [vmem:[%s723 + $0x4] sm:$0xf]
        %v797 = vld [vmem:[%s723 + $0x8] sm:$0xf]
        %v798 = vld [vmem:[%s723 + $0xc] sm:$0xf]
        %v803 = vunpack.c.l.b16 %v795
        %v804 = vunpack.c.l.b16 %v796
        %v805 = vunpack.c.l.b16 %v797
        %v806 = vunpack.c.l.b16 %v798
        %v807 = vpack.c.b16 %v804, %v803
        %v808 = vpack.c.b16 %v806, %v805
        %v812 = vsel %vm765, %v794, 0
        %814 = vmatprep.subr.bf16.mxu0 0
        %815 = vmatpush1.bf16.msra.mxu0 0
        %816 = vmatprep.subr.bf16.mxu0 0
        %817 = vmatpush1.bf16.msra.mxu0 0
        %818 = vmatprep.subr.bf16.mxu0 0
        %819 = vmatpush1.bf16.msra.mxu0 0
        %820 = vmatprep.subr.bf16.mxu0 0
        %821 = vmatpush1.bf16.msra.mxu0 0
        %822 = vmatprep.subr.bf16.mxu0 0
        %823 = vmatpush1.bf16.msra.mxu0 0
        %824 = vmatprep.subr.bf16.mxu0 0
        %825 = vmatpush1.bf16.msra.mxu0 0
        %826 = vmatprep.subr.bf16.mxu0 0
        %827 = vmatpush1.bf16.msra.mxu0 %v808
        %828 = vmatprep.subr.bf16.mxu0 0
        %829 = vmatpush1.bf16.msra.mxu0 %v807
        %830 = vmatprep.subr.bf16.mxu0 0
        %831 = vmatpush2.bf16.msra.mxu0 0
        %832 = vmatprep.subr.bf16.mxu0 0
        %833 = vmatpush2.bf16.msra.mxu0 0
        %834 = vmatprep.subr.bf16.mxu0 0
        %835 = vmatpush2.bf16.msra.mxu0 0
        %836 = vmatprep.subr.bf16.mxu0 0
        %837 = vmatpush2.bf16.msra.mxu0 0
        %838 = vmatprep.subr.bf16.mxu0 0
        %839 = vmatpush2.bf16.msra.mxu0 0
        %840 = vmatprep.subr.bf16.mxu0 0
        %841 = vmatpush2.bf16.msra.mxu0 0
        %842 = vmatprep.subr.bf16.mxu0 0
        %843 = vmatpush2.bf16.msra.mxu0 0
        %844 = vmatprep.subr.bf16.mxu0 0
        %845 = vmatpush2.bf16.msra.mxu0 0
        %846 = vmatprep.mubr.bf16.mxu0 0
        %847 = vmatmul.mubr.bf16.gmra.mxu0 %v812
        %v848 = vpop.f32.mrf.mxu0
        %v849 = vadd.f32 0.0, %v848
        %v850 = vpop.f32.mrf.mxu0
        %v851 = vpop.f32.mrf.mxu0
        %v852 = vpop.f32.mrf.mxu0
        %853 = vdwg.mxu0
        %v855 = vcombine.high %v849, %v849
        %v857 = vpack.c.bf16 %v849, %v849
        %v858 = vpack.c.bf16 %v855, %v855
        %860 = vrot.lane.b32.xlu0 %v857, 96
        %v861 = vpop.permute.xlu0 %860
        %vm862 = vcmask 130048
        %v864 = vsel %vm862, %v857, 0
        %v867 = vsel %vm862, %v861, 0
        %869 = vmatprep.subr.bf16.mxu0 0
        %870 = vmatpush1.bf16.xpose.msra.mxu0 0
        %871 = vmatprep.subr.bf16.mxu0 0
        %872 = vmatpush1.bf16.xpose.msra.mxu0 0
        %873 = vmatprep.subr.bf16.mxu0 0
        %874 = vmatpush1.bf16.xpose.msra.mxu0 0
        %875 = vmatprep.subr.bf16.mxu0 0
        %876 = vmatpush1.bf16.xpose.msra.mxu0 0
        %877 = vmatprep.subr.bf16.mxu0 0
        %878 = vmatpush1.bf16.xpose.msra.mxu0 0
        %879 = vmatprep.subr.bf16.mxu0 0
        %880 = vmatpush1.bf16.xpose.msra.mxu0 0
        %881 = vmatprep.subr.bf16.mxu0 0
        %882 = vmatpush1.bf16.xpose.msra.mxu0 0
        %883 = vmatprep.subr.bf16.mxu0 0
        %884 = vmatpush1.bf16.xpose.msra.mxu0 %v867
        %885 = vmatprep.subr.bf16.mxu0 0
        %886 = vmatpush2.bf16.xpose.msra.mxu0 0
        %887 = vmatprep.subr.bf16.mxu0 0
        %888 = vmatpush2.bf16.xpose.msra.mxu0 0
        %889 = vmatprep.subr.bf16.mxu0 0
        %890 = vmatpush2.bf16.xpose.msra.mxu0 0
        %891 = vmatprep.subr.bf16.mxu0 0
        %892 = vmatpush2.bf16.xpose.msra.mxu0 0
        %893 = vmatprep.subr.bf16.mxu0 0
        %894 = vmatpush2.bf16.xpose.msra.mxu0 0
        %895 = vmatprep.subr.bf16.mxu0 0
        %896 = vmatpush2.bf16.xpose.msra.mxu0 0
        %897 = vmatprep.subr.bf16.mxu0 0
        %898 = vmatpush2.bf16.xpose.msra.mxu0 0
        %899 = vmatprep.subr.bf16.mxu0 0
        %900 = vmatpush2.bf16.xpose.msra.mxu0 0
        %901 = vmatprep.mubr.bf16.mxu0 0
        %902 = vmatmul.mubr.bf16.gmra.mxu0 %v864
        %v903 = vpop.f32.mrf.mxu0
        %v904 = vadd.f32 0.0, %v903
        %v905 = vpop.f32.mrf.mxu0
        %v906 = vpop.f32.mrf.mxu0
        %v907 = vpop.f32.mrf.mxu0
        %908 = vdwg.mxu0
        %910 = vrot.lane.b32.xlu0 %v858, 96
        %v911 = vpop.permute.xlu0 %910
        %v913 = vsel %vm862, %v858, 0
        %v916 = vsel %vm862, %v911, 0
        %918 = vmatprep.subr.bf16.mxu0 0
        %919 = vmatpush1.bf16.xpose.msra.mxu0 0
        %920 = vmatprep.subr.bf16.mxu0 0
        %921 = vmatpush1.bf16.xpose.msra.mxu0 0
        %922 = vmatprep.subr.bf16.mxu0 0
        %923 = vmatpush1.bf16.xpose.msra.mxu0 0
        %924 = vmatprep.subr.bf16.mxu0 0
        %925 = vmatpush1.bf16.xpose.msra.mxu0 0
        %926 = vmatprep.subr.bf16.mxu0 0
        %927 = vmatpush1.bf16.xpose.msra.mxu0 0
        %928 = vmatprep.subr.bf16.mxu0 0
        %929 = vmatpush1.bf16.xpose.msra.mxu0 0
        %930 = vmatprep.subr.bf16.mxu0 0
        %931 = vmatpush1.bf16.xpose.msra.mxu0 0
        %932 = vmatprep.subr.bf16.mxu0 0
        %933 = vmatpush1.bf16.xpose.msra.mxu0 %v916
        %934 = vmatprep.subr.bf16.mxu0 0
        %935 = vmatpush2.bf16.xpose.msra.mxu0 0
        %936 = vmatprep.subr.bf16.mxu0 0
        %937 = vmatpush2.bf16.xpose.msra.mxu0 0
        %938 = vmatprep.subr.bf16.mxu0 0
        %939 = vmatpush2.bf16.xpose.msra.mxu0 0
        %940 = vmatprep.subr.bf16.mxu0 0
        %941 = vmatpush2.bf16.xpose.msra.mxu0 0
        %942 = vmatprep.subr.bf16.mxu0 0
        %943 = vmatpush2.bf16.xpose.msra.mxu0 0
        %944 = vmatprep.subr.bf16.mxu0 0
        %945 = vmatpush2.bf16.xpose.msra.mxu0 0
        %946 = vmatprep.subr.bf16.mxu0 0
        %947 = vmatpush2.bf16.xpose.msra.mxu0 0
        %948 = vmatprep.subr.bf16.mxu0 0
        %949 = vmatpush2.bf16.xpose.msra.mxu0 0
        %950 = vmatprep.mubr.bf16.mxu0 0
        %951 = vmatmul.mubr.bf16.gmra.mxu0 %v913
        %v952 = vpop.f32.mrf.mxu0
        %v953 = vadd.f32 0.0, %v952
        %v954 = vpop.f32.mrf.mxu0
        %v955 = vpop.f32.mrf.mxu0
        %v956 = vpop.f32.mrf.mxu0
        %957 = vdwg.mxu0
        %vm958 = vcmask 27648
        %v959 = vsel %vm958, %v904, -inf
        %960 = vmax.xlane.f32.xlu0 %v959
        %v961 = vpop.xlane.xlu0 %960
        %v962 = vsel %vm958, %v953, -inf
        %963 = vmax.xlane.f32.xlu0 %v962
        %v964 = vpop.xlane.xlu0 %963
        %v965 = vsub.f32 %v904, %v961
        %v966 = vsub.f32 %v953, %v964
        %v967 = vmul.f32 %v965, 1.442695
        %v968 = vpow.pop %v967
        %v969 = vmul.f32 %v966, 1.442695
        %v970 = vpow.pop %v969
        %v971 = vsel %vm958, %v968, 0.0
        %972 = vadd.xlane.f32.xlu0 %v971
        %v973 = vpop.xlane.xlu0 %972
        %v974 = vsel %vm958, %v970, 0.0
        %975 = vadd.xlane.f32.xlu0 %v974
        %v976 = vpop.xlane.xlu0 %975
        %v977 = vrcp.pop %v973
        %v978 = vrcp.pop %v976
        %v979 = vmul.f32 %v968, %v977
        %v980 = vmul.f32 %v970, %v978
        %v981 = vpack.c.bf16 %v979, %v979
        %v982 = vpack.c.bf16 %v980, %v980
        %983 = vrot.lane.b32.xlu0 %v857, 64
        %v984 = vpop.permute.xlu0 %983
        %vm985 = vcmask 31744
        %v987 = vsel %vm985, %v981, 0
        %vm989 = vcmask 1041408
        %v991 = vsel %vm989, %v984, 0
        %993 = vmatprep.subr.bf16.mxu0 0
        %994 = vmatpush1.bf16.msra.mxu0 0
        %995 = vmatprep.subr.bf16.mxu0 0
        %996 = vmatpush1.bf16.msra.mxu0 0
        %997 = vmatprep.subr.bf16.mxu0 0
        %998 = vmatpush1.bf16.msra.mxu0 0
        %999 = vmatprep.subr.bf16.mxu0 0
        %1000 = vmatpush1.bf16.msra.mxu0 0
        %1001 = vmatprep.subr.bf16.mxu0 0
        %1002 = vmatpush1.bf16.msra.mxu0 0
        %1003 = vmatprep.subr.bf16.mxu0 0
        %1004 = vmatpush1.bf16.msra.mxu0 0
        %1005 = vmatprep.subr.bf16.mxu0 0
        %1006 = vmatpush1.bf16.msra.mxu0 0
        %1007 = vmatprep.subr.bf16.mxu0 0
        %1008 = vmatpush1.bf16.msra.mxu0 %v991
        %1009 = vmatprep.subr.bf16.mxu0 0
        %1010 = vmatpush2.bf16.msra.mxu0 0
        %1011 = vmatprep.subr.bf16.mxu0 0
        %1012 = vmatpush2.bf16.msra.mxu0 0
        %1013 = vmatprep.subr.bf16.mxu0 0
        %1014 = vmatpush2.bf16.msra.mxu0 0
        %1015 = vmatprep.subr.bf16.mxu0 0
        %1016 = vmatpush2.bf16.msra.mxu0 0
        %1017 = vmatprep.subr.bf16.mxu0 0
        %1018 = vmatpush2.bf16.msra.mxu0 0
        %1019 = vmatprep.subr.bf16.mxu0 0
        %1020 = vmatpush2.bf16.msra.mxu0 0
        %1021 = vmatprep.subr.bf16.mxu0 0
        %1022 = vmatpush2.bf16.msra.mxu0 0
        %1023 = vmatprep.subr.bf16.mxu0 0
        %1024 = vmatpush2.bf16.msra.mxu0 0
        %1025 = vmatprep.mubr.bf16.mxu0 0
        %1026 = vmatmul.mubr.bf16.gmra.mxu0 %v987
        %v1027 = vpop.f32.mrf.mxu0
        %v1028 = vadd.f32 0.0, %v1027
        %v1029 = vpop.f32.mrf.mxu0
        %v1030 = vpop.f32.mrf.mxu0
        %v1031 = vpop.f32.mrf.mxu0
        %1032 = vdwg.mxu0
        %1033 = vrot.lane.b32.xlu0 %v858, 64
        %v1034 = vpop.permute.xlu0 %1033
        %v1036 = vsel %vm985, %v982, 0
        %v1039 = vsel %vm989, %v1034, 0
        %1041 = vmatprep.subr.bf16.mxu0 0
        %1042 = vmatpush1.bf16.msra.mxu0 0
        %1043 = vmatprep.subr.bf16.mxu0 0
        %1044 = vmatpush1.bf16.msra.mxu0 0
        %1045 = vmatprep.subr.bf16.mxu0 0
        %1046 = vmatpush1.bf16.msra.mxu0 0
        %1047 = vmatprep.subr.bf16.mxu0 0
        %1048 = vmatpush1.bf16.msra.mxu0 0
        %1049 = vmatprep.subr.bf16.mxu0 0
        %1050 = vmatpush1.bf16.msra.mxu0 0
        %1051 = vmatprep.subr.bf16.mxu0 0
        %1052 = vmatpush1.bf16.msra.mxu0 0
        %1053 = vmatprep.subr.bf16.mxu0 0
        %1054 = vmatpush1.bf16.msra.mxu0 0
        %1055 = vmatprep.subr.bf16.mxu0 0
        %1056 = vmatpush1.bf16.msra.mxu0 %v1039
        %1057 = vmatprep.subr.bf16.mxu0 0
        %1058 = vmatpush2.bf16.msra.mxu0 0
        %1059 = vmatprep.subr.bf16.mxu0 0
        %1060 = vmatpush2.bf16.msra.mxu0 0
        %1061 = vmatprep.subr.bf16.mxu0 0
        %1062 = vmatpush2.bf16.msra.mxu0 0
        %1063 = vmatprep.subr.bf16.mxu0 0
        %1064 = vmatpush2.bf16.msra.mxu0 0
        %1065 = vmatprep.subr.bf16.mxu0 0
        %1066 = vmatpush2.bf16.msra.mxu0 0
        %1067 = vmatprep.subr.bf16.mxu0 0
        %1068 = vmatpush2.bf16.msra.mxu0 0
        %1069 = vmatprep.subr.bf16.mxu0 0
        %1070 = vmatpush2.bf16.msra.mxu0 0
        %1071 = vmatprep.subr.bf16.mxu0 0
        %1072 = vmatpush2.bf16.msra.mxu0 0
        %1073 = vmatprep.mubr.bf16.mxu0 0
        %1074 = vmatmul.mubr.bf16.gmra.mxu0 %v1036
        %v1075 = vpop.f32.mrf.mxu0
        %v1076 = vadd.f32 0.0, %v1075
        %v1077 = vpop.f32.mrf.mxu0
        %v1078 = vpop.f32.mrf.mxu0
        %v1079 = vpop.f32.mrf.mxu0
        %1080 = vdwg.mxu0
        %1081 = vrot.lane.b32.xlu0 %v857, 112
        %v1082 = vpop.permute.xlu0 %1081
        %1083 = vrot.lane.b32.xlu0 %v857, 80
        %v1084 = vpop.permute.xlu0 %1083
        %v1086 = vsel %vm862, %v1082, 0
        %v1089 = vsel %vm862, %v1084, 0
        %1091 = vmatprep.subr.bf16.mxu0 0
        %1092 = vmatpush1.bf16.xpose.msra.mxu0 0
        %1093 = vmatprep.subr.bf16.mxu0 0
        %1094 = vmatpush1.bf16.xpose.msra.mxu0 0
        %1095 = vmatprep.subr.bf16.mxu0 0
        %1096 = vmatpush1.bf16.xpose.msra.mxu0 0
        %1097 = vmatprep.subr.bf16.mxu0 0
        %1098 = vmatpush1.bf16.xpose.msra.mxu0 0
        %1099 = vmatprep.subr.bf16.mxu0 0
        %1100 = vmatpush1.bf16.xpose.msra.mxu0 0
        %1101 = vmatprep.subr.bf16.mxu0 0
        %1102 = vmatpush1.bf16.xpose.msra.mxu0 0
        %1103 = vmatprep.subr.bf16.mxu0 0
        %1104 = vmatpush1.bf16.xpose.msra.mxu0 0
        %1105 = vmatprep.subr.bf16.mxu0 0
        %1106 = vmatpush1.bf16.xpose.msra.mxu0 %v1089
        %1107 = vmatprep.subr.bf16.mxu0 0
        %1108 = vmatpush2.bf16.xpose.msra.mxu0 0
        %1109 = vmatprep.subr.bf16.mxu0 0
        %1110 = vmatpush2.bf16.xpose.msra.mxu0 0
        %1111 = vmatprep.subr.bf16.mxu0 0
        %1112 = vmatpush2.bf16.xpose.msra.mxu0 0
        %1113 = vmatprep.subr.bf16.mxu0 0
        %1114 = vmatpush2.bf16.xpose.msra.mxu0 0
        %1115 = vmatprep.subr.bf16.mxu0 0
        %1116 = vmatpush2.bf16.xpose.msra.mxu0 0
        %1117 = vmatprep.subr.bf16.mxu0 0
        %1118 = vmatpush2.bf16.xpose.msra.mxu0 0
        %1119 = vmatprep.subr.bf16.mxu0 0
        %1120 = vmatpush2.bf16.xpose.msra.mxu0 0
        %1121 = vmatprep.subr.bf16.mxu0 0
        %1122 = vmatpush2.bf16.xpose.msra.mxu0 0
        %1123 = vmatprep.mubr.bf16.mxu0 0
        %1124 = vmatmul.mubr.bf16.gmra.mxu0 %v1086
        %v1125 = vpop.f32.mrf.mxu0
        %v1126 = vadd.f32 0.0, %v1125
        %v1127 = vpop.f32.mrf.mxu0
        %v1128 = vpop.f32.mrf.mxu0
        %v1129 = vpop.f32.mrf.mxu0
        %1130 = vdwg.mxu0
        %1131 = vrot.lane.b32.xlu0 %v858, 112
        %v1132 = vpop.permute.xlu0 %1131
        %1133 = vrot.lane.b32.xlu0 %v858, 80
        %v1134 = vpop.permute.xlu0 %1133
        %v1136 = vsel %vm862, %v1132, 0
        %v1139 = vsel %vm862, %v1134, 0
        %1141 = vmatprep.subr.bf16.mxu0 0
        %1142 = vmatpush1.bf16.xpose.msra.mxu0 0
        %1143 = vmatprep.subr.bf16.mxu0 0
        %1144 = vmatpush1.bf16.xpose.msra.mxu0 0
        %1145 = vmatprep.subr.bf16.mxu0 0
        %1146 = vmatpush1.bf16.xpose.msra.mxu0 0
        %1147 = vmatprep.subr.bf16.mxu0 0
        %1148 = vmatpush1.bf16.xpose.msra.mxu0 0
        %1149 = vmatprep.subr.bf16.mxu0 0
        %1150 = vmatpush1.bf16.xpose.msra.mxu0 0
        %1151 = vmatprep.subr.bf16.mxu0 0
        %1152 = vmatpush1.bf16.xpose.msra.mxu0 0
        %1153 = vmatprep.subr.bf16.mxu0 0
        %1154 = vmatpush1.bf16.xpose.msra.mxu0 0
        %1155 = vmatprep.subr.bf16.mxu0 0
        %1156 = vmatpush1.bf16.xpose.msra.mxu0 %v1139
        %1157 = vmatprep.subr.bf16.mxu0 0
        %1158 = vmatpush2.bf16.xpose.msra.mxu0 0
        %1159 = vmatprep.subr.bf16.mxu0 0
        %1160 = vmatpush2.bf16.xpose.msra.mxu0 0
        %1161 = vmatprep.subr.bf16.mxu0 0
        %1162 = vmatpush2.bf16.xpose.msra.mxu0 0
        %1163 = vmatprep.subr.bf16.mxu0 0
        %1164 = vmatpush2.bf16.xpose.msra.mxu0 0
        %1165 = vmatprep.subr.bf16.mxu0 0
        %1166 = vmatpush2.bf16.xpose.msra.mxu0 0
        %1167 = vmatprep.subr.bf16.mxu0 0
        %1168 = vmatpush2.bf16.xpose.msra.mxu0 0
        %1169 = vmatprep.subr.bf16.mxu0 0
        %1170 = vmatpush2.bf16.xpose.msra.mxu0 0
        %1171 = vmatprep.subr.bf16.mxu0 0
        %1172 = vmatpush2.bf16.xpose.msra.mxu0 0
        %1173 = vmatprep.mubr.bf16.mxu0 0
        %1174 = vmatmul.mubr.bf16.gmra.mxu0 %v1136
        %v1175 = vpop.f32.mrf.mxu0
        %v1176 = vadd.f32 0.0, %v1175
        %v1177 = vpop.f32.mrf.mxu0
        %v1178 = vpop.f32.mrf.mxu0
        %v1179 = vpop.f32.mrf.mxu0
        %1180 = vdwg.mxu0
        %v1181 = vsel %vm958, %v1126, -inf
        %1182 = vmax.xlane.f32.xlu0 %v1181
        %v1183 = vpop.xlane.xlu0 %1182
        %v1184 = vsel %vm958, %v1176, -inf
        %1185 = vmax.xlane.f32.xlu0 %v1184
        %v1186 = vpop.xlane.xlu0 %1185
        %v1187 = vsub.f32 %v1126, %v1183
        %v1188 = vsub.f32 %v1176, %v1186
        %v1189 = vmul.f32 %v1187, 1.442695
        %v1190 = vpow.pop %v1189
        %v1191 = vmul.f32 %v1188, 1.442695
        %v1192 = vpow.pop %v1191
        %v1193 = vsel %vm958, %v1190, 0.0
        %1194 = vadd.xlane.f32.xlu0 %v1193
        %v1195 = vpop.xlane.xlu0 %1194
        %v1196 = vsel %vm958, %v1192, 0.0
        %1197 = vadd.xlane.f32.xlu0 %v1196
        %v1198 = vpop.xlane.xlu0 %1197
        %v1199 = vrcp.pop %v1195
        %v1200 = vrcp.pop %v1198
        %v1201 = vmul.f32 %v1190, %v1199
        %v1202 = vmul.f32 %v1192, %v1200
        %v1203 = vpack.c.bf16 %v1201, %v1201
        %v1204 = vpack.c.bf16 %v1202, %v1202
        %1205 = vrot.lane.b32.xlu0 %v857, 48
        %v1206 = vpop.permute.xlu0 %1205
        %v1208 = vsel %vm985, %v1203, 0
        %v1211 = vsel %vm989, %v1206, 0
        %1213 = vmatprep.subr.bf16.mxu0 0
        %1214 = vmatpush1.bf16.msra.mxu0 0
        %1215 = vmatprep.subr.bf16.mxu0 0
        %1216 = vmatpush1.bf16.msra.mxu0 0
        %1217 = vmatprep.subr.bf16.mxu0 0
        %1218 = vmatpush1.bf16.msra.mxu0 0
        %1219 = vmatprep.subr.bf16.mxu0 0
        %1220 = vmatpush1.bf16.msra.mxu0 0
        %1221 = vmatprep.subr.bf16.mxu0 0
        %1222 = vmatpush1.bf16.msra.mxu0 0
        %1223 = vmatprep.subr.bf16.mxu0 0
        %1224 = vmatpush1.bf16.msra.mxu0 0
        %1225 = vmatprep.subr.bf16.mxu0 0
        %1226 = vmatpush1.bf16.msra.mxu0 0
        %1227 = vmatprep.subr.bf16.mxu0 0
        %1228 = vmatpush1.bf16.msra.mxu0 %v1211
        %1229 = vmatprep.subr.bf16.mxu0 0
        %1230 = vmatpush2.bf16.msra.mxu0 0
        %1231 = vmatprep.subr.bf16.mxu0 0
        %1232 = vmatpush2.bf16.msra.mxu0 0
        %1233 = vmatprep.subr.bf16.mxu0 0
        %1234 = vmatpush2.bf16.msra.mxu0 0
        %1235 = vmatprep.subr.bf16.mxu0 0
        %1236 = vmatpush2.bf16.msra.mxu0 0
        %1237 = vmatprep.subr.bf16.mxu0 0
        %1238 = vmatpush2.bf16.msra.mxu0 0
        %1239 = vmatprep.subr.bf16.mxu0 0
        %1240 = vmatpush2.bf16.msra.mxu0 0
        %1241 = vmatprep.subr.bf16.mxu0 0
        %1242 = vmatpush2.bf16.msra.mxu0 0
        %1243 = vmatprep.subr.bf16.mxu0 0
        %1244 = vmatpush2.bf16.msra.mxu0 0
        %1245 = vmatprep.mubr.bf16.mxu0 0
        %1246 = vmatmul.mubr.bf16.gmra.mxu0 %v1208
        %v1247 = vpop.f32.mrf.mxu0
        %v1248 = vadd.f32 0.0, %v1247
        %v1249 = vpop.f32.mrf.mxu0
        %v1250 = vpop.f32.mrf.mxu0
        %v1251 = vpop.f32.mrf.mxu0
        %1252 = vdwg.mxu0
        %1253 = vrot.lane.b32.xlu0 %v858, 48
        %v1254 = vpop.permute.xlu0 %1253
        %v1256 = vsel %vm985, %v1204, 0
        %v1259 = vsel %vm989, %v1254, 0
        %1261 = vmatprep.subr.bf16.mxu0 0
        %1262 = vmatpush1.bf16.msra.mxu0 0
        %1263 = vmatprep.subr.bf16.mxu0 0
        %1264 = vmatpush1.bf16.msra.mxu0 0
        %1265 = vmatprep.subr.bf16.mxu0 0
        %1266 = vmatpush1.bf16.msra.mxu0 0
        %1267 = vmatprep.subr.bf16.mxu0 0
        %1268 = vmatpush1.bf16.msra.mxu0 0
        %1269 = vmatprep.subr.bf16.mxu0 0
        %1270 = vmatpush1.bf16.msra.mxu0 0
        %1271 = vmatprep.subr.bf16.mxu0 0
        %1272 = vmatpush1.bf16.msra.mxu0 0
        %1273 = vmatprep.subr.bf16.mxu0 0
        %1274 = vmatpush1.bf16.msra.mxu0 0
        %1275 = vmatprep.subr.bf16.mxu0 0
        %1276 = vmatpush1.bf16.msra.mxu0 %v1259
        %1277 = vmatprep.subr.bf16.mxu0 0
        %1278 = vmatpush2.bf16.msra.mxu0 0
        %1279 = vmatprep.subr.bf16.mxu0 0
        %1280 = vmatpush2.bf16.msra.mxu0 0
        %1281 = vmatprep.subr.bf16.mxu0 0
        %1282 = vmatpush2.bf16.msra.mxu0 0
        %1283 = vmatprep.subr.bf16.mxu0 0
        %1284 = vmatpush2.bf16.msra.mxu0 0
        %1285 = vmatprep.subr.bf16.mxu0 0
        %1286 = vmatpush2.bf16.msra.mxu0 0
        %1287 = vmatprep.subr.bf16.mxu0 0
        %1288 = vmatpush2.bf16.msra.mxu0 0
        %1289 = vmatprep.subr.bf16.mxu0 0
        %1290 = vmatpush2.bf16.msra.mxu0 0
        %1291 = vmatprep.subr.bf16.mxu0 0
        %1292 = vmatpush2.bf16.msra.mxu0 0
        %1293 = vmatprep.mubr.bf16.mxu0 0
        %1294 = vmatmul.mubr.bf16.gmra.mxu0 %v1256
        %v1295 = vpop.f32.mrf.mxu0
        %v1296 = vadd.f32 0.0, %v1295
        %v1297 = vpop.f32.mrf.mxu0
        %v1298 = vpop.f32.mrf.mxu0
        %v1299 = vpop.f32.mrf.mxu0
        %1300 = vdwg.mxu0
        %v1303 = vcombine.low %v1028, %v1076
        %v1307 = vcombine.low %v1248, %v1296
        %1308 = vrot.lane.b32.xlu0 %v1307, 16
        %v1309 = vpop.permute.xlu0 %1308
        %v1311 = vsel %vm862, %v1303, %v1309
        %v1312 = vpack.c.bf16 %v1311, %v1311
        %v1313 = vld [vmem:[%s728] sm:$0xf]
        %v1314 = vld [vmem:[%s728 + $0x4] sm:$0xf]
        %v1315 = vld [vmem:[%s728 + $0x8] sm:$0xf]
        %v1316 = vld [vmem:[%s728 + $0xc] sm:$0xf]
        %v1321 = vunpack.c.l.b16 %v1313
        %v1322 = vunpack.c.l.b16 %v1314
        %v1323 = vunpack.c.l.b16 %v1315
        %v1324 = vunpack.c.l.b16 %v1316
        %v1325 = vpack.c.b16 %v1322, %v1321
        %v1326 = vpack.c.b16 %v1324, %v1323
        %v1330 = vsel %vm765, %v1312, 0
        %1332 = vmatprep.subr.bf16.mxu0 0
        %1333 = vmatpush1.bf16.msra.mxu0 0
        %1334 = vmatprep.subr.bf16.mxu0 0
        %1335 = vmatpush1.bf16.msra.mxu0 0
        %1336 = vmatprep.subr.bf16.mxu0 0
        %1337 = vmatpush1.bf16.msra.mxu0 0
        %1338 = vmatprep.subr.bf16.mxu0 0
        %1339 = vmatpush1.bf16.msra.mxu0 0
        %1340 = vmatprep.subr.bf16.mxu0 0
        %1341 = vmatpush1.bf16.msra.mxu0 0
        %1342 = vmatprep.subr.bf16.mxu0 0
        %1343 = vmatpush1.bf16.msra.mxu0 0
        %1344 = vmatprep.subr.bf16.mxu0 0
        %1345 = vmatpush1.bf16.msra.mxu0 %v1326
        %1346 = vmatprep.subr.bf16.mxu0 0
        %1347 = vmatpush1.bf16.msra.mxu0 %v1325
        %1348 = vmatprep.subr.bf16.mxu0 0
        %1349 = vmatpush2.bf16.msra.mxu0 0
        %1350 = vmatprep.subr.bf16.mxu0 0
        %1351 = vmatpush2.bf16.msra.mxu0 0
        %1352 = vmatprep.subr.bf16.mxu0 0
        %1353 = vmatpush2.bf16.msra.mxu0 0
        %1354 = vmatprep.subr.bf16.mxu0 0
        %1355 = vmatpush2.bf16.msra.mxu0 0
        %1356 = vmatprep.subr.bf16.mxu0 0
        %1357 = vmatpush2.bf16.msra.mxu0 0
        %1358 = vmatprep.subr.bf16.mxu0 0
        %1359 = vmatpush2.bf16.msra.mxu0 0
        %1360 = vmatprep.subr.bf16.mxu0 0
        %1361 = vmatpush2.bf16.msra.mxu0 0
        %1362 = vmatprep.subr.bf16.mxu0 0
        %1363 = vmatpush2.bf16.msra.mxu0 0
        %1364 = vmatprep.mubr.bf16.mxu0 0
        %1365 = vmatmul.mubr.bf16.gmra.mxu0 %v1330
        %v1366 = vpop.f32.mrf.mxu0
        %v1367 = vadd.f32 0.0, %v1366
        %v1368 = vpop.f32.mrf.mxu0
        %v1369 = vpop.f32.mrf.mxu0
        %v1370 = vpop.f32.mrf.mxu0
        %1371 = vdwg.mxu0
        %v1372 = vadd.f32 %v762, %v1367
        %v1373 = vld [vmem:[%s731] sm:$0x1]
        %v1375 = vlaneseq
        %v1376 = vshrl.u32 %v1375, 7
        %v1377 = vsub.s32 0, %v1376
        %v1378 = vrot.slane %v1373, %v1377
        %v1380 = vadd.f32 %v1372, %v1378
        %v1381 = vld [vmem:[%s734] sm:$0x1]
        %v1382 = vld [vmem:[%s737] sm:$0x1]
        %v1383 = vsel %vm765, %v1380, 0.0
        %1384 = vadd.xlane.f32.xlu0 %v1383
        %v1385 = vpop.xlane.xlu0 %1384
        %v1386 = vmul.f32 %v1385, %v769
        %v1387 = vsub.f32 %v1380, %v1386
        %v1388 = vmul.f32 %v1387, %v1387
        %v1389 = vsel %vm765, %v1388, 0.0
        %1390 = vadd.xlane.f32.xlu0 %v1389
        %v1391 = vpop.xlane.xlu0 %1390
        %v1392 = vmul.f32 %v1391, %v769
        %v1393 = vadd.f32 %v1392, 1e-05
        %v1394 = vrsqrt.pop %v1393
        %v1395 = vmul.f32 %v1387, %v1394
        %v1397 = vlaneseq
        %v1398 = vshrl.u32 %v1397, 7
        %v1399 = vsub.s32 0, %v1398
        %v1400 = vrot.slane %v1381, %v1399
        %v1402 = vmul.f32 %v1395, %v1400
        %v1404 = vlaneseq
        %v1405 = vshrl.u32 %v1404, 7
        %v1406 = vsub.s32 0, %v1405
        %v1407 = vrot.slane %v1382, %v1406
        %v1409 = vadd.f32 %v1402, %v1407
        %v1410 = vpack.c.bf16 %v1409, %v1409
        %v1411 = vld [vmem:[%s742] sm:$0xf]
        %v1412 = vld [vmem:[%s742 + $0x4] sm:$0xf]
        %v1413 = vld [vmem:[%s742 + $0x8] sm:$0xf]
        %v1414 = vld [vmem:[%s742 + $0xc] sm:$0xf]
        %v1415 = vld [vmem:[%s745] sm:$0x1]
        %v1417 = vlaneseq
        %v1418 = vshrl.u32 %v1417, 7
        %v1419 = vsub.s32 0, %v1418
        %v1420 = vrot.slane %v1415, %v1419
        %v1426 = vunpack.c.l.b16 %v1411
        %v1427 = vunpack.c.l.b16 %v1412
        %v1428 = vunpack.c.l.b16 %v1413
        %v1429 = vunpack.c.l.b16 %v1414
        %v1430 = vpack.c.b16 %v1427, %v1426
        %v1431 = vpack.c.b16 %v1429, %v1428
        %v1435 = vsel %vm765, %v1410, 0
        %1437 = vmatprep.subr.bf16.mxu0 0
        %1438 = vmatpush1.bf16.msra.mxu0 0
        %1439 = vmatprep.subr.bf16.mxu0 0
        %1440 = vmatpush1.bf16.msra.mxu0 0
        %1441 = vmatprep.subr.bf16.mxu0 0
        %1442 = vmatpush1.bf16.msra.mxu0 0
        %1443 = vmatprep.subr.bf16.mxu0 0
        %1444 = vmatpush1.bf16.msra.mxu0 0
        %1445 = vmatprep.subr.bf16.mxu0 0
        %1446 = vmatpush1.bf16.msra.mxu0 0
        %1447 = vmatprep.subr.bf16.mxu0 0
        %1448 = vmatpush1.bf16.msra.mxu0 0
        %1449 = vmatprep.subr.bf16.mxu0 0
        %1450 = vmatpush1.bf16.msra.mxu0 %v1431
        %1451 = vmatprep.subr.bf16.mxu0 0
        %1452 = vmatpush1.bf16.msra.mxu0 %v1430
        %1453 = vmatprep.subr.bf16.mxu0 0
        %1454 = vmatpush2.bf16.msra.mxu0 0
        %1455 = vmatprep.subr.bf16.mxu0 0
        %1456 = vmatpush2.bf16.msra.mxu0 0
        %1457 = vmatprep.subr.bf16.mxu0 0
        %1458 = vmatpush2.bf16.msra.mxu0 0
        %1459 = vmatprep.subr.bf16.mxu0 0
        %1460 = vmatpush2.bf16.msra.mxu0 0
        %1461 = vmatprep.subr.bf16.mxu0 0
        %1462 = vmatpush2.bf16.msra.mxu0 0
        %1463 = vmatprep.subr.bf16.mxu0 0
        %1464 = vmatpush2.bf16.msra.mxu0 0
        %1465 = vmatprep.subr.bf16.mxu0 0
        %1466 = vmatpush2.bf16.msra.mxu0 0
        %1467 = vmatprep.subr.bf16.mxu0 0
        %1468 = vmatpush2.bf16.msra.mxu0 0
        %1469 = vmatprep.mubr.bf16.mxu0 0
        %1470 = vmatmul.mubr.bf16.gmra.mxu0 %v1435
        %v1471 = vpop.f32.mrf.mxu0
        %v1472 = vadd.f32 %v1420, %v1471
        %v1473 = vpop.f32.mrf.mxu0
        %v1474 = vpop.f32.mrf.mxu0
        %v1475 = vpop.f32.mrf.mxu0
        %1476 = vdwg.mxu0
        %v1477 = vmul.f32 %v1472, 0.5
        %v1478 = vmul.f32 %v1472, 0.70710677
        %v1479 = verf.f32.pop %v1478
        %v1480 = vadd.f32 %v1479, 1.0
        %v1481 = vmul.f32 %v1477, %v1480
        %v1482 = vpack.c.bf16 %v1481, %v1481
        %v1483 = vld [vmem:[%s750] sm:$0xf]
        %v1484 = vld [vmem:[%s750 + $0x4] sm:$0xf]
        %v1485 = vld [vmem:[%s750 + $0x8] sm:$0xf]
        %v1486 = vld [vmem:[%s750 + $0xc] sm:$0xf]
        %v1487 = vld [vmem:[%s750 + $0x10] sm:$0xf]
        %v1488 = vld [vmem:[%s750 + $0x14] sm:$0xf]
        %v1489 = vld [vmem:[%s750 + $0x18] sm:$0xf]
        %v1490 = vld [vmem:[%s750 + $0x1c] sm:$0xf]
        %v1491 = vld [vmem:[%s750 + $0x20] sm:$0xf]
        %v1492 = vld [vmem:[%s750 + $0x24] sm:$0xf]
        %v1493 = vld [vmem:[%s750 + $0x28] sm:$0xf]
        %v1494 = vld [vmem:[%s750 + $0x2c] sm:$0xf]
        %v1495 = vld [vmem:[%s750 + $0x30] sm:$0xf]
        %v1496 = vld [vmem:[%s750 + $0x34] sm:$0xf]
        %v1497 = vld [vmem:[%s750 + $0x38] sm:$0xf]
        %v1498 = vld [vmem:[%s750 + $0x3c] sm:$0xf]
        %v1515 = vunpack.c.l.b16 %v1483
        %v1516 = vunpack.c.l.b16 %v1484
        %v1517 = vunpack.c.l.b16 %v1485
        %v1518 = vunpack.c.l.b16 %v1486
        %v1519 = vunpack.c.l.b16 %v1487
        %v1520 = vunpack.c.l.b16 %v1488
        %v1521 = vunpack.c.l.b16 %v1489
        %v1522 = vunpack.c.l.b16 %v1490
        %v1523 = vunpack.c.l.b16 %v1491
        %v1524 = vunpack.c.l.b16 %v1492
        %v1525 = vunpack.c.l.b16 %v1493
        %v1526 = vunpack.c.l.b16 %v1494
        %v1527 = vunpack.c.l.b16 %v1495
        %v1528 = vunpack.c.l.b16 %v1496
        %v1529 = vunpack.c.l.b16 %v1497
        %v1530 = vunpack.c.l.b16 %v1498
        %v1531 = vpack.c.b16 %v1516, %v1515
        %v1532 = vpack.c.b16 %v1518, %v1517
        %v1533 = vpack.c.b16 %v1520, %v1519
        %v1534 = vpack.c.b16 %v1522, %v1521
        %v1535 = vpack.c.b16 %v1524, %v1523
        %v1536 = vpack.c.b16 %v1526, %v1525
        %v1537 = vpack.c.b16 %v1528, %v1527
        %v1538 = vpack.c.b16 %v1530, %v1529
        %1547 = vmatprep.subr.bf16.mxu0 0
        %1548 = vmatpush1.bf16.msra.mxu0 %v1538
        %1549 = vmatprep.subr.bf16.mxu0 0
        %1550 = vmatpush1.bf16.msra.mxu0 %v1537
        %1551 = vmatprep.subr.bf16.mxu0 0
        %1552 = vmatpush1.bf16.msra.mxu0 %v1536
        %1553 = vmatprep.subr.bf16.mxu0 0
        %1554 = vmatpush1.bf16.msra.mxu0 %v1535
        %1555 = vmatprep.subr.bf16.mxu0 0
        %1556 = vmatpush1.bf16.msra.mxu0 %v1534
        %1557 = vmatprep.subr.bf16.mxu0 0
        %1558 = vmatpush1.bf16.msra.mxu0 %v1533
        %1559 = vmatprep.subr.bf16.mxu0 0
        %1560 = vmatpush1.bf16.msra.mxu0 %v1532
        %1561 = vmatprep.subr.bf16.mxu0 0
        %1562 = vmatpush1.bf16.msra.mxu0 %v1531
        %1563 = vmatprep.subr.bf16.mxu0 0
        %1564 = vmatpush2.bf16.msra.mxu0 0
        %1565 = vmatprep.subr.bf16.mxu0 0
        %1566 = vmatpush2.bf16.msra.mxu0 0
        %1567 = vmatprep.subr.bf16.mxu0 0
        %1568 = vmatpush2.bf16.msra.mxu0 0
        %1569 = vmatprep.subr.bf16.mxu0 0
        %1570 = vmatpush2.bf16.msra.mxu0 0
        %1571 = vmatprep.subr.bf16.mxu0 0
        %1572 = vmatpush2.bf16.msra.mxu0 0
        %1573 = vmatprep.subr.bf16.mxu0 0
        %1574 = vmatpush2.bf16.msra.mxu0 0
        %1575 = vmatprep.subr.bf16.mxu0 0
        %1576 = vmatpush2.bf16.msra.mxu0 0
        %1577 = vmatprep.subr.bf16.mxu0 0
        %1578 = vmatpush2.bf16.msra.mxu0 0
        %1579 = vmatprep.mubr.bf16.mxu0 0
        %1580 = vmatmul.mubr.bf16.gmra.mxu0 %v1482
        %v1581 = vpop.f32.mrf.mxu0
        %v1582 = vadd.f32 0.0, %v1581
        %v1583 = vpop.f32.mrf.mxu0
        %v1584 = vpop.f32.mrf.mxu0
        %v1585 = vpop.f32.mrf.mxu0
        %1586 = vdwg.mxu0
        %v1587 = vadd.f32 %v1380, %v1582
        %v1588 = vld [vmem:[%s753] sm:$0x1]
        %v1590 = vlaneseq
        %v1591 = vshrl.u32 %v1590, 7
        %v1592 = vsub.s32 0, %v1591
        %v1593 = vrot.slane %v1588, %v1592
        %v1595 = vadd.f32 %v1587, %v1593
        %1596 = vst.msk [vmem:[#allocation2] sm:$0xff] %vm765, %v1595
        %p1597 = scmp.eq.s32.totalorder %s35, 1
        // Predicated region
        $region97: #{vivit_forward.3} parent=91 // pred_check
          %p1598 = pneg %p1597
        $region98: #{vivit_forward.3} parent=91 // pred_check_branch
          %1600 = sbr.rel (%p1598) target = $region100
        $region99: #{vivit_forward.3} parent=91 // pred_region
          %v1601 = vld [vmem:[%s12] sm:$0x1]
          %v1602 = vld [vmem:[%s13] sm:$0x1]
          %v1603 = vsel %vm765, %v1595, 0.0
          %1604 = vadd.xlane.f32.xlu0 %v1603
          %v1605 = vpop.xlane.xlu0 %1604
          %v1606 = vmul.f32 %v1605, %v769
          %v1607 = vsub.f32 %v1595, %v1606
          %v1608 = vmul.f32 %v1607, %v1607
          %v1609 = vsel %vm765, %v1608, 0.0
          %1610 = vadd.xlane.f32.xlu0 %v1609
          %v1611 = vpop.xlane.xlu0 %1610
          %v1612 = vmul.f32 %v1611, %v769
          %v1613 = vadd.f32 %v1612, 1e-05
          %v1614 = vrsqrt.pop %v1613
          %v1615 = vmul.f32 %v1607, %v1614
          %v1617 = vlaneseq
          %v1618 = vshrl.u32 %v1617, 7
          %v1619 = vsub.s32 0, %v1618
          %v1620 = vrot.slane %v1601, %v1619
          %v1622 = vmul.f32 %v1615, %v1620
          %v1624 = vlaneseq
          %v1625 = vshrl.u32 %v1624, 7
          %v1626 = vsub.s32 0, %v1625
          %v1627 = vrot.slane %v1602, %v1626
          %v1629 = vadd.f32 %v1622, %v1627
          %v1630 = vld [vmem:[%s14] sm:$0x1]
          %v1631 = vld [vmem:[%s15] sm:$0x1]
          %v1632 = vsel %vm765, %v1629, 0.0
          %1633 = vadd.xlane.f32.xlu0 %v1632
          %v1634 = vpop.xlane.xlu0 %1633
          %v1635 = vmul.f32 %v1634, %v769
          %v1636 = vsub.f32 %v1629, %v1635
          %v1637 = vmul.f32 %v1636, %v1636
          %v1638 = vsel %vm765, %v1637, 0.0
          %1639 = vadd.xlane.f32.xlu0 %v1638
          %v1640 = vpop.xlane.xlu0 %1639
          %v1641 = vmul.f32 %v1640, %v769
          %v1642 = vadd.f32 %v1641, 1e-05
          %v1643 = vrsqrt.pop %v1642
          %v1644 = vmul.f32 %v1636, %v1643
          %v1646 = vlaneseq
          %v1647 = vshrl.u32 %v1646, 7
          %v1648 = vsub.s32 0, %v1647
          %v1649 = vrot.slane %v1630, %v1648
          %v1651 = vmul.f32 %v1644, %v1649
          %v1653 = vlaneseq
          %v1654 = vshrl.u32 %v1653, 7
          %v1655 = vsub.s32 0, %v1654
          %v1656 = vrot.slane %v1631, %v1655
          %v1658 = vadd.f32 %v1651, %v1656
          %v1659 = vpack.c.bf16 %v1658, %v1658
          %v1660 = vld [vmem:[%s16] sm:$0xf]
          %v1661 = vld [vmem:[%s16 + $0x4] sm:$0xf]
          %v1662 = vld [vmem:[%s16 + $0x8] sm:$0xf]
          %v1663 = vld [vmem:[%s16 + $0xc] sm:$0xf]
          %v1664 = vld [vmem:[%s17] sm:$0x1]
          %v1666 = vlaneseq
          %v1667 = vshrl.u32 %v1666, 7
          %v1668 = vsub.s32 0, %v1667
          %v1669 = vrot.slane %v1664, %v1668
          %v1675 = vunpack.c.l.b16 %v1660
          %v1676 = vunpack.c.l.b16 %v1661
          %v1677 = vunpack.c.l.b16 %v1662
          %v1678 = vunpack.c.l.b16 %v1663
          %v1679 = vpack.c.b16 %v1676, %v1675
          %v1680 = vpack.c.b16 %v1678, %v1677
          %v1684 = vsel %vm765, %v1659, 0
          %1686 = vmatprep.subr.bf16.mxu0 0
          %1687 = vmatpush1.bf16.msra.mxu0 0
          %1688 = vmatprep.subr.bf16.mxu0 0
          %1689 = vmatpush1.bf16.msra.mxu0 0
          %1690 = vmatprep.subr.bf16.mxu0 0
          %1691 = vmatpush1.bf16.msra.mxu0 0
          %1692 = vmatprep.subr.bf16.mxu0 0
          %1693 = vmatpush1.bf16.msra.mxu0 0
          %1694 = vmatprep.subr.bf16.mxu0 0
          %1695 = vmatpush1.bf16.msra.mxu0 0
          %1696 = vmatprep.subr.bf16.mxu0 0
          %1697 = vmatpush1.bf16.msra.mxu0 0
          %1698 = vmatprep.subr.bf16.mxu0 0
          %1699 = vmatpush1.bf16.msra.mxu0 %v1680
          %1700 = vmatprep.subr.bf16.mxu0 0
          %1701 = vmatpush1.bf16.msra.mxu0 %v1679
          %1702 = vmatprep.subr.bf16.mxu0 0
          %1703 = vmatpush2.bf16.msra.mxu0 0
          %1704 = vmatprep.subr.bf16.mxu0 0
          %1705 = vmatpush2.bf16.msra.mxu0 0
          %1706 = vmatprep.subr.bf16.mxu0 0
          %1707 = vmatpush2.bf16.msra.mxu0 0
          %1708 = vmatprep.subr.bf16.mxu0 0
          %1709 = vmatpush2.bf16.msra.mxu0 0
          %1710 = vmatprep.subr.bf16.mxu0 0
          %1711 = vmatpush2.bf16.msra.mxu0 0
          %1712 = vmatprep.subr.bf16.mxu0 0
          %1713 = vmatpush2.bf16.msra.mxu0 0
          %1714 = vmatprep.subr.bf16.mxu0 0
          %1715 = vmatpush2.bf16.msra.mxu0 0
          %1716 = vmatprep.subr.bf16.mxu0 0
          %1717 = vmatpush2.bf16.msra.mxu0 0
          %1718 = vmatprep.mubr.bf16.mxu0 0
          %1719 = vmatmul.mubr.bf16.gmra.mxu0 %v1684
          %v1720 = vpop.f32.mrf.mxu0
          %v1721 = vadd.f32 %v1669, %v1720
          %v1722 = vpop.f32.mrf.mxu0
          %v1723 = vpop.f32.mrf.mxu0
          %v1724 = vpop.f32.mrf.mxu0
          %1725 = vdwg.mxu0
          %1726 = vst.msk [vmem:[#allocation3] sm:$0xff] %vm765, %v1721
        $region100: #{vivit_forward.3} parent=91 // pred_fallthru
          _
        // Predicated region
        $region101: #{vivit_forward.3} parent=91 // pred_check
          %p1727 = pneg %p498
        $region102: #{vivit_forward.3} parent=91 // pred_check_branch
          %1729 = sbr.rel (%p1727) target = $region104
        $region103: #{vivit_forward.3} parent=91 // pred_region
          %s1731 = ssub.s32 128, 128
          %1732 = vsyncadd [#allocation4], %s1731
          %s1733 = smul.addr %s34, 128
          %s1734 = scalar_lea.hbm %s18, %s1733
          %s1736 = sshll.u32 [#allocation3], 4
          %s1737 = int_to_ptr.vmem [resolvable:$true] %s1736
          %1739 = dma.vmem_to_hbm [thread:$0]  %s1737, 128, %s1734, [#allocation4]
        $region104: #{vivit_forward.3} parent=91 // pred_fallthru
          _
        // Predicated region
        $region105: #{vivit_forward.3} parent=91 // pred_check
          %p1740 = pneg %p498
        $region106: #{vivit_forward.3} parent=91 // pred_check_branch
          %1742 = sbr.rel (%p1740) target = $region108
        $region107: #{vivit_forward.3} parent=91 // pred_region
          %1743 = dma.done [#allocation4], 128
        $region108: #{vivit_forward.3} parent=91 // pred_fallthru
          _
      $region92: #{vivit_forward.3} parent=5 // pred_fallthru
        _
      %p1744 = scmp.le.s32.totalorder 2, %s25
      // Predicated region
      $region109: #{vivit_forward.3} parent=5 // pred_check
        %p1745 = pneg %p1744
      $region110: #{vivit_forward.3} parent=5 // pred_check_branch
        %1747 = sbr.rel (%p1745) target = $region112
      $region111: #{vivit_forward.3} parent=5 // pred_region
        %s1748 = ssub.s32 %s25, 2
      $region112: #{vivit_forward.3} parent=5 // pred_fallthru
        _
    $region6: #{vivit_forward.3} parent=1 // loop_footer
      %s29 = sadd.s32 1, %s25
    $region7: #{vivit_forward.3} parent=1 // loop_footer_branch
      %24 = sbr.rel target = $region3
    $region8: #{vivit_forward.3} parent=1 // loop_exit
      _
    %1749 = vsyncpa [#allocation4], 1
    %s1750 = scalar_lea.sflag [#allocation4], 1
    %1751 = vsyncpa %s1750, 1

// kernel: vivit_forward.2
$region0: #{vivit_forward.2}
  #allocation0 [shape = 'u32[]', space=smem, size = 0x4, offset = 0x4, fixed_abs, tag = 'smem constant byte address 0x4 - core index']
  #allocation1 [shape = 'u32[144,128]{1,0:T(1,128)}', space=vmem, size = 0x12000, scoped, tag = 'internal scratch']
  #allocation2 [shape = 'f32[32,32]{1,0:T(8,128)}', space=vmem, size = 0x4000, scoped, tag = 'scratch operand']
  %s0 = inlined_call_operand.vmem [shape: f32[32,192], index: 0, kind: input, shape index: {}]
  %s1 = inlined_call_operand.vmem [shape: bf16[192,32], index: 1, kind: input, shape index: {}]
  %s2 = inlined_call_operand.vmem [shape: f32[1,32], index: 2, kind: input, shape index: {}]
  %s3 = inlined_call_operand.vmem [shape: f32[32,32], index: 3, kind: input, shape index: {}]
  %s4 = inlined_call_operand.vmem [shape: f32[2,1,32], index: 4, kind: input, shape index: {}]
  %s5 = inlined_call_operand.vmem [shape: f32[2,1,32], index: 5, kind: input, shape index: {}]
  %s6 = inlined_call_operand.vmem [shape: bf16[2,32,96], index: 6, kind: input, shape index: {}]
  %s7 = inlined_call_operand.vmem [shape: bf16[2,32,32], index: 7, kind: input, shape index: {}]
  %s8 = inlined_call_operand.vmem [shape: f32[2,1,32], index: 8, kind: input, shape index: {}]
  %s9 = inlined_call_operand.vmem [shape: f32[2,1,32], index: 9, kind: input, shape index: {}]
  %s10 = inlined_call_operand.vmem [shape: f32[2,1,32], index: 10, kind: input, shape index: {}]
  %s11 = inlined_call_operand.vmem [shape: bf16[2,32,128], index: 11, kind: input, shape index: {}]
  %s12 = inlined_call_operand.vmem [shape: f32[2,1,128], index: 12, kind: input, shape index: {}]
  %s13 = inlined_call_operand.vmem [shape: bf16[2,128,32], index: 13, kind: input, shape index: {}]
  %s14 = inlined_call_operand.vmem [shape: f32[2,1,32], index: 14, kind: input, shape index: {}]
  %s15 = inlined_call_operand.vmem [shape: f32[1,32], index: 15, kind: input, shape index: {}]
  %s16 = inlined_call_operand.vmem [shape: f32[1,32], index: 16, kind: input, shape index: {}]
  %s17 = inlined_call_operand.vmem [shape: f32[8,32], index: 17, kind: output, shape index: {}]
  %s18 = sld [smem:[#allocation0]]
  $region109: #{vivit_forward.2} parent=0
    _
  %s20 = ssub.s32 1, %s18
  %s21 = scalar_select 0, %s20, %s18
  loop: start=0, step=1, limit=4
  $region2: #{vivit_forward.2} parent=0 // loop_pre_header
    _
  $region3: #{vivit_forward.2} parent=0 // loop_header
    %s23 = sphi 0, %s27
    %p24 = scmp.ge.s32.totalorder %s23, 4
    %s30 = sphi 0, %s42
    %s31 = sphi 0, %s38
    %s32 = sphi 0, %s30
    %s33 = sphi 0, %s31
    %s34 = sphi 0, %s32
    %s35 = sphi 0, %s33
    %s45 = sphi 0, %s47
    %s48 = sphi 0, %s45
    %s49 = sphi 0, %s48
    %s65 = sphi 0, %s49
    %s69 = sphi 0, %s69
    %s71 = sphi 0, %s69
    %s72 = sphi 0, %s71
    %s86 = sphi 0, %s72
    %s90 = sphi 0, %s90
    %s92 = sphi 0, %s90
    %s93 = sphi 0, %s92
    %s107 = sphi 0, %s93
    %s113 = sphi 0, %s115
    %s116 = sphi 0, %s113
    %s117 = sphi 0, %s116
    %s133 = sphi 0, %s117
    %s139 = sphi 0, %s141
    %s142 = sphi 0, %s139
    %s143 = sphi 0, %s142
    %s159 = sphi 0, %s143
    %s165 = sphi 0, %s167
    %s168 = sphi 0, %s165
    %s169 = sphi 0, %s168
    %s185 = sphi 0, %s169
    %s191 = sphi 0, %s193
    %s194 = sphi 0, %s191
    %s195 = sphi 0, %s194
    %s211 = sphi 0, %s195
    %s217 = sphi 0, %s219
    %s220 = sphi 0, %s217
    %s221 = sphi 0, %s220
    %s237 = sphi 0, %s221
    %s243 = sphi 0, %s245
    %s246 = sphi 0, %s243
    %s247 = sphi 0, %s246
    %s263 = sphi 0, %s247
    %s269 = sphi 0, %s271
    %s272 = sphi 0, %s269
    %s273 = sphi 0, %s272
    %s289 = sphi 0, %s273
    %s295 = sphi 0, %s297
    %s298 = sphi 0, %s295
    %s299 = sphi 0, %s298
    %s315 = sphi 0, %s299
    %s321 = sphi 0, %s323
    %s324 = sphi 0, %s321
    %s325 = sphi 0, %s324
    %s341 = sphi 0, %s325
    %s347 = sphi 0, %s349
    %s350 = sphi 0, %s347
    %s351 = sphi 0, %s350
    %s367 = sphi 0, %s351
    %s373 = sphi 0, %s375
    %s376 = sphi 0, %s373
    %s377 = sphi 0, %s376
    %s393 = sphi 0, %s377
    %s399 = sphi 0, %s401
    %s402 = sphi 0, %s399
    %s403 = sphi 0, %s402
    %s419 = sphi 0, %s403
    %s423 = sphi 0, %s423
    %s425 = sphi 0, %s423
    %s426 = sphi 0, %s425
    %s440 = sphi 0, %s426
    %s444 = sphi 0, %s444
    %s446 = sphi 0, %s444
    %s447 = sphi 0, %s446
    %s461 = sphi 0, %s447
    %s467 = sphi 0, %s469
    %s470 = sphi 0, %s467
    %s471 = sphi 0, %s470
    %s487 = sphi 0, %s471
  $region4: #{vivit_forward.2} parent=0 // loop_header_branch
    %26 = sbr.rel (%p24) target = $region8
  $region5: #{vivit_forward.2} parent=0 // loop_body
    %s28 = ssub.s32 %s23, 1
    %s29 = ssub.s32 %s23, 2
    %s36 = sadd.s32 1, %s31
    %p37 = scmp.ge.s32.totalorder %s36, 2
    %s38 = scalar_select %p37, 0, %s36
    %s39 = sadd.s32 1, %s30
    %s40 = scalar_select %p37, %s39, %s30
    %p41 = scmp.ge.s32.totalorder %s40, 1
    %s42 = scalar_select %p41, 0, %s40
    %s43 = ssub.s32 %s30, %s42
    %p44 = scmp.eq.s32.totalorder %s43, 0
    %s46 = sadd.s32 %s45, 1
    %s47 = scalar_select %p44, %s45, %s46
    %p50 = pneg %p44
    %p51 = scmp.eq.s32.totalorder %s23, 1
    %p52 = por %p50, %p51
    %p53 = scmp.ne.s32.totalorder %s45, %s48
    %p54 = scmp.eq.s32.totalorder %s23, 0
    %p55 = por %p53, %p54
    %p56 = scmp.ne.s32.totalorder %s45, %s48
    %p57 = scmp.eq.s32.totalorder %s28, 1
    %p58 = por %p56, %p57
    %p59 = scmp.ne.s32.totalorder %s48, %s49
    %p60 = scmp.eq.s32.totalorder %s28, 0
    %p61 = por %p59, %p60
    %p62 = scmp.ne.s32.totalorder %s48, %s49
    %p63 = scmp.eq.s32.totalorder %s29, 1
    %p64 = por %p62, %p63
    %p66 = scmp.ne.s32.totalorder %s49, %s65
    %p67 = scmp.eq.s32.totalorder %s29, 0
    %p68 = por %p66, %p67
    %s70 = sadd.s32 %s69, 1
    %p73 = scmp.eq.s32.totalorder %s23, 1
    %p74 = scmp.ne.s32.totalorder %s69, %s71
    %p75 = scmp.eq.s32.totalorder %s23, 0
    %p76 = por %p74, %p75
    %p77 = scmp.ne.s32.totalorder %s69, %s71
    %p78 = scmp.eq.s32.totalorder %s28, 1
    %p79 = por %p77, %p78
    %p80 = scmp.ne.s32.totalorder %s71, %s72
    %p81 = scmp.eq.s32.totalorder %s28, 0
    %p82 = por %p80, %p81
    %p83 = scmp.ne.s32.totalorder %s71, %s72
    %p84 = scmp.eq.s32.totalorder %s29, 1
    %p85 = por %p83, %p84
    %p87 = scmp.ne.s32.totalorder %s72, %s86
    %p88 = scmp.eq.s32.totalorder %s29, 0
    %p89 = por %p87, %p88
    %s91 = sadd.s32 %s90, 1
    %p94 = scmp.eq.s32.totalorder %s23, 1
    %p95 = scmp.ne.s32.totalorder %s90, %s92
    %p96 = scmp.eq.s32.totalorder %s23, 0
    %p97 = por %p95, %p96
    %p98 = scmp.ne.s32.totalorder %s90, %s92
    %p99 = scmp.eq.s32.totalorder %s28, 1
    %p100 = por %p98, %p99
    %p101 = scmp.ne.s32.totalorder %s92, %s93
    %p102 = scmp.eq.s32.totalorder %s28, 0
    %p103 = por %p101, %p102
    %p104 = scmp.ne.s32.totalorder %s92, %s93
    %p105 = scmp.eq.s32.totalorder %s29, 1
    %p106 = por %p104, %p105
    %p108 = scmp.ne.s32.totalorder %s93, %s107
    %p109 = scmp.eq.s32.totalorder %s29, 0
    %p110 = por %p108, %p109
    %s111 = ssub.s32 %s30, %s42
    %p112 = scmp.eq.s32.totalorder %s111, 0
    %s114 = sadd.s32 %s113, 1
    %s115 = scalar_select %p112, %s113, %s114
    %p118 = pneg %p112
    %p119 = scmp.eq.s32.totalorder %s23, 1
    %p120 = por %p118, %p119
    %p121 = scmp.ne.s32.totalorder %s113, %s116
    %p122 = scmp.eq.s32.totalorder %s23, 0
    %p123 = por %p121, %p122
    %p124 = scmp.ne.s32.totalorder %s113, %s116
    %p125 = scmp.eq.s32.totalorder %s28, 1
    %p126 = por %p124, %p125
    %p127 = scmp.ne.s32.totalorder %s116, %s117
    %p128 = scmp.eq.s32.totalorder %s28, 0
    %p129 = por %p127, %p128
    %p130 = scmp.ne.s32.totalorder %s116, %s117
    %p131 = scmp.eq.s32.totalorder %s29, 1
    %p132 = por %p130, %p131
    %p134 = scmp.ne.s32.totalorder %s117, %s133
    %p135 = scmp.eq.s32.totalorder %s29, 0
    %p136 = por %p134, %p135
    %s137 = ssub.s32 %s31, %s38
    %p138 = scmp.eq.s32.totalorder %s137, 0
    %s140 = sadd.s32 %s139, 1
    %s141 = scalar_select %p138, %s139, %s140
    %p144 = pneg %p138
    %p145 = scmp.eq.s32.totalorder %s23, 1
    %p146 = por %p144, %p145
    %p147 = scmp.ne.s32.totalorder %s139, %s142
    %p148 = scmp.eq.s32.totalorder %s23, 0
    %p149 = por %p147, %p148
    %p150 = scmp.ne.s32.totalorder %s139, %s142
    %p151 = scmp.eq.s32.totalorder %s28, 1
    %p152 = por %p150, %p151
    %p153 = scmp.ne.s32.totalorder %s142, %s143
    %p154 = scmp.eq.s32.totalorder %s28, 0
    %p155 = por %p153, %p154
    %p156 = scmp.ne.s32.totalorder %s142, %s143
    %p157 = scmp.eq.s32.totalorder %s29, 1
    %p158 = por %p156, %p157
    %p160 = scmp.ne.s32.totalorder %s143, %s159
    %p161 = scmp.eq.s32.totalorder %s29, 0
    %p162 = por %p160, %p161
    %s163 = ssub.s32 %s31, %s38
    %p164 = scmp.eq.s32.totalorder %s163, 0
    %s166 = sadd.s32 %s165, 1
    %s167 = scalar_select %p164, %s165, %s166
    %p170 = pneg %p164
    %p171 = scmp.eq.s32.totalorder %s23, 1
    %p172 = por %p170, %p171
    %p173 = scmp.ne.s32.totalorder %s165, %s168
    %p174 = scmp.eq.s32.totalorder %s23, 0
    %p175 = por %p173, %p174
    %p176 = scmp.ne.s32.totalorder %s165, %s168
    %p177 = scmp.eq.s32.totalorder %s28, 1
    %p178 = por %p176, %p177
    %p179 = scmp.ne.s32.totalorder %s168, %s169
    %p180 = scmp.eq.s32.totalorder %s28, 0
    %p181 = por %p179, %p180
    %p182 = scmp.ne.s32.totalorder %s168, %s169
    %p183 = scmp.eq.s32.totalorder %s29, 1
    %p184 = por %p182, %p183
    %p186 = scmp.ne.s32.totalorder %s169, %s185
    %p187 = scmp.eq.s32.totalorder %s29, 0
    %p188 = por %p186, %p187
    %s189 = ssub.s32 %s31, %s38
    %p190 = scmp.eq.s32.totalorder %s189, 0
    %s192 = sadd.s32 %s191, 1
    %s193 = scalar_select %p190, %s191, %s192
    %p196 = pneg %p190
    %p197 = scmp.eq.s32.totalorder %s23, 1
    %p198 = por %p196, %p197
    %p199 = scmp.ne.s32.totalorder %s191, %s194
    %p200 = scmp.eq.s32.totalorder %s23, 0
    %p201 = por %p199, %p200
    %p202 = scmp.ne.s32.totalorder %s191, %s194
    %p203 = scmp.eq.s32.totalorder %s28, 1
    %p204 = por %p202, %p203
    %p205 = scmp.ne.s32.totalorder %s194, %s195
    %p206 = scmp.eq.s32.totalorder %s28, 0
    %p207 = por %p205, %p206
    %p208 = scmp.ne.s32.totalorder %s194, %s195
    %p209 = scmp.eq.s32.totalorder %s29, 1
    %p210 = por %p208, %p209
    %p212 = scmp.ne.s32.totalorder %s195, %s211
    %p213 = scmp.eq.s32.totalorder %s29, 0
    %p214 = por %p212, %p213
    %s215 = ssub.s32 %s31, %s38
    %p216 = scmp.eq.s32.totalorder %s215, 0
    %s218 = sadd.s32 %s217, 1
    %s219 = scalar_select %p216, %s217, %s218
    %p222 = pneg %p216
    %p223 = scmp.eq.s32.totalorder %s23, 1
    %p224 = por %p222, %p223
    %p225 = scmp.ne.s32.totalorder %s217, %s220
    %p226 = scmp.eq.s32.totalorder %s23, 0
    %p227 = por %p225, %p226
    %p228 = scmp.ne.s32.totalorder %s217, %s220
    %p229 = scmp.eq.s32.totalorder %s28, 1
    %p230 = por %p228, %p229
    %p231 = scmp.ne.s32.totalorder %s220, %s221
    %p232 = scmp.eq.s32.totalorder %s28, 0
    %p233 = por %p231, %p232
    %p234 = scmp.ne.s32.totalorder %s220, %s221
    %p235 = scmp.eq.s32.totalorder %s29, 1
    %p236 = por %p234, %p235
    %p238 = scmp.ne.s32.totalorder %s221, %s237
    %p239 = scmp.eq.s32.totalorder %s29, 0
    %p240 = por %p238, %p239
    %s241 = ssub.s32 %s31, %s38
    %p242 = scmp.eq.s32.totalorder %s241, 0
    %s244 = sadd.s32 %s243, 1
    %s245 = scalar_select %p242, %s243, %s244
    %p248 = pneg %p242
    %p249 = scmp.eq.s32.totalorder %s23, 1
    %p250 = por %p248, %p249
    %p251 = scmp.ne.s32.totalorder %s243, %s246
    %p252 = scmp.eq.s32.totalorder %s23, 0
    %p253 = por %p251, %p252
    %p254 = scmp.ne.s32.totalorder %s243, %s246
    %p255 = scmp.eq.s32.totalorder %s28, 1
    %p256 = por %p254, %p255
    %p257 = scmp.ne.s32.totalorder %s246, %s247
    %p258 = scmp.eq.s32.totalorder %s28, 0
    %p259 = por %p257, %p258
    %p260 = scmp.ne.s32.totalorder %s246, %s247
    %p261 = scmp.eq.s32.totalorder %s29, 1
    %p262 = por %p260, %p261
    %p264 = scmp.ne.s32.totalorder %s247, %s263
    %p265 = scmp.eq.s32.totalorder %s29, 0
    %p266 = por %p264, %p265
    %s267 = ssub.s32 %s31, %s38
    %p268 = scmp.eq.s32.totalorder %s267, 0
    %s270 = sadd.s32 %s269, 1
    %s271 = scalar_select %p268, %s269, %s270
    %p274 = pneg %p268
    %p275 = scmp.eq.s32.totalorder %s23, 1
    %p276 = por %p274, %p275
    %p277 = scmp.ne.s32.totalorder %s269, %s272
    %p278 = scmp.eq.s32.totalorder %s23, 0
    %p279 = por %p277, %p278
    %p280 = scmp.ne.s32.totalorder %s269, %s272
    %p281 = scmp.eq.s32.totalorder %s28, 1
    %p282 = por %p280, %p281
    %p283 = scmp.ne.s32.totalorder %s272, %s273
    %p284 = scmp.eq.s32.totalorder %s28, 0
    %p285 = por %p283, %p284
    %p286 = scmp.ne.s32.totalorder %s272, %s273
    %p287 = scmp.eq.s32.totalorder %s29, 1
    %p288 = por %p286, %p287
    %p290 = scmp.ne.s32.totalorder %s273, %s289
    %p291 = scmp.eq.s32.totalorder %s29, 0
    %p292 = por %p290, %p291
    %s293 = ssub.s32 %s31, %s38
    %p294 = scmp.eq.s32.totalorder %s293, 0
    %s296 = sadd.s32 %s295, 1
    %s297 = scalar_select %p294, %s295, %s296
    %p300 = pneg %p294
    %p301 = scmp.eq.s32.totalorder %s23, 1
    %p302 = por %p300, %p301
    %p303 = scmp.ne.s32.totalorder %s295, %s298
    %p304 = scmp.eq.s32.totalorder %s23, 0
    %p305 = por %p303, %p304
    %p306 = scmp.ne.s32.totalorder %s295, %s298
    %p307 = scmp.eq.s32.totalorder %s28, 1
    %p308 = por %p306, %p307
    %p309 = scmp.ne.s32.totalorder %s298, %s299
    %p310 = scmp.eq.s32.totalorder %s28, 0
    %p311 = por %p309, %p310
    %p312 = scmp.ne.s32.totalorder %s298, %s299
    %p313 = scmp.eq.s32.totalorder %s29, 1
    %p314 = por %p312, %p313
    %p316 = scmp.ne.s32.totalorder %s299, %s315
    %p317 = scmp.eq.s32.totalorder %s29, 0
    %p318 = por %p316, %p317
    %s319 = ssub.s32 %s31, %s38
    %p320 = scmp.eq.s32.totalorder %s319, 0
    %s322 = sadd.s32 %s321, 1
    %s323 = scalar_select %p320, %s321, %s322
    %p326 = pneg %p320
    %p327 = scmp.eq.s32.totalorder %s23, 1
    %p328 = por %p326, %p327
    %p329 = scmp.ne.s32.totalorder %s321, %s324
    %p330 = scmp.eq.s32.totalorder %s23, 0
    %p331 = por %p329, %p330
    %p332 = scmp.ne.s32.totalorder %s321, %s324
    %p333 = scmp.eq.s32.totalorder %s28, 1
    %p334 = por %p332, %p333
    %p335 = scmp.ne.s32.totalorder %s324, %s325
    %p336 = scmp.eq.s32.totalorder %s28, 0
    %p337 = por %p335, %p336
    %p338 = scmp.ne.s32.totalorder %s324, %s325
    %p339 = scmp.eq.s32.totalorder %s29, 1
    %p340 = por %p338, %p339
    %p342 = scmp.ne.s32.totalorder %s325, %s341
    %p343 = scmp.eq.s32.totalorder %s29, 0
    %p344 = por %p342, %p343
    %s345 = ssub.s32 %s31, %s38
    %p346 = scmp.eq.s32.totalorder %s345, 0
    %s348 = sadd.s32 %s347, 1
    %s349 = scalar_select %p346, %s347, %s348
    %p352 = pneg %p346
    %p353 = scmp.eq.s32.totalorder %s23, 1
    %p354 = por %p352, %p353
    %p355 = scmp.ne.s32.totalorder %s347, %s350
    %p356 = scmp.eq.s32.totalorder %s23, 0
    %p357 = por %p355, %p356
    %p358 = scmp.ne.s32.totalorder %s347, %s350
    %p359 = scmp.eq.s32.totalorder %s28, 1
    %p360 = por %p358, %p359
    %p361 = scmp.ne.s32.totalorder %s350, %s351
    %p362 = scmp.eq.s32.totalorder %s28, 0
    %p363 = por %p361, %p362
    %p364 = scmp.ne.s32.totalorder %s350, %s351
    %p365 = scmp.eq.s32.totalorder %s29, 1
    %p366 = por %p364, %p365
    %p368 = scmp.ne.s32.totalorder %s351, %s367
    %p369 = scmp.eq.s32.totalorder %s29, 0
    %p370 = por %p368, %p369
    %s371 = ssub.s32 %s31, %s38
    %p372 = scmp.eq.s32.totalorder %s371, 0
    %s374 = sadd.s32 %s373, 1
    %s375 = scalar_select %p372, %s373, %s374
    %p378 = pneg %p372
    %p379 = scmp.eq.s32.totalorder %s23, 1
    %p380 = por %p378, %p379
    %p381 = scmp.ne.s32.totalorder %s373, %s376
    %p382 = scmp.eq.s32.totalorder %s23, 0
    %p383 = por %p381, %p382
    %p384 = scmp.ne.s32.totalorder %s373, %s376
    %p385 = scmp.eq.s32.totalorder %s28, 1
    %p386 = por %p384, %p385
    %p387 = scmp.ne.s32.totalorder %s376, %s377
    %p388 = scmp.eq.s32.totalorder %s28, 0
    %p389 = por %p387, %p388
    %p390 = scmp.ne.s32.totalorder %s376, %s377
    %p391 = scmp.eq.s32.totalorder %s29, 1
    %p392 = por %p390, %p391
    %p394 = scmp.ne.s32.totalorder %s377, %s393
    %p395 = scmp.eq.s32.totalorder %s29, 0
    %p396 = por %p394, %p395
    %s397 = ssub.s32 %s31, %s38
    %p398 = scmp.eq.s32.totalorder %s397, 0
    %s400 = sadd.s32 %s399, 1
    %s401 = scalar_select %p398, %s399, %s400
    %p404 = pneg %p398
    %p405 = scmp.eq.s32.totalorder %s23, 1
    %p406 = por %p404, %p405
    %p407 = scmp.ne.s32.totalorder %s399, %s402
    %p408 = scmp.eq.s32.totalorder %s23, 0
    %p409 = por %p407, %p408
    %p410 = scmp.ne.s32.totalorder %s399, %s402
    %p411 = scmp.eq.s32.totalorder %s28, 1
    %p412 = por %p410, %p411
    %p413 = scmp.ne.s32.totalorder %s402, %s403
    %p414 = scmp.eq.s32.totalorder %s28, 0
    %p415 = por %p413, %p414
    %p416 = scmp.ne.s32.totalorder %s402, %s403
    %p417 = scmp.eq.s32.totalorder %s29, 1
    %p418 = por %p416, %p417
    %p420 = scmp.ne.s32.totalorder %s403, %s419
    %p421 = scmp.eq.s32.totalorder %s29, 0
    %p422 = por %p420, %p421
    %s424 = sadd.s32 %s423, 1
    %p427 = scmp.eq.s32.totalorder %s23, 1
    %p428 = scmp.ne.s32.totalorder %s423, %s425
    %p429 = scmp.eq.s32.totalorder %s23, 0
    %p430 = por %p428, %p429
    %p431 = scmp.ne.s32.totalorder %s423, %s425
    %p432 = scmp.eq.s32.totalorder %s28, 1
    %p433 = por %p431, %p432
    %p434 = scmp.ne.s32.totalorder %s425, %s426
    %p435 = scmp.eq.s32.totalorder %s28, 0
    %p436 = por %p434, %p435
    %p437 = scmp.ne.s32.totalorder %s425, %s426
    %p438 = scmp.eq.s32.totalorder %s29, 1
    %p439 = por %p437, %p438
    %p441 = scmp.ne.s32.totalorder %s426, %s440
    %p442 = scmp.eq.s32.totalorder %s29, 0
    %p443 = por %p441, %p442
    %s445 = sadd.s32 %s444, 1
    %p448 = scmp.eq.s32.totalorder %s23, 1
    %p449 = scmp.ne.s32.totalorder %s444, %s446
    %p450 = scmp.eq.s32.totalorder %s23, 0
    %p451 = por %p449, %p450
    %p452 = scmp.ne.s32.totalorder %s444, %s446
    %p453 = scmp.eq.s32.totalorder %s28, 1
    %p454 = por %p452, %p453
    %p455 = scmp.ne.s32.totalorder %s446, %s447
    %p456 = scmp.eq.s32.totalorder %s28, 0
    %p457 = por %p455, %p456
    %p458 = scmp.ne.s32.totalorder %s446, %s447
    %p459 = scmp.eq.s32.totalorder %s29, 1
    %p460 = por %p458, %p459
    %p462 = scmp.ne.s32.totalorder %s447, %s461
    %p463 = scmp.eq.s32.totalorder %s29, 0
    %p464 = por %p462, %p463
    %s465 = ssub.s32 %s30, %s42
    %p466 = scmp.eq.s32.totalorder %s465, 0
    %s468 = sadd.s32 %s467, 1
    %s469 = scalar_select %p466, %s467, %s468
    %p472 = pneg %p466
    %p473 = scmp.eq.s32.totalorder %s23, 1
    %p474 = por %p472, %p473
    %p475 = scmp.ne.s32.totalorder %s467, %s470
    %p476 = scmp.eq.s32.totalorder %s23, 0
    %p477 = por %p475, %p476
    %p478 = scmp.ne.s32.totalorder %s467, %s470
    %p479 = scmp.eq.s32.totalorder %s28, 1
    %p480 = por %p478, %p479
    %p481 = scmp.ne.s32.totalorder %s470, %s471
    %p482 = scmp.eq.s32.totalorder %s28, 0
    %p483 = por %p481, %p482
    %p484 = scmp.ne.s32.totalorder %s470, %s471
    %p485 = scmp.eq.s32.totalorder %s29, 1
    %p486 = por %p484, %p485
    %p488 = scmp.ne.s32.totalorder %s471, %s487
    %p489 = scmp.eq.s32.totalorder %s29, 0
    %p490 = por %p488, %p489
    %p491 = scmp.le.s32.totalorder 1, %s23
    %p492 = scmp.lt.s32.totalorder %s23, 3
    %p493 = pnand %p491, %p492
    %p494 = pneg %p493
    // Predicated region
    $region9: #{vivit_forward.2} parent=5 // pred_check
      _
    $region10: #{vivit_forward.2} parent=5 // pred_check_branch
      %496 = sbr.rel (%p493) target = $region12
    $region11: #{vivit_forward.2} parent=5 // pred_region
      %s497 = ssub.s32 %s23, 1
      // Predicated region
      $region13: #{vivit_forward.2} parent=11 // pred_check
        %p498 = pneg %p61
      $region14: #{vivit_forward.2} parent=11 // pred_check_branch
        %500 = sbr.rel (%p498) target = $region16
      $region15: #{vivit_forward.2} parent=11 // pred_region
        %s501 = smul.u32 4, %s32
        %p502 = scmp.lt.s32.totalorder %s501, 3
        %s503 = scalar_select %p502, %s501, 3
        %s504 = smul.addr %s503, 2
        %s505 = smul.addr %s504, 8
        %s506 = scalar_lea.vmem %s0, %s505
        %s507 = smul.u32 4, %s32
      $region16: #{vivit_forward.2} parent=11 // pred_fallthru
        _
      // Predicated region
      $region17: #{vivit_forward.2} parent=11 // pred_check
        %p508 = pneg %p82
      $region18: #{vivit_forward.2} parent=11 // pred_check_branch
        %510 = sbr.rel (%p508) target = $region20
      $region19: #{vivit_forward.2} parent=11 // pred_region
        _
      $region20: #{vivit_forward.2} parent=11 // pred_fallthru
        _
      // Predicated region
      $region21: #{vivit_forward.2} parent=11 // pred_check
        %p511 = pneg %p103
      $region22: #{vivit_forward.2} parent=11 // pred_check_branch
        %513 = sbr.rel (%p511) target = $region24
      $region23: #{vivit_forward.2} parent=11 // pred_region
        _
      $region24: #{vivit_forward.2} parent=11 // pred_fallthru
        _
      // Predicated region
      $region25: #{vivit_forward.2} parent=11 // pred_check
        %p514 = pneg %p129
      $region26: #{vivit_forward.2} parent=11 // pred_check_branch
        %516 = sbr.rel (%p514) target = $region28
      $region27: #{vivit_forward.2} parent=11 // pred_region
        %s517 = smul.u32 4, %s32
        %p518 = scmp.lt.s32.totalorder %s517, 3
        %s519 = scalar_select %p518, %s517, 3
        %s520 = smul.addr %s519, 8
        %s521 = scalar_lea.vmem %s3, %s520
        %s522 = smul.u32 4, %s32
      $region28: #{vivit_forward.2} parent=11 // pred_fallthru
        _
      // Predicated region
      $region29: #{vivit_forward.2} parent=11 // pred_check
        %p523 = pneg %p436
      $region30: #{vivit_forward.2} parent=11 // pred_check_branch
        %525 = sbr.rel (%p523) target = $region32
      $region31: #{vivit_forward.2} parent=11 // pred_region
        _
      $region32: #{vivit_forward.2} parent=11 // pred_fallthru
        _
      // Predicated region
      $region33: #{vivit_forward.2} parent=11 // pred_check
        %p526 = pneg %p457
      $region34: #{vivit_forward.2} parent=11 // pred_check_branch
        %528 = sbr.rel (%p526) target = $region36
      $region35: #{vivit_forward.2} parent=11 // pred_region
        _
      $region36: #{vivit_forward.2} parent=11 // pred_fallthru
        _
    $region12: #{vivit_forward.2} parent=5 // pred_fallthru
      _
    %p529 = scmp.lt.s32.totalorder %s23, 2
    // Predicated region
    $region37: #{vivit_forward.2} parent=5 // pred_check
      %p530 = pneg %p529
    $region38: #{vivit_forward.2} parent=5 // pred_check_branch
      %532 = sbr.rel (%p530) target = $region40
    $region39: #{vivit_forward.2} parent=5 // pred_region
      // Predicated region
      $region41: #{vivit_forward.2} parent=39 // pred_check
        %p533 = pneg %p149
      $region42: #{vivit_forward.2} parent=39 // pred_check_branch
        %535 = sbr.rel (%p533) target = $region44
      $region43: #{vivit_forward.2} parent=39 // pred_region
        %p536 = scmp.lt.s32.totalorder %s31, 1
        %s537 = scalar_select %p536, %s31, 1
        %s538 = scalar_lea.vmem %s4, %s537
      $region44: #{vivit_forward.2} parent=39 // pred_fallthru
        _
      // Predicated region
      $region45: #{vivit_forward.2} parent=39 // pred_check
        %p539 = pneg %p175
      $region46: #{vivit_forward.2} parent=39 // pred_check_branch
        %541 = sbr.rel (%p539) target = $region48
      $region47: #{vivit_forward.2} parent=39 // pred_region
        %p542 = scmp.lt.s32.totalorder %s31, 1
        %s543 = scalar_select %p542, %s31, 1
        %s544 = scalar_lea.vmem %s5, %s543
      $region48: #{vivit_forward.2} parent=39 // pred_fallthru
        _
      // Predicated region
      $region49: #{vivit_forward.2} parent=39 // pred_check
        %p545 = pneg %p201
      $region50: #{vivit_forward.2} parent=39 // pred_check_branch
        %547 = sbr.rel (%p545) target = $region52
      $region51: #{vivit_forward.2} parent=39 // pred_region
        %p548 = scmp.lt.s32.totalorder %s31, 1
        %s549 = scalar_select %p548, %s31, 1
        %s550 = smul.addr %s549, 4
        %s551 = smul.addr %s550, 4
        %s552 = scalar_lea.vmem %s6, %s551
      $region52: #{vivit_forward.2} parent=39 // pred_fallthru
        _
      // Predicated region
      $region53: #{vivit_forward.2} parent=39 // pred_check
        %p553 = pneg %p227
      $region54: #{vivit_forward.2} parent=39 // pred_check_branch
        %555 = sbr.rel (%p553) target = $region56
      $region55: #{vivit_forward.2} parent=39 // pred_region
        %p556 = scmp.lt.s32.totalorder %s31, 1
        %s557 = scalar_select %p556, %s31, 1
        %s558 = smul.addr %s557, 4
        %s559 = smul.addr %s558, 4
        %s560 = scalar_lea.vmem %s7, %s559
      $region56: #{vivit_forward.2} parent=39 // pred_fallthru
        _
      // Predicated region
      $region57: #{vivit_forward.2} parent=39 // pred_check
        %p561 = pneg %p253
      $region58: #{vivit_forward.2} parent=39 // pred_check_branch
        %563 = sbr.rel (%p561) target = $region60
      $region59: #{vivit_forward.2} parent=39 // pred_region
        %p564 = scmp.lt.s32.totalorder %s31, 1
        %s565 = scalar_select %p564, %s31, 1
        %s566 = scalar_lea.vmem %s8, %s565
      $region60: #{vivit_forward.2} parent=39 // pred_fallthru
        _
      // Predicated region
      $region61: #{vivit_forward.2} parent=39 // pred_check
        %p567 = pneg %p279
      $region62: #{vivit_forward.2} parent=39 // pred_check_branch
        %569 = sbr.rel (%p567) target = $region64
      $region63: #{vivit_forward.2} parent=39 // pred_region
        %p570 = scmp.lt.s32.totalorder %s31, 1
        %s571 = scalar_select %p570, %s31, 1
        %s572 = scalar_lea.vmem %s9, %s571
      $region64: #{vivit_forward.2} parent=39 // pred_fallthru
        _
      // Predicated region
      $region65: #{vivit_forward.2} parent=39 // pred_check
        %p573 = pneg %p305
      $region66: #{vivit_forward.2} parent=39 // pred_check_branch
        %575 = sbr.rel (%p573) target = $region68
      $region67: #{vivit_forward.2} parent=39 // pred_region
        %p576 = scmp.lt.s32.totalorder %s31, 1
        %s577 = scalar_select %p576, %s31, 1
        %s578 = scalar_lea.vmem %s10, %s577
      $region68: #{vivit_forward.2} parent=39 // pred_fallthru
        _
      // Predicated region
      $region69: #{vivit_forward.2} parent=39 // pred_check
        %p579 = pneg %p331
      $region70: #{vivit_forward.2} parent=39 // pred_check_branch
        %581 = sbr.rel (%p579) target = $region72
      $region71: #{vivit_forward.2} parent=39 // pred_region
        %p582 = scmp.lt.s32.totalorder %s31, 1
        %s583 = scalar_select %p582, %s31, 1
        %s584 = smul.addr %s583, 4
        %s585 = smul.addr %s584, 4
        %s586 = scalar_lea.vmem %s11, %s585
      $region72: #{vivit_forward.2} parent=39 // pred_fallthru
        _
      // Predicated region
      $region73: #{vivit_forward.2} parent=39 // pred_check
        %p587 = pneg %p357
      $region74: #{vivit_forward.2} parent=39 // pred_check_branch
        %589 = sbr.rel (%p587) target = $region76
      $region75: #{vivit_forward.2} parent=39 // pred_region
        %p590 = scmp.lt.s32.totalorder %s31, 1
        %s591 = scalar_select %p590, %s31, 1
        %s592 = scalar_lea.vmem %s12, %s591
      $region76: #{vivit_forward.2} parent=39 // pred_fallthru
        _
      // Predicated region
      $region77: #{vivit_forward.2} parent=39 // pred_check
        %p593 = pneg %p383
      $region78: #{vivit_forward.2} parent=39 // pred_check_branch
        %595 = sbr.rel (%p593) target = $region80
      $region79: #{vivit_forward.2} parent=39 // pred_region
        %p596 = scmp.lt.s32.totalorder %s31, 1
        %s597 = scalar_select %p596, %s31, 1
        %s598 = smul.addr %s597, 16
        %s599 = smul.addr %s598, 4
        %s600 = scalar_lea.vmem %s13, %s599
      $region80: #{vivit_forward.2} parent=39 // pred_fallthru
        _
      // Predicated region
      $region81: #{vivit_forward.2} parent=39 // pred_check
        %p601 = pneg %p409
      $region82: #{vivit_forward.2} parent=39 // pred_check_branch
        %603 = sbr.rel (%p601) target = $region84
      $region83: #{vivit_forward.2} parent=39 // pred_region
        %p604 = scmp.lt.s32.totalorder %s31, 1
        %s605 = scalar_select %p604, %s31, 1
        %s606 = scalar_lea.vmem %s14, %s605
      $region84: #{vivit_forward.2} parent=39 // pred_fallthru
        _
    $region40: #{vivit_forward.2} parent=5 // pred_fallthru
      _
    %p607 = scmp.le.s32.totalorder 1, %s23
    %p608 = scmp.lt.s32.totalorder %s23, 3
    %p609 = pnand %p607, %p608
    %p610 = pneg %p609
    // Predicated region
    $region85: #{vivit_forward.2} parent=5 // pred_check
      _
    $region86: #{vivit_forward.2} parent=5 // pred_check_branch
      %612 = sbr.rel (%p609) target = $region88
    $region87: #{vivit_forward.2} parent=5 // pred_region
      %s613 = ssub.s32 %s23, 1
      %s614 = smul.u32 4, %s32
      %p615 = scmp.lt.s32.totalorder %s614, 3
      %s616 = scalar_select %p615, %s614, 3
      %s617 = smul.addr %s616, 2
      %s618 = smul.addr %s617, 8
      %s619 = scalar_lea.vmem %s0, %s618
      %p620 = pneg %p61
      %p621 = pneg %p58
      %p622 = pneg %p82
      %p623 = pneg %p79
      %p624 = pneg %p103
      %p625 = pneg %p100
      %s626 = smul.u32 4, %s32
      %p627 = scmp.lt.s32.totalorder %s626, 3
      %s628 = scalar_select %p627, %s626, 3
      %s629 = smul.addr %s628, 8
      %s630 = scalar_lea.vmem %s3, %s629
      %p631 = pneg %p129
      %p632 = pneg %p126
      %p633 = scmp.lt.s32.totalorder %s33, 1
      %s634 = scalar_select %p633, %s33, 1
      %s635 = scalar_lea.vmem %s4, %s634
      %p636 = pneg %p155
      %p637 = pneg %p152
      %p638 = scmp.lt.s32.totalorder %s33, 1
      %s639 = scalar_select %p638, %s33, 1
      %s640 = scalar_lea.vmem %s5, %s639
      %p641 = pneg %p181
      %p642 = pneg %p178
      %p643 = scmp.lt.s32.totalorder %s33, 1
      %s644 = scalar_select %p643, %s33, 1
      %s645 = smul.addr %s644, 4
      %s646 = smul.addr %s645, 4
      %s647 = scalar_lea.vmem %s6, %s646
      %p648 = pneg %p207
      %p649 = pneg %p204
      %p650 = scmp.lt.s32.totalorder %s33, 1
      %s651 = scalar_select %p650, %s33, 1
      %s652 = smul.addr %s651, 4
      %s653 = smul.addr %s652, 4
      %s654 = scalar_lea.vmem %s7, %s653
      %p655 = pneg %p233
      %p656 = pneg %p230
      %p657 = scmp.lt.s32.totalorder %s33, 1
      %s658 = scalar_select %p657, %s33, 1
      %s659 = scalar_lea.vmem %s8, %s658
      %p660 = pneg %p259
      %p661 = pneg %p256
      %p662 = scmp.lt.s32.totalorder %s33, 1
      %s663 = scalar_select %p662, %s33, 1
      %s664 = scalar_lea.vmem %s9, %s663
      %p665 = pneg %p285
      %p666 = pneg %p282
      %p667 = scmp.lt.s32.totalorder %s33, 1
      %s668 = scalar_select %p667, %s33, 1
      %s669 = scalar_lea.vmem %s10, %s668
      %p670 = pneg %p311
      %p671 = pneg %p308
      %p672 = scmp.lt.s32.totalorder %s33, 1
      %s673 = scalar_select %p672, %s33, 1
      %s674 = smul.addr %s673, 4
      %s675 = smul.addr %s674, 4
      %s676 = scalar_lea.vmem %s11, %s675
      %p677 = pneg %p337
      %p678 = pneg %p334
      %p679 = scmp.lt.s32.totalorder %s33, 1
      %s680 = scalar_select %p679, %s33, 1
      %s681 = scalar_lea.vmem %s12, %s680
      %p682 = pneg %p363
      %p683 = pneg %p360
      %p684 = scmp.lt.s32.totalorder %s33, 1
      %s685 = scalar_select %p684, %s33, 1
      %s686 = smul.addr %s685, 16
      %s687 = smul.addr %s686, 4
      %s688 = scalar_lea.vmem %s13, %s687
      %p689 = pneg %p389
      %p690 = pneg %p386
      %p691 = scmp.lt.s32.totalorder %s33, 1
      %s692 = scalar_select %p691, %s33, 1
      %s693 = scalar_lea.vmem %s14, %s692
      %p694 = pneg %p415
      %p695 = pneg %p412
      %p696 = pneg %p436
      %p697 = pneg %p433
      %p698 = pneg %p457
      %p699 = pneg %p454
      %p700 = pneg %p483
      %p701 = pneg %p480
      %p702 = scmp.lt.s32.totalorder %s32, 0
      %s703 = scalar_select %p702, %s32, 0
      %s704 = smul.addr %s703, 8
      %s705 = scalar_lea.vmem %s17, %s704
      %s706 = smul.u32 4, %s32
      %p707 = scmp.lt.s32.totalorder %s706, 3
      %s708 = scalar_select %p707, %s706, 3
      %s709 = smul.addr %s708, 2
      %s710 = smul.addr %s709, 8
      %s711 = scalar_lea.vmem %s0, %s710
      %s712 = smul.u32 4, %s32
      %s713 = smul.u32 4, %s32
      %p714 = scmp.lt.s32.totalorder %s713, 3
      %s715 = scalar_select %p714, %s713, 3
      %s716 = smul.addr %s715, 8
      %s717 = scalar_lea.vmem %s3, %s716
      %s718 = smul.u32 4, %s32
      %p719 = scmp.lt.s32.totalorder %s33, 1
      %s720 = scalar_select %p719, %s33, 1
      %s721 = scalar_lea.vmem %s4, %s720
      %p722 = scmp.lt.s32.totalorder %s33, 1
      %s723 = scalar_select %p722, %s33, 1
      %s724 = scalar_lea.vmem %s5, %s723
      %p725 = scmp.lt.s32.totalorder %s33, 1
      %s726 = scalar_select %p725, %s33, 1
      %s727 = smul.addr %s726, 4
      %s728 = smul.addr %s727, 4
      %s729 = scalar_lea.vmem %s6, %s728
      %p730 = scmp.lt.s32.totalorder %s33, 1
      %s731 = scalar_select %p730, %s33, 1
      %s732 = smul.addr %s731, 4
      %s733 = smul.addr %s732, 4
      %s734 = scalar_lea.vmem %s7, %s733
      %p735 = scmp.lt.s32.totalorder %s33, 1
      %s736 = scalar_select %p735, %s33, 1
      %s737 = scalar_lea.vmem %s8, %s736
      %p738 = scmp.lt.s32.totalorder %s33, 1
      %s739 = scalar_select %p738, %s33, 1
      %s740 = scalar_lea.vmem %s9, %s739
      %p741 = scmp.lt.s32.totalorder %s33, 1
      %s742 = scalar_select %p741, %s33, 1
      %s743 = scalar_lea.vmem %s10, %s742
      %p744 = scmp.lt.s32.totalorder %s33, 1
      %s745 = scalar_select %p744, %s33, 1
      %s746 = smul.addr %s745, 4
      %s747 = smul.addr %s746, 4
      %s748 = scalar_lea.vmem %s11, %s747
      %p749 = scmp.lt.s32.totalorder %s33, 1
      %s750 = scalar_select %p749, %s33, 1
      %s751 = scalar_lea.vmem %s12, %s750
      %p752 = scmp.lt.s32.totalorder %s33, 1
      %s753 = scalar_select %p752, %s33, 1
      %s754 = smul.addr %s753, 16
      %s755 = smul.addr %s754, 4
      %s756 = scalar_lea.vmem %s13, %s755
      %p757 = scmp.lt.s32.totalorder %s33, 1
      %s758 = scalar_select %p757, %s33, 1
      %s759 = scalar_lea.vmem %s14, %s758
      %p760 = scmp.lt.s32.totalorder %s32, 0
      %s761 = scalar_select %p760, %s32, 0
      %s762 = smul.addr %s761, 8
      %s763 = scalar_lea.vmem %s17, %s762
      %p765 = scmp.eq.s32.totalorder %s33, 0
      // Predicated region
      $region89: #{vivit_forward.2} parent=87 // pred_check
        %p766 = pneg %p765
      $region90: #{vivit_forward.2} parent=87 // pred_check_branch
        %768 = sbr.rel (%p766) target = $region92
      $region91: #{vivit_forward.2} parent=87 // pred_region
        %v769 = vld [vmem:[%s711] sm:$0xff]
        %v770 = vld [vmem:[%s711 + $0x8] sm:$0xff]
        %v771 = vld [vmem:[%s711 + $0x10] sm:$0xff]
        %v772 = vld [vmem:[%s711 + $0x18] sm:$0xff]
        %v773 = vld [vmem:[%s711 + $0x20] sm:$0xff]
        %v774 = vld [vmem:[%s711 + $0x28] sm:$0xff]
        %v775 = vld [vmem:[%s711 + $0x30] sm:$0xff]
        %v776 = vld [vmem:[%s711 + $0x38] sm:$0xff]
        %v777 = vpack.c.bf16 %v771, %v769
        %v778 = vpack.c.bf16 %v772, %v770
        %v779 = vpack.c.bf16 %v775, %v773
        %v780 = vpack.c.bf16 %v776, %v774
        %v781 = vld [vmem:[%s1] sm:$0xf]
        %v782 = vld [vmem:[%s1 + $0x4] sm:$0xf]
        %v783 = vld [vmem:[%s1 + $0x8] sm:$0xf]
        %v784 = vld [vmem:[%s1 + $0xc] sm:$0xf]
        %v785 = vld [vmem:[%s1 + $0x10] sm:$0xf]
        %v786 = vld [vmem:[%s1 + $0x14] sm:$0xf]
        %v787 = vld [vmem:[%s1 + $0x18] sm:$0xf]
        %v788 = vld [vmem:[%s1 + $0x1c] sm:$0xf]
        %v789 = vld [vmem:[%s1 + $0x20] sm:$0xf]
        %v790 = vld [vmem:[%s1 + $0x24] sm:$0xf]
        %v791 = vld [vmem:[%s1 + $0x28] sm:$0xf]
        %v792 = vld [vmem:[%s1 + $0x2c] sm:$0xf]
        %v793 = vld [vmem:[%s1 + $0x30] sm:$0xf]
        %v794 = vld [vmem:[%s1 + $0x34] sm:$0xf]
        %v795 = vld [vmem:[%s1 + $0x38] sm:$0xf]
        %v796 = vld [vmem:[%s1 + $0x3c] sm:$0xf]
        %v797 = vld [vmem:[%s1 + $0x40] sm:$0xf]
        %v798 = vld [vmem:[%s1 + $0x44] sm:$0xf]
        %v799 = vld [vmem:[%s1 + $0x48] sm:$0xf]
        %v800 = vld [vmem:[%s1 + $0x4c] sm:$0xf]
        %v801 = vld [vmem:[%s1 + $0x50] sm:$0xf]
        %v802 = vld [vmem:[%s1 + $0x54] sm:$0xf]
        %v803 = vld [vmem:[%s1 + $0x58] sm:$0xf]
        %v804 = vld [vmem:[%s1 + $0x5c] sm:$0xf]
        %v805 = vld [vmem:[%s2] sm:$0x1]
        %v807 = vlaneseq
        %v808 = vshrl.u32 %v807, 7
        %v809 = vsub.s32 0, %v808
        %v810 = vrot.slane %v805, %v809
        %v836 = vunpack.c.l.b16 %v781
        %v837 = vunpack.c.l.b16 %v782
        %v838 = vunpack.c.l.b16 %v783
        %v839 = vunpack.c.l.b16 %v784
        %v840 = vunpack.c.l.b16 %v785
        %v841 = vunpack.c.l.b16 %v786
        %v842 = vunpack.c.l.b16 %v787
        %v843 = vunpack.c.l.b16 %v788
        %v844 = vunpack.c.l.b16 %v789
        %v845 = vunpack.c.l.b16 %v790
        %v846 = vunpack.c.l.b16 %v791
        %v847 = vunpack.c.l.b16 %v792
        %v848 = vunpack.c.l.b16 %v793
        %v849 = vunpack.c.l.b16 %v794
        %v850 = vunpack.c.l.b16 %v795
        %v851 = vunpack.c.l.b16 %v796
        %v852 = vunpack.c.l.b16 %v797
        %v853 = vunpack.c.l.b16 %v798
        %v854 = vunpack.c.l.b16 %v799
        %v855 = vunpack.c.l.b16 %v800
        %v856 = vunpack.c.l.b16 %v801
        %v857 = vunpack.c.l.b16 %v802
        %v858 = vunpack.c.l.b16 %v803
        %v859 = vunpack.c.l.b16 %v804
        %v860 = vpack.c.b16 %v837, %v836
        %v861 = vpack.c.b16 %v839, %v838
        %v862 = vpack.c.b16 %v841, %v840
        %v863 = vpack.c.b16 %v843, %v842
        %v864 = vpack.c.b16 %v845, %v844
        %v865 = vpack.c.b16 %v847, %v846
        %v866 = vpack.c.b16 %v849, %v848
        %v867 = vpack.c.b16 %v851, %v850
        %v868 = vpack.c.b16 %v853, %v852
        %v869 = vpack.c.b16 %v855, %v854
        %v870 = vpack.c.b16 %v857, %v856
        %v871 = vpack.c.b16 %v859, %v858
        %vm884 = vcmask 523264
        %v886 = vsel %vm884, %v778, 0
        %v889 = vsel %vm884, %v780, 0
        %891 = vmatprep.subr.bf16.mxu0 0
        %892 = vmatpush1.bf16.msra.mxu0 %v867
        %893 = vmatprep.subr.bf16.mxu0 0
        %894 = vmatpush1.bf16.msra.mxu0 %v866
        %895 = vmatprep.subr.bf16.mxu0 0
        %896 = vmatpush1.bf16.msra.mxu0 %v865
        %897 = vmatprep.subr.bf16.mxu0 0
        %898 = vmatpush1.bf16.msra.mxu0 %v864
        %899 = vmatprep.subr.bf16.mxu0 0
        %900 = vmatpush1.bf16.msra.mxu0 %v863
        %901 = vmatprep.subr.bf16.mxu0 0
        %902 = vmatpush1.bf16.msra.mxu0 %v862
        %903 = vmatprep.subr.bf16.mxu0 0
        %904 = vmatpush1.bf16.msra.mxu0 %v861
        %905 = vmatprep.subr.bf16.mxu0 0
        %906 = vmatpush1.bf16.msra.mxu0 %v860
        %907 = vmatprep.subr.bf16.mxu0 0
        %908 = vmatpush2.bf16.msra.mxu0 0
        %909 = vmatprep.subr.bf16.mxu0 0
        %910 = vmatpush2.bf16.msra.mxu0 0
        %911 = vmatprep.subr.bf16.mxu0 0
        %912 = vmatpush2.bf16.msra.mxu0 0
        %913 = vmatprep.subr.bf16.mxu0 0
        %914 = vmatpush2.bf16.msra.mxu0 0
        %915 = vmatprep.subr.bf16.mxu0 0
        %916 = vmatpush2.bf16.msra.mxu0 %v871
        %917 = vmatprep.subr.bf16.mxu0 0
        %918 = vmatpush2.bf16.msra.mxu0 %v870
        %919 = vmatprep.subr.bf16.mxu0 0
        %920 = vmatpush2.bf16.msra.mxu0 %v869
        %921 = vmatprep.subr.bf16.mxu0 0
        %922 = vmatpush2.bf16.msra.mxu0 %v868
        %923 = vmatprep.mubr.bf16.mxu0 %v886
        %924 = vmatmul.mubr.bf16.gmra.mxu0 %v777
        %v925 = vpop.f32.mrf.mxu0
        %v926 = vadd.f32 %v810, %v925
        %v927 = vpop.f32.mrf.mxu0
        %v928 = vpop.f32.mrf.mxu0
        %v929 = vadd.f32 %v810, %v928
        %v930 = vpop.f32.mrf.mxu0
        %931 = vmatprep.mubr.bf16.mxu0 %v889
        %932 = vmatmul.mubr.bf16.gmra.mxu0 %v779
        %v933 = vpop.f32.mrf.mxu0
        %v934 = vadd.f32 %v810, %v933
        %v935 = vpop.f32.mrf.mxu0
        %v936 = vpop.f32.mrf.mxu0
        %v937 = vadd.f32 %v810, %v936
        %v938 = vpop.f32.mrf.mxu0
        %939 = vdwg.mxu0
        %v940 = vld [vmem:[%s717] sm:$0xff]
        %v941 = vld [vmem:[%s717 + $0x8] sm:$0xff]
        %v942 = vld [vmem:[%s717 + $0x10] sm:$0xff]
        %v943 = vld [vmem:[%s717 + $0x18] sm:$0xff]
        %v944 = vadd.f32 %v926, %v940
        %v945 = vadd.f32 %v929, %v941
        %v946 = vadd.f32 %v934, %v942
        %v947 = vadd.f32 %v937, %v943
        %vm948 = vcmask 261120
        %949 = vst.msk [vmem:[#allocation2] sm:$0xff] %vm948, %v944
        %950 = vst.msk [vmem:[#allocation2 + $0x8] sm:$0xff] %vm948, %v945
        %951 = vst.msk [vmem:[#allocation2 + $0x10] sm:$0xff] %vm948, %v946
        %952 = vst.msk [vmem:[#allocation2 + $0x18] sm:$0xff] %vm948, %v947
      $region92: #{vivit_forward.2} parent=87 // pred_fallthru
        _
      %v953 = vld [vmem:[#allocation2] sm:$0xff]
      %v954 = vld [vmem:[#allocation2 + $0x8] sm:$0xff]
      %v955 = vld [vmem:[#allocation2 + $0x10] sm:$0xff]
      %v956 = vld [vmem:[#allocation2 + $0x18] sm:$0xff]
      %v957 = vld [vmem:[%s721] sm:$0x1]
      %v958 = vld [vmem:[%s724] sm:$0x1]
      %vm959 = vcmask 261120
      %v960 = vsel %vm959, %v953, 0.0
      %961 = vadd.xlane.f32.xlu0 %v960
      %v962 = vpop.xlane.xlu0 %961
      %v963 = vsel %vm959, %v954, 0.0
      %964 = vadd.xlane.f32.xlu0 %v963
      %v965 = vpop.xlane.xlu0 %964
      %v966 = vsel %vm959, %v955, 0.0
      %967 = vadd.xlane.f32.xlu0 %v966
      %v968 = vpop.xlane.xlu0 %967
      %v969 = vsel %vm959, %v956, 0.0
      %970 = vadd.xlane.f32.xlu0 %v969
      %v971 = vpop.xlane.xlu0 %970
      %v972 = vrcp.pop 32.0
      %v973 = vmul.f32 %v962, %v972
      %v974 = vmul.f32 %v965, %v972
      %v975 = vmul.f32 %v968, %v972
      %v976 = vmul.f32 %v971, %v972
      %v977 = vsub.f32 %v953, %v973
      %v978 = vsub.f32 %v954, %v974
      %v979 = vsub.f32 %v955, %v975
      %v980 = vsub.f32 %v956, %v976
      %v981 = vmul.f32 %v977, %v977
      %v982 = vmul.f32 %v978, %v978
      %v983 = vmul.f32 %v979, %v979
      %v984 = vmul.f32 %v980, %v980
      %v985 = vsel %vm959, %v981, 0.0
      %986 = vadd.xlane.f32.xlu0 %v985
      %v987 = vpop.xlane.xlu0 %986
      %v988 = vsel %vm959, %v982, 0.0
      %989 = vadd.xlane.f32.xlu0 %v988
      %v990 = vpop.xlane.xlu0 %989
      %v991 = vsel %vm959, %v983, 0.0
      %992 = vadd.xlane.f32.xlu0 %v991
      %v993 = vpop.xlane.xlu0 %992
      %v994 = vsel %vm959, %v984, 0.0
      %995 = vadd.xlane.f32.xlu0 %v994
      %v996 = vpop.xlane.xlu0 %995
      %v997 = vmul.f32 %v987, %v972
      %v998 = vmul.f32 %v990, %v972
      %v999 = vmul.f32 %v993, %v972
      %v1000 = vmul.f32 %v996, %v972
      %v1001 = vadd.f32 %v997, 1e-05
      %v1002 = vadd.f32 %v998, 1e-05
      %v1003 = vadd.f32 %v999, 1e-05
      %v1004 = vadd.f32 %v1000, 1e-05
      %v1005 = vrsqrt.pop %v1001
      %v1006 = vrsqrt.pop %v1002
      %v1007 = vrsqrt.pop %v1003
      %v1008 = vrsqrt.pop %v1004
      %v1009 = vmul.f32 %v977, %v1005
      %v1010 = vmul.f32 %v978, %v1006
      %v1011 = vmul.f32 %v979, %v1007
      %v1012 = vmul.f32 %v980, %v1008
      %v1014 = vlaneseq
      %v1015 = vshrl.u32 %v1014, 7
      %v1016 = vsub.s32 0, %v1015
      %v1017 = vrot.slane %v957, %v1016
      %v1019 = vmul.f32 %v1009, %v1017
      %v1020 = vmul.f32 %v1010, %v1017
      %v1021 = vmul.f32 %v1011, %v1017
      %v1022 = vmul.f32 %v1012, %v1017
      %v1024 = vlaneseq
      %v1025 = vshrl.u32 %v1024, 7
      %v1026 = vsub.s32 0, %v1025
      %v1027 = vrot.slane %v958, %v1026
      %v1029 = vadd.f32 %v1019, %v1027
      %v1030 = vadd.f32 %v1020, %v1027
      %v1031 = vadd.f32 %v1021, %v1027
      %v1032 = vadd.f32 %v1022, %v1027
      %v1033 = vpack.c.bf16 %v1030, %v1029
      %v1034 = vpack.c.bf16 %v1032, %v1031
      %v1035 = vld [vmem:[%s729] sm:$0xf]
      %v1036 = vld [vmem:[%s729 + $0x4] sm:$0xf]
      %v1037 = vld [vmem:[%s729 + $0x8] sm:$0xf]
      %v1038 = vld [vmem:[%s729 + $0xc] sm:$0xf]
      %v1043 = vunpack.c.l.b16 %v1035
      %v1044 = vunpack.c.l.b16 %v1036
      %v1045 = vunpack.c.l.b16 %v1037
      %v1046 = vunpack.c.l.b16 %v1038
      %v1047 = vpack.c.b16 %v1044, %v1043
      %v1048 = vpack.c.b16 %v1046, %v1045
      %v1052 = vsel %vm959, %v1033, 0
      %v1055 = vsel %vm959, %v1034, 0
      %1057 = vmatprep.subr.bf16.mxu0 0
      %1058 = vmatpush1.bf16.msra.mxu0 0
      %1059 = vmatprep.subr.bf16.mxu0 0
      %1060 = vmatpush1.bf16.msra.mxu0 0
      %1061 = vmatprep.subr.bf16.mxu0 0
      %1062 = vmatpush1.bf16.msra.mxu0 0
      %1063 = vmatprep.subr.bf16.mxu0 0
      %1064 = vmatpush1.bf16.msra.mxu0 0
      %1065 = vmatprep.subr.bf16.mxu0 0
      %1066 = vmatpush1.bf16.msra.mxu0 0
      %1067 = vmatprep.subr.bf16.mxu0 0
      %1068 = vmatpush1.bf16.msra.mxu0 0
      %1069 = vmatprep.subr.bf16.mxu0 0
      %1070 = vmatpush1.bf16.msra.mxu0 %v1048
      %1071 = vmatprep.subr.bf16.mxu0 0
      %1072 = vmatpush1.bf16.msra.mxu0 %v1047
      %1073 = vmatprep.subr.bf16.mxu0 0
      %1074 = vmatpush2.bf16.msra.mxu0 0
      %1075 = vmatprep.subr.bf16.mxu0 0
      %1076 = vmatpush2.bf16.msra.mxu0 0
      %1077 = vmatprep.subr.bf16.mxu0 0
      %1078 = vmatpush2.bf16.msra.mxu0 0
      %1079 = vmatprep.subr.bf16.mxu0 0
      %1080 = vmatpush2.bf16.msra.mxu0 0
      %1081 = vmatprep.subr.bf16.mxu0 0
      %1082 = vmatpush2.bf16.msra.mxu0 0
      %1083 = vmatprep.subr.bf16.mxu0 0
      %1084 = vmatpush2.bf16.msra.mxu0 0
      %1085 = vmatprep.subr.bf16.mxu0 0
      %1086 = vmatpush2.bf16.msra.mxu0 0
      %1087 = vmatprep.subr.bf16.mxu0 0
      %1088 = vmatpush2.bf16.msra.mxu0 0
      %1089 = vmatprep.mubr.bf16.mxu0 0
      %1090 = vmatmul.mubr.bf16.gmra.mxu0 %v1052
      %v1091 = vpop.f32.mrf.mxu0
      %v1092 = vadd.f32 0.0, %v1091
      %v1093 = vpop.f32.mrf.mxu0
      %v1094 = vpop.f32.mrf.mxu0
      %v1095 = vadd.f32 0.0, %v1094
      %v1096 = vpop.f32.mrf.mxu0
      %1097 = vmatprep.mubr.bf16.mxu0 0
      %1098 = vmatmul.mubr.bf16.gmra.mxu0 %v1055
      %v1099 = vpop.f32.mrf.mxu0
      %v1100 = vadd.f32 0.0, %v1099
      %v1101 = vpop.f32.mrf.mxu0
      %v1102 = vpop.f32.mrf.mxu0
      %v1103 = vadd.f32 0.0, %v1102
      %v1104 = vpop.f32.mrf.mxu0
      %1105 = vdwg.mxu0
      %v1110 = vcombine.high %v1092, %v1092
      %v1111 = vcombine.high %v1095, %v1095
      %v1112 = vcombine.high %v1100, %v1100
      %v1113 = vcombine.high %v1103, %v1103
      %v1118 = vpack.c.bf16 %v1092, %v1092
      %v1119 = vpack.c.bf16 %v1110, %v1110
      %v1120 = vpack.c.bf16 %v1095, %v1095
      %v1121 = vpack.c.bf16 %v1111, %v1111
      %v1122 = vpack.c.bf16 %v1100, %v1100
      %v1123 = vpack.c.bf16 %v1112, %v1112
      %v1124 = vpack.c.bf16 %v1103, %v1103
      %v1125 = vpack.c.bf16 %v1113, %v1113
      %1127 = vrot.lane.b32.xlu0 %v1118, 96
      %v1128 = vpop.permute.xlu0 %1127
      %vm1129 = vcmask 130048
      %v1131 = vsel %vm1129, %v1118, 0
      %v1134 = vsel %vm1129, %v1128, 0
      %1136 = vmatprep.subr.bf16.mxu0 0
      %1137 = vmatpush1.bf16.xpose.msra.mxu0 0
      %1138 = vmatprep.subr.bf16.mxu0 0
      %1139 = vmatpush1.bf16.xpose.msra.mxu0 0
      %1140 = vmatprep.subr.bf16.mxu0 0
      %1141 = vmatpush1.bf16.xpose.msra.mxu0 0
      %1142 = vmatprep.subr.bf16.mxu0 0
      %1143 = vmatpush1.bf16.xpose.msra.mxu0 0
      %1144 = vmatprep.subr.bf16.mxu0 0
      %1145 = vmatpush1.bf16.xpose.msra.mxu0 0
      %1146 = vmatprep.subr.bf16.mxu0 0
      %1147 = vmatpush1.bf16.xpose.msra.mxu0 0
      %1148 = vmatprep.subr.bf16.mxu0 0
      %1149 = vmatpush1.bf16.xpose.msra.mxu0 0
      %1150 = vmatprep.subr.bf16.mxu0 0
      %1151 = vmatpush1.bf16.xpose.msra.mxu0 %v1134
      %1152 = vmatprep.subr.bf16.mxu0 0
      %1153 = vmatpush2.bf16.xpose.msra.mxu0 0
      %1154 = vmatprep.subr.bf16.mxu0 0
      %1155 = vmatpush2.bf16.xpose.msra.mxu0 0
      %1156 = vmatprep.subr.bf16.mxu0 0
      %1157 = vmatpush2.bf16.xpose.msra.mxu0 0
      %1158 = vmatprep.subr.bf16.mxu0 0
      %1159 = vmatpush2.bf16.xpose.msra.mxu0 0
      %1160 = vmatprep.subr.bf16.mxu0 0
      %1161 = vmatpush2.bf16.xpose.msra.mxu0 0
      %1162 = vmatprep.subr.bf16.mxu0 0
      %1163 = vmatpush2.bf16.xpose.msra.mxu0 0
      %1164 = vmatprep.subr.bf16.mxu0 0
      %1165 = vmatpush2.bf16.xpose.msra.mxu0 0
      %1166 = vmatprep.subr.bf16.mxu0 0
      %1167 = vmatpush2.bf16.xpose.msra.mxu0 0
      %1168 = vmatprep.mubr.bf16.mxu0 0
      %1169 = vmatmul.mubr.bf16.gmra.mxu0 %v1131
      %v1170 = vpop.f32.mrf.mxu0
      %v1171 = vadd.f32 0.0, %v1170
      %v1172 = vpop.f32.mrf.mxu0
      %v1173 = vpop.f32.mrf.mxu0
      %v1174 = vpop.f32.mrf.mxu0
      %1175 = vdwg.mxu0
      %1177 = vrot.lane.b32.xlu0 %v1119, 96
      %v1178 = vpop.permute.xlu0 %1177
      %v1180 = vsel %vm1129, %v1119, 0
      %v1183 = vsel %vm1129, %v1178, 0
      %1185 = vmatprep.subr.bf16.mxu0 0
      %1186 = vmatpush1.bf16.xpose.msra.mxu0 0
      %1187 = vmatprep.subr.bf16.mxu0 0
      %1188 = vmatpush1.bf16.xpose.msra.mxu0 0
      %1189 = vmatprep.subr.bf16.mxu0 0
      %1190 = vmatpush1.bf16.xpose.msra.mxu0 0
      %1191 = vmatprep.subr.bf16.mxu0 0
      %1192 = vmatpush1.bf16.xpose.msra.mxu0 0
      %1193 = vmatprep.subr.bf16.mxu0 0
      %1194 = vmatpush1.bf16.xpose.msra.mxu0 0
      %1195 = vmatprep.subr.bf16.mxu0 0
      %1196 = vmatpush1.bf16.xpose.msra.mxu0 0
      %1197 = vmatprep.subr.bf16.mxu0 0
      %1198 = vmatpush1.bf16.xpose.msra.mxu0 0
      %1199 = vmatprep.subr.bf16.mxu0 0
      %1200 = vmatpush1.bf16.xpose.msra.mxu0 %v1183
      %1201 = vmatprep.subr.bf16.mxu0 0
      %1202 = vmatpush2.bf16.xpose.msra.mxu0 0
      %1203 = vmatprep.subr.bf16.mxu0 0
      %1204 = vmatpush2.bf16.xpose.msra.mxu0 0
      %1205 = vmatprep.subr.bf16.mxu0 0
      %1206 = vmatpush2.bf16.xpose.msra.mxu0 0
      %1207 = vmatprep.subr.bf16.mxu0 0
      %1208 = vmatpush2.bf16.xpose.msra.mxu0 0
      %1209 = vmatprep.subr.bf16.mxu0 0
      %1210 = vmatpush2.bf16.xpose.msra.mxu0 0
      %1211 = vmatprep.subr.bf16.mxu0 0
      %1212 = vmatpush2.bf16.xpose.msra.mxu0 0
      %1213 = vmatprep.subr.bf16.mxu0 0
      %1214 = vmatpush2.bf16.xpose.msra.mxu0 0
      %1215 = vmatprep.subr.bf16.mxu0 0
      %1216 = vmatpush2.bf16.xpose.msra.mxu0 0
      %1217 = vmatprep.mubr.bf16.mxu0 0
      %1218 = vmatmul.mubr.bf16.gmra.mxu0 %v1180
      %v1219 = vpop.f32.mrf.mxu0
      %v1220 = vadd.f32 0.0, %v1219
      %v1221 = vpop.f32.mrf.mxu0
      %v1222 = vpop.f32.mrf.mxu0
      %v1223 = vpop.f32.mrf.mxu0
      %1224 = vdwg.mxu0
      %1226 = vrot.lane.b32.xlu0 %v1120, 96
      %v1227 = vpop.permute.xlu0 %1226
      %v1229 = vsel %vm1129, %v1120, 0
      %v1232 = vsel %vm1129, %v1227, 0
      %1234 = vmatprep.subr.bf16.mxu0 0
      %1235 = vmatpush1.bf16.xpose.msra.mxu0 0
      %1236 = vmatprep.subr.bf16.mxu0 0
      %1237 = vmatpush1.bf16.xpose.msra.mxu0 0
      %1238 = vmatprep.subr.bf16.mxu0 0
      %1239 = vmatpush1.bf16.xpose.msra.mxu0 0
      %1240 = vmatprep.subr.bf16.mxu0 0
      %1241 = vmatpush1.bf16.xpose.msra.mxu0 0
      %1242 = vmatprep.subr.bf16.mxu0 0
      %1243 = vmatpush1.bf16.xpose.msra.mxu0 0
      %1244 = vmatprep.subr.bf16.mxu0 0
      %1245 = vmatpush1.bf16.xpose.msra.mxu0 0
      %1246 = vmatprep.subr.bf16.mxu0 0
      %1247 = vmatpush1.bf16.xpose.msra.mxu0 0
      %1248 = vmatprep.subr.bf16.mxu0 0
      %1249 = vmatpush1.bf16.xpose.msra.mxu0 %v1232
      %1250 = vmatprep.subr.bf16.mxu0 0
      %1251 = vmatpush2.bf16.xpose.msra.mxu0 0
      %1252 = vmatprep.subr.bf16.mxu0 0
      %1253 = vmatpush2.bf16.xpose.msra.mxu0 0
      %1254 = vmatprep.subr.bf16.mxu0 0
      %1255 = vmatpush2.bf16.xpose.msra.mxu0 0
      %1256 = vmatprep.subr.bf16.mxu0 0
      %1257 = vmatpush2.bf16.xpose.msra.mxu0 0
      %1258 = vmatprep.subr.bf16.mxu0 0
      %1259 = vmatpush2.bf16.xpose.msra.mxu0 0
      %1260 = vmatprep.subr.bf16.mxu0 0
      %1261 = vmatpush2.bf16.xpose.msra.mxu0 0
      %1262 = vmatprep.subr.bf16.mxu0 0
      %1263 = vmatpush2.bf16.xpose.msra.mxu0 0
      %1264 = vmatprep.subr.bf16.mxu0 0
      %1265 = vmatpush2.bf16.xpose.msra.mxu0 0
      %1266 = vmatprep.mubr.bf16.mxu0 0
      %1267 = vmatmul.mubr.bf16.gmra.mxu0 %v1229
      %v1268 = vpop.f32.mrf.mxu0
      %v1269 = vadd.f32 0.0, %v1268
      %v1270 = vpop.f32.mrf.mxu0
      %v1271 = vpop.f32.mrf.mxu0
      %v1272 = vpop.f32.mrf.mxu0
      %1273 = vdwg.mxu0
      %1275 = vrot.lane.b32.xlu0 %v1121, 96
      %v1276 = vpop.permute.xlu0 %1275
      %v1278 = vsel %vm1129, %v1121, 0
      %v1281 = vsel %vm1129, %v1276, 0
      %1283 = vmatprep.subr.bf16.mxu0 0
      %1284 = vmatpush1.bf16.xpose.msra.mxu0 0
      %1285 = vmatprep.subr.bf16.mxu0 0
      %1286 = vmatpush1.bf16.xpose.msra.mxu0 0
      %1287 = vmatprep.subr.bf16.mxu0 0
      %1288 = vmatpush1.bf16.xpose.msra.mxu0 0
      %1289 = vmatprep.subr.bf16.mxu0 0
      %1290 = vmatpush1.bf16.xpose.msra.mxu0 0
      %1291 = vmatprep.subr.bf16.mxu0 0
      %1292 = vmatpush1.bf16.xpose.msra.mxu0 0
      %1293 = vmatprep.subr.bf16.mxu0 0
      %1294 = vmatpush1.bf16.xpose.msra.mxu0 0
      %1295 = vmatprep.subr.bf16.mxu0 0
      %1296 = vmatpush1.bf16.xpose.msra.mxu0 0
      %1297 = vmatprep.subr.bf16.mxu0 0
      %1298 = vmatpush1.bf16.xpose.msra.mxu0 %v1281
      %1299 = vmatprep.subr.bf16.mxu0 0
      %1300 = vmatpush2.bf16.xpose.msra.mxu0 0
      %1301 = vmatprep.subr.bf16.mxu0 0
      %1302 = vmatpush2.bf16.xpose.msra.mxu0 0
      %1303 = vmatprep.subr.bf16.mxu0 0
      %1304 = vmatpush2.bf16.xpose.msra.mxu0 0
      %1305 = vmatprep.subr.bf16.mxu0 0
      %1306 = vmatpush2.bf16.xpose.msra.mxu0 0
      %1307 = vmatprep.subr.bf16.mxu0 0
      %1308 = vmatpush2.bf16.xpose.msra.mxu0 0
      %1309 = vmatprep.subr.bf16.mxu0 0
      %1310 = vmatpush2.bf16.xpose.msra.mxu0 0
      %1311 = vmatprep.subr.bf16.mxu0 0
      %1312 = vmatpush2.bf16.xpose.msra.mxu0 0
      %1313 = vmatprep.subr.bf16.mxu0 0
      %1314 = vmatpush2.bf16.xpose.msra.mxu0 0
      %1315 = vmatprep.mubr.bf16.mxu0 0
      %1316 = vmatmul.mubr.bf16.gmra.mxu0 %v1278
      %v1317 = vpop.f32.mrf.mxu0
      %v1318 = vadd.f32 0.0, %v1317
      %v1319 = vpop.f32.mrf.mxu0
      %v1320 = vpop.f32.mrf.mxu0
      %v1321 = vpop.f32.mrf.mxu0
      %1322 = vdwg.mxu0
      %1324 = vrot.lane.b32.xlu0 %v1122, 96
      %v1325 = vpop.permute.xlu0 %1324
      %v1327 = vsel %vm1129, %v1122, 0
      %v1330 = vsel %vm1129, %v1325, 0
      %1332 = vmatprep.subr.bf16.mxu0 0
      %1333 = vmatpush1.bf16.xpose.msra.mxu0 0
      %1334 = vmatprep.subr.bf16.mxu0 0
      %1335 = vmatpush1.bf16.xpose.msra.mxu0 0
      %1336 = vmatprep.subr.bf16.mxu0 0
      %1337 = vmatpush1.bf16.xpose.msra.mxu0 0
      %1338 = vmatprep.subr.bf16.mxu0 0
      %1339 = vmatpush1.bf16.xpose.msra.mxu0 0
      %1340 = vmatprep.subr.bf16.mxu0 0
      %1341 = vmatpush1.bf16.xpose.msra.mxu0 0
      %1342 = vmatprep.subr.bf16.mxu0 0
      %1343 = vmatpush1.bf16.xpose.msra.mxu0 0
      %1344 = vmatprep.subr.bf16.mxu0 0
      %1345 = vmatpush1.bf16.xpose.msra.mxu0 0
      %1346 = vmatprep.subr.bf16.mxu0 0
      %1347 = vmatpush1.bf16.xpose.msra.mxu0 %v1330
      %1348 = vmatprep.subr.bf16.mxu0 0
      %1349 = vmatpush2.bf16.xpose.msra.mxu0 0
      %1350 = vmatprep.subr.bf16.mxu0 0
      %1351 = vmatpush2.bf16.xpose.msra.mxu0 0
      %1352 = vmatprep.subr.bf16.mxu0 0
      %1353 = vmatpush2.bf16.xpose.msra.mxu0 0
      %1354 = vmatprep.subr.bf16.mxu0 0
      %1355 = vmatpush2.bf16.xpose.msra.mxu0 0
      %1356 = vmatprep.subr.bf16.mxu0 0
      %1357 = vmatpush2.bf16.xpose.msra.mxu0 0
      %1358 = vmatprep.subr.bf16.mxu0 0
      %1359 = vmatpush2.bf16.xpose.msra.mxu0 0
      %1360 = vmatprep.subr.bf16.mxu0 0
      %1361 = vmatpush2.bf16.xpose.msra.mxu0 0
      %1362 = vmatprep.subr.bf16.mxu0 0
      %1363 = vmatpush2.bf16.xpose.msra.mxu0 0
      %1364 = vmatprep.mubr.bf16.mxu0 0
      %1365 = vmatmul.mubr.bf16.gmra.mxu0 %v1327
      %v1366 = vpop.f32.mrf.mxu0
      %v1367 = vadd.f32 0.0, %v1366
      %v1368 = vpop.f32.mrf.mxu0
      %v1369 = vpop.f32.mrf.mxu0
      %v1370 = vpop.f32.mrf.mxu0
      %1371 = vdwg.mxu0
      %1373 = vrot.lane.b32.xlu0 %v1123, 96
      %v1374 = vpop.permute.xlu0 %1373
      %v1376 = vsel %vm1129, %v1123, 0
      %v1379 = vsel %vm1129, %v1374, 0
      %1381 = vmatprep.subr.bf16.mxu0 0
      %1382 = vmatpush1.bf16.xpose.msra.mxu0 0
      %1383 = vmatprep.subr.bf16.mxu0 0
      %1384 = vmatpush1.bf16.xpose.msra.mxu0 0
      %1385 = vmatprep.subr.bf16.mxu0 0
      %1386 = vmatpush1.bf16.xpose.msra.mxu0 0
      %1387 = vmatprep.subr.bf16.mxu0 0
      %1388 = vmatpush1.bf16.xpose.msra.mxu0 0
      %1389 = vmatprep.subr.bf16.mxu0 0
      %1390 = vmatpush1.bf16.xpose.msra.mxu0 0
      %1391 = vmatprep.subr.bf16.mxu0 0
      %1392 = vmatpush1.bf16.xpose.msra.mxu0 0
      %1393 = vmatprep.subr.bf16.mxu0 0
      %1394 = vmatpush1.bf16.xpose.msra.mxu0 0
      %1395 = vmatprep.subr.bf16.mxu0 0
      %1396 = vmatpush1.bf16.xpose.msra.mxu0 %v1379
      %1397 = vmatprep.subr.bf16.mxu0 0
      %1398 = vmatpush2.bf16.xpose.msra.mxu0 0
      %1399 = vmatprep.subr.bf16.mxu0 0
      %1400 = vmatpush2.bf16.xpose.msra.mxu0 0
      %1401 = vmatprep.subr.bf16.mxu0 0
      %1402 = vmatpush2.bf16.xpose.msra.mxu0 0
      %1403 = vmatprep.subr.bf16.mxu0 0
      %1404 = vmatpush2.bf16.xpose.msra.mxu0 0
      %1405 = vmatprep.subr.bf16.mxu0 0
      %1406 = vmatpush2.bf16.xpose.msra.mxu0 0
      %1407 = vmatprep.subr.bf16.mxu0 0
      %1408 = vmatpush2.bf16.xpose.msra.mxu0 0
      %1409 = vmatprep.subr.bf16.mxu0 0
      %1410 = vmatpush2.bf16.xpose.msra.mxu0 0
      %1411 = vmatprep.subr.bf16.mxu0 0
      %1412 = vmatpush2.bf16.xpose.msra.mxu0 0
      %1413 = vmatprep.mubr.bf16.mxu0 0
      %1414 = vmatmul.mubr.bf16.gmra.mxu0 %v1376
      %v1415 = vpop.f32.mrf.mxu0
      %v1416 = vadd.f32 0.0, %v1415
      %v1417 = vpop.f32.mrf.mxu0
      %v1418 = vpop.f32.mrf.mxu0
      %v1419 = vpop.f32.mrf.mxu0
      %1420 = vdwg.mxu0
      %1422 = vrot.lane.b32.xlu0 %v1124, 96
      %v1423 = vpop.permute.xlu0 %1422
      %v1425 = vsel %vm1129, %v1124, 0
      %v1428 = vsel %vm1129, %v1423, 0
      %1430 = vmatprep.subr.bf16.mxu0 0
      %1431 = vmatpush1.bf16.xpose.msra.mxu0 0
      %1432 = vmatprep.subr.bf16.mxu0 0
      %1433 = vmatpush1.bf16.xpose.msra.mxu0 0
      %1434 = vmatprep.subr.bf16.mxu0 0
      %1435 = vmatpush1.bf16.xpose.msra.mxu0 0
      %1436 = vmatprep.subr.bf16.mxu0 0
      %1437 = vmatpush1.bf16.xpose.msra.mxu0 0
      %1438 = vmatprep.subr.bf16.mxu0 0
      %1439 = vmatpush1.bf16.xpose.msra.mxu0 0
      %1440 = vmatprep.subr.bf16.mxu0 0
      %1441 = vmatpush1.bf16.xpose.msra.mxu0 0
      %1442 = vmatprep.subr.bf16.mxu0 0
      %1443 = vmatpush1.bf16.xpose.msra.mxu0 0
      %1444 = vmatprep.subr.bf16.mxu0 0
      %1445 = vmatpush1.bf16.xpose.msra.mxu0 %v1428
      %1446 = vmatprep.subr.bf16.mxu0 0
      %1447 = vmatpush2.bf16.xpose.msra.mxu0 0
      %1448 = vmatprep.subr.bf16.mxu0 0
      %1449 = vmatpush2.bf16.xpose.msra.mxu0 0
      %1450 = vmatprep.subr.bf16.mxu0 0
      %1451 = vmatpush2.bf16.xpose.msra.mxu0 0
      %1452 = vmatprep.subr.bf16.mxu0 0
      %1453 = vmatpush2.bf16.xpose.msra.mxu0 0
      %1454 = vmatprep.subr.bf16.mxu0 0
      %1455 = vmatpush2.bf16.xpose.msra.mxu0 0
      %1456 = vmatprep.subr.bf16.mxu0 0
      %1457 = vmatpush2.bf16.xpose.msra.mxu0 0
      %1458 = vmatprep.subr.bf16.mxu0 0
      %1459 = vmatpush2.bf16.xpose.msra.mxu0 0
      %1460 = vmatprep.subr.bf16.mxu0 0
      %1461 = vmatpush2.bf16.xpose.msra.mxu0 0
      %1462 = vmatprep.mubr.bf16.mxu0 0
      %1463 = vmatmul.mubr.bf16.gmra.mxu0 %v1425
      %v1464 = vpop.f32.mrf.mxu0
      %v1465 = vadd.f32 0.0, %v1464
      %v1466 = vpop.f32.mrf.mxu0
      %v1467 = vpop.f32.mrf.mxu0
      %v1468 = vpop.f32.mrf.mxu0
      %1469 = vdwg.mxu0
      %1471 = vrot.lane.b32.xlu0 %v1125, 96
      %v1472 = vpop.permute.xlu0 %1471
      %v1474 = vsel %vm1129, %v1125, 0
      %v1477 = vsel %vm1129, %v1472, 0
      %1479 = vmatprep.subr.bf16.mxu0 0
      %1480 = vmatpush1.bf16.xpose.msra.mxu0 0
      %1481 = vmatprep.subr.bf16.mxu0 0
      %1482 = vmatpush1.bf16.xpose.msra.mxu0 0
      %1483 = vmatprep.subr.bf16.mxu0 0
      %1484 = vmatpush1.bf16.xpose.msra.mxu0 0
      %1485 = vmatprep.subr.bf16.mxu0 0
      %1486 = vmatpush1.bf16.xpose.msra.mxu0 0
      %1487 = vmatprep.subr.bf16.mxu0 0
      %1488 = vmatpush1.bf16.xpose.msra.mxu0 0
      %1489 = vmatprep.subr.bf16.mxu0 0
      %1490 = vmatpush1.bf16.xpose.msra.mxu0 0
      %1491 = vmatprep.subr.bf16.mxu0 0
      %1492 = vmatpush1.bf16.xpose.msra.mxu0 0
      %1493 = vmatprep.subr.bf16.mxu0 0
      %1494 = vmatpush1.bf16.xpose.msra.mxu0 %v1477
      %1495 = vmatprep.subr.bf16.mxu0 0
      %1496 = vmatpush2.bf16.xpose.msra.mxu0 0
      %1497 = vmatprep.subr.bf16.mxu0 0
      %1498 = vmatpush2.bf16.xpose.msra.mxu0 0
      %1499 = vmatprep.subr.bf16.mxu0 0
      %1500 = vmatpush2.bf16.xpose.msra.mxu0 0
      %1501 = vmatprep.subr.bf16.mxu0 0
      %1502 = vmatpush2.bf16.xpose.msra.mxu0 0
      %1503 = vmatprep.subr.bf16.mxu0 0
      %1504 = vmatpush2.bf16.xpose.msra.mxu0 0
      %1505 = vmatprep.subr.bf16.mxu0 0
      %1506 = vmatpush2.bf16.xpose.msra.mxu0 0
      %1507 = vmatprep.subr.bf16.mxu0 0
      %1508 = vmatpush2.bf16.xpose.msra.mxu0 0
      %1509 = vmatprep.subr.bf16.mxu0 0
      %1510 = vmatpush2.bf16.xpose.msra.mxu0 0
      %1511 = vmatprep.mubr.bf16.mxu0 0
      %1512 = vmatmul.mubr.bf16.gmra.mxu0 %v1474
      %v1513 = vpop.f32.mrf.mxu0
      %v1514 = vadd.f32 0.0, %v1513
      %v1515 = vpop.f32.mrf.mxu0
      %v1516 = vpop.f32.mrf.mxu0
      %v1517 = vpop.f32.mrf.mxu0
      %1518 = vdwg.mxu0
      %vm1519 = vcmask 27648
      %v1520 = vsel %vm1519, %v1171, -inf
      %1521 = vmax.xlane.f32.xlu0 %v1520
      %v1522 = vpop.xlane.xlu0 %1521
      %v1523 = vsel %vm1519, %v1220, -inf
      %1524 = vmax.xlane.f32.xlu0 %v1523
      %v1525 = vpop.xlane.xlu0 %1524
      %v1526 = vsel %vm1519, %v1269, -inf
      %1527 = vmax.xlane.f32.xlu0 %v1526
      %v1528 = vpop.xlane.xlu0 %1527
      %v1529 = vsel %vm1519, %v1318, -inf
      %1530 = vmax.xlane.f32.xlu0 %v1529
      %v1531 = vpop.xlane.xlu0 %1530
      %v1532 = vsel %vm1519, %v1367, -inf
      %1533 = vmax.xlane.f32.xlu0 %v1532
      %v1534 = vpop.xlane.xlu0 %1533
      %v1535 = vsel %vm1519, %v1416, -inf
      %1536 = vmax.xlane.f32.xlu0 %v1535
      %v1537 = vpop.xlane.xlu0 %1536
      %v1538 = vsel %vm1519, %v1465, -inf
      %1539 = vmax.xlane.f32.xlu0 %v1538
      %v1540 = vpop.xlane.xlu0 %1539
      %v1541 = vsel %vm1519, %v1514, -inf
      %1542 = vmax.xlane.f32.xlu0 %v1541
      %v1543 = vpop.xlane.xlu0 %1542
      %v1544 = vsub.f32 %v1171, %v1522
      %v1545 = vsub.f32 %v1220, %v1525
      %v1546 = vsub.f32 %v1269, %v1528
      %v1547 = vsub.f32 %v1318, %v1531
      %v1548 = vsub.f32 %v1367, %v1534
      %v1549 = vsub.f32 %v1416, %v1537
      %v1550 = vsub.f32 %v1465, %v1540
      %v1551 = vsub.f32 %v1514, %v1543
      %v1552 = vmul.f32 %v1544, 1.442695
      %v1553 = vpow.pop %v1552
      %v1554 = vmul.f32 %v1545, 1.442695
      %v1555 = vpow.pop %v1554
      %v1556 = vmul.f32 %v1546, 1.442695
      %v1557 = vpow.pop %v1556
      %v1558 = vmul.f32 %v1547, 1.442695
      %v1559 = vpow.pop %v1558
      %v1560 = vmul.f32 %v1548, 1.442695
      %v1561 = vpow.pop %v1560
      %v1562 = vmul.f32 %v1549, 1.442695
      %v1563 = vpow.pop %v1562
      %v1564 = vmul.f32 %v1550, 1.442695
      %v1565 = vpow.pop %v1564
      %v1566 = vmul.f32 %v1551, 1.442695
      %v1567 = vpow.pop %v1566
      %v1568 = vsel %vm1519, %v1553, 0.0
      %1569 = vadd.xlane.f32.xlu0 %v1568
      %v1570 = vpop.xlane.xlu0 %1569
      %v1571 = vsel %vm1519, %v1555, 0.0
      %1572 = vadd.xlane.f32.xlu0 %v1571
      %v1573 = vpop.xlane.xlu0 %1572
      %v1574 = vsel %vm1519, %v1557, 0.0
      %1575 = vadd.xlane.f32.xlu0 %v1574
      %v1576 = vpop.xlane.xlu0 %1575
      %v1577 = vsel %vm1519, %v1559, 0.0
      %1578 = vadd.xlane.f32.xlu0 %v1577
      %v1579 = vpop.xlane.xlu0 %1578
      %v1580 = vsel %vm1519, %v1561, 0.0
      %1581 = vadd.xlane.f32.xlu0 %v1580
      %v1582 = vpop.xlane.xlu0 %1581
      %v1583 = vsel %vm1519, %v1563, 0.0
      %1584 = vadd.xlane.f32.xlu0 %v1583
      %v1585 = vpop.xlane.xlu0 %1584
      %v1586 = vsel %vm1519, %v1565, 0.0
      %1587 = vadd.xlane.f32.xlu0 %v1586
      %v1588 = vpop.xlane.xlu0 %1587
      %v1589 = vsel %vm1519, %v1567, 0.0
      %1590 = vadd.xlane.f32.xlu0 %v1589
      %v1591 = vpop.xlane.xlu0 %1590
      %v1592 = vrcp.pop %v1570
      %v1593 = vrcp.pop %v1573
      %v1594 = vrcp.pop %v1576
      %v1595 = vrcp.pop %v1579
      %v1596 = vrcp.pop %v1582
      %v1597 = vrcp.pop %v1585
      %v1598 = vrcp.pop %v1588
      %v1599 = vrcp.pop %v1591
      %v1600 = vmul.f32 %v1553, %v1592
      %v1601 = vmul.f32 %v1555, %v1593
      %v1602 = vmul.f32 %v1557, %v1594
      %v1603 = vmul.f32 %v1559, %v1595
      %v1604 = vmul.f32 %v1561, %v1596
      %v1605 = vmul.f32 %v1563, %v1597
      %v1606 = vmul.f32 %v1565, %v1598
      %v1607 = vmul.f32 %v1567, %v1599
      %v1608 = vpack.c.bf16 %v1600, %v1600
      %v1609 = vpack.c.bf16 %v1601, %v1601
      %v1610 = vpack.c.bf16 %v1602, %v1602
      %v1611 = vpack.c.bf16 %v1603, %v1603
      %v1612 = vpack.c.bf16 %v1604, %v1604
      %v1613 = vpack.c.bf16 %v1605, %v1605
      %v1614 = vpack.c.bf16 %v1606, %v1606
      %v1615 = vpack.c.bf16 %v1607, %v1607
      %1616 = vrot.lane.b32.xlu0 %v1118, 64
      %v1617 = vpop.permute.xlu0 %1616
      %vm1618 = vcmask 31744
      %v1620 = vsel %vm1618, %v1608, 0
      %vm1622 = vcmask 1041408
      %v1624 = vsel %vm1622, %v1617, 0
      %1626 = vmatprep.subr.bf16.mxu0 0
      %1627 = vmatpush1.bf16.msra.mxu0 0
      %1628 = vmatprep.subr.bf16.mxu0 0
      %1629 = vmatpush1.bf16.msra.mxu0 0
      %1630 = vmatprep.subr.bf16.mxu0 0
      %1631 = vmatpush1.bf16.msra.mxu0 0
      %1632 = vmatprep.subr.bf16.mxu0 0
      %1633 = vmatpush1.bf16.msra.mxu0 0
      %1634 = vmatprep.subr.bf16.mxu0 0
      %1635 = vmatpush1.bf16.msra.mxu0 0
      %1636 = vmatprep.subr.bf16.mxu0 0
      %1637 = vmatpush1.bf16.msra.mxu0 0
      %1638 = vmatprep.subr.bf16.mxu0 0
      %1639 = vmatpush1.bf16.msra.mxu0 0
      %1640 = vmatprep.subr.bf16.mxu0 0
      %1641 = vmatpush1.bf16.msra.mxu0 %v1624
      %1642 = vmatprep.subr.bf16.mxu0 0
      %1643 = vmatpush2.bf16.msra.mxu0 0
      %1644 = vmatprep.subr.bf16.mxu0 0
      %1645 = vmatpush2.bf16.msra.mxu0 0
      %1646 = vmatprep.subr.bf16.mxu0 0
      %1647 = vmatpush2.bf16.msra.mxu0 0
      %1648 = vmatprep.subr.bf16.mxu0 0
      %1649 = vmatpush2.bf16.msra.mxu0 0
      %1650 = vmatprep.subr.bf16.mxu0 0
      %1651 = vmatpush2.bf16.msra.mxu0 0
      %1652 = vmatprep.subr.bf16.mxu0 0
      %1653 = vmatpush2.bf16.msra.mxu0 0
      %1654 = vmatprep.subr.bf16.mxu0 0
      %1655 = vmatpush2.bf16.msra.mxu0 0
      %1656 = vmatprep.subr.bf16.mxu0 0
      %1657 = vmatpush2.bf16.msra.mxu0 0
      %1658 = vmatprep.mubr.bf16.mxu0 0
      %1659 = vmatmul.mubr.bf16.gmra.mxu0 %v1620
      %v1660 = vpop.f32.mrf.mxu0
      %v1661 = vadd.f32 0.0, %v1660
      %v1662 = vpop.f32.mrf.mxu0
      %v1663 = vpop.f32.mrf.mxu0
      %v1664 = vpop.f32.mrf.mxu0
      %1665 = vdwg.mxu0
      %1666 = vrot.lane.b32.xlu0 %v1119, 64
      %v1667 = vpop.permute.xlu0 %1666
      %v1669 = vsel %vm1618, %v1609, 0
      %v1672 = vsel %vm1622, %v1667, 0
      %1674 = vmatprep.subr.bf16.mxu0 0
      %1675 = vmatpush1.bf16.msra.mxu0 0
      %1676 = vmatprep.subr.bf16.mxu0 0
      %1677 = vmatpush1.bf16.msra.mxu0 0
      %1678 = vmatprep.subr.bf16.mxu0 0
      %1679 = vmatpush1.bf16.msra.mxu0 0
      %1680 = vmatprep.subr.bf16.mxu0 0
      %1681 = vmatpush1.bf16.msra.mxu0 0
      %1682 = vmatprep.subr.bf16.mxu0 0
      %1683 = vmatpush1.bf16.msra.mxu0 0
      %1684 = vmatprep.subr.bf16.mxu0 0
      %1685 = vmatpush1.bf16.msra.mxu0 0
      %1686 = vmatprep.subr.bf16.mxu0 0
      %1687 = vmatpush1.bf16.msra.mxu0 0
      %1688 = vmatprep.subr.bf16.mxu0 0
      %1689 = vmatpush1.bf16.msra.mxu0 %v1672
      %1690 = vmatprep.subr.bf16.mxu0 0
      %1691 = vmatpush2.bf16.msra.mxu0 0
      %1692 = vmatprep.subr.bf16.mxu0 0
      %1693 = vmatpush2.bf16.msra.mxu0 0
      %1694 = vmatprep.subr.bf16.mxu0 0
      %1695 = vmatpush2.bf16.msra.mxu0 0
      %1696 = vmatprep.subr.bf16.mxu0 0
      %1697 = vmatpush2.bf16.msra.mxu0 0
      %1698 = vmatprep.subr.bf16.mxu0 0
      %1699 = vmatpush2.bf16.msra.mxu0 0
      %1700 = vmatprep.subr.bf16.mxu0 0
      %1701 = vmatpush2.bf16.msra.mxu0 0
      %1702 = vmatprep.subr.bf16.mxu0 0
      %1703 = vmatpush2.bf16.msra.mxu0 0
      %1704 = vmatprep.subr.bf16.mxu0 0
      %1705 = vmatpush2.bf16.msra.mxu0 0
      %1706 = vmatprep.mubr.bf16.mxu0 0
      %1707 = vmatmul.mubr.bf16.gmra.mxu0 %v1669
      %v1708 = vpop.f32.mrf.mxu0
      %v1709 = vadd.f32 0.0, %v1708
      %v1710 = vpop.f32.mrf.mxu0
      %v1711 = vpop.f32.mrf.mxu0
      %v1712 = vpop.f32.mrf.mxu0
      %1713 = vdwg.mxu0
      %1714 = vrot.lane.b32.xlu0 %v1120, 64
      %v1715 = vpop.permute.xlu0 %1714
      %v1717 = vsel %vm1618, %v1610, 0
      %v1720 = vsel %vm1622, %v1715, 0
      %1722 = vmatprep.subr.bf16.mxu0 0
      %1723 = vmatpush1.bf16.msra.mxu0 0
      %1724 = vmatprep.subr.bf16.mxu0 0
      %1725 = vmatpush1.bf16.msra.mxu0 0
      %1726 = vmatprep.subr.bf16.mxu0 0
      %1727 = vmatpush1.bf16.msra.mxu0 0
      %1728 = vmatprep.subr.bf16.mxu0 0
      %1729 = vmatpush1.bf16.msra.mxu0 0
      %1730 = vmatprep.subr.bf16.mxu0 0
      %1731 = vmatpush1.bf16.msra.mxu0 0
      %1732 = vmatprep.subr.bf16.mxu0 0
      %1733 = vmatpush1.bf16.msra.mxu0 0
      %1734 = vmatprep.subr.bf16.mxu0 0
      %1735 = vmatpush1.bf16.msra.mxu0 0
      %1736 = vmatprep.subr.bf16.mxu0 0
      %1737 = vmatpush1.bf16.msra.mxu0 %v1720
      %1738 = vmatprep.subr.bf16.mxu0 0
      %1739 = vmatpush2.bf16.msra.mxu0 0
      %1740 = vmatprep.subr.bf16.mxu0 0
      %1741 = vmatpush2.bf16.msra.mxu0 0
      %1742 = vmatprep.subr.bf16.mxu0 0
      %1743 = vmatpush2.bf16.msra.mxu0 0
      %1744 = vmatprep.subr.bf16.mxu0 0
      %1745 = vmatpush2.bf16.msra.mxu0 0
      %1746 = vmatprep.subr.bf16.mxu0 0
      %1747 = vmatpush2.bf16.msra.mxu0 0
      %1748 = vmatprep.subr.bf16.mxu0 0
      %1749 = vmatpush2.bf16.msra.mxu0 0
      %1750 = vmatprep.subr.bf16.mxu0 0
      %1751 = vmatpush2.bf16.msra.mxu0 0
      %1752 = vmatprep.subr.bf16.mxu0 0
      %1753 = vmatpush2.bf16.msra.mxu0 0
      %1754 = vmatprep.mubr.bf16.mxu0 0
      %1755 = vmatmul.mubr.bf16.gmra.mxu0 %v1717
      %v1756 = vpop.f32.mrf.mxu0
      %v1757 = vadd.f32 0.0, %v1756
      %v1758 = vpop.f32.mrf.mxu0
      %v1759 = vpop.f32.mrf.mxu0
      %v1760 = vpop.f32.mrf.mxu0
      %1761 = vdwg.mxu0
      %1762 = vrot.lane.b32.xlu0 %v1121, 64
      %v1763 = vpop.permute.xlu0 %1762
      %v1765 = vsel %vm1618, %v1611, 0
      %v1768 = vsel %vm1622, %v1763, 0
      %1770 = vmatprep.subr.bf16.mxu0 0
      %1771 = vmatpush1.bf16.msra.mxu0 0
      %1772 = vmatprep.subr.bf16.mxu0 0
      %1773 = vmatpush1.bf16.msra.mxu0 0
      %1774 = vmatprep.subr.bf16.mxu0 0
      %1775 = vmatpush1.bf16.msra.mxu0 0
      %1776 = vmatprep.subr.bf16.mxu0 0
      %1777 = vmatpush1.bf16.msra.mxu0 0
      %1778 = vmatprep.subr.bf16.mxu0 0
      %1779 = vmatpush1.bf16.msra.mxu0 0
      %1780 = vmatprep.subr.bf16.mxu0 0
      %1781 = vmatpush1.bf16.msra.mxu0 0
      %1782 = vmatprep.subr.bf16.mxu0 0
      %1783 = vmatpush1.bf16.msra.mxu0 0
      %1784 = vmatprep.subr.bf16.mxu0 0
      %1785 = vmatpush1.bf16.msra.mxu0 %v1768
      %1786 = vmatprep.subr.bf16.mxu0 0
      %1787 = vmatpush2.bf16.msra.mxu0 0
      %1788 = vmatprep.subr.bf16.mxu0 0
      %1789 = vmatpush2.bf16.msra.mxu0 0
      %1790 = vmatprep.subr.bf16.mxu0 0
      %1791 = vmatpush2.bf16.msra.mxu0 0
      %1792 = vmatprep.subr.bf16.mxu0 0
      %1793 = vmatpush2.bf16.msra.mxu0 0
      %1794 = vmatprep.subr.bf16.mxu0 0
      %1795 = vmatpush2.bf16.msra.mxu0 0
      %1796 = vmatprep.subr.bf16.mxu0 0
      %1797 = vmatpush2.bf16.msra.mxu0 0
      %1798 = vmatprep.subr.bf16.mxu0 0
      %1799 = vmatpush2.bf16.msra.mxu0 0
      %1800 = vmatprep.subr.bf16.mxu0 0
      %1801 = vmatpush2.bf16.msra.mxu0 0
      %1802 = vmatprep.mubr.bf16.mxu0 0
      %1803 = vmatmul.mubr.bf16.gmra.mxu0 %v1765
      %v1804 = vpop.f32.mrf.mxu0
      %v1805 = vadd.f32 0.0, %v1804
      %v1806 = vpop.f32.mrf.mxu0
      %v1807 = vpop.f32.mrf.mxu0
      %v1808 = vpop.f32.mrf.mxu0
      %1809 = vdwg.mxu0
      %1810 = vrot.lane.b32.xlu0 %v1122, 64
      %v1811 = vpop.permute.xlu0 %1810
      %v1813 = vsel %vm1618, %v1612, 0
      %v1816 = vsel %vm1622, %v1811, 0
      %1818 = vmatprep.subr.bf16.mxu0 0
      %1819 = vmatpush1.bf16.msra.mxu0 0
      %1820 = vmatprep.subr.bf16.mxu0 0
      %1821 = vmatpush1.bf16.msra.mxu0 0
      %1822 = vmatprep.subr.bf16.mxu0 0
      %1823 = vmatpush1.bf16.msra.mxu0 0
      %1824 = vmatprep.subr.bf16.mxu0 0
      %1825 = vmatpush1.bf16.msra.mxu0 0
      %1826 = vmatprep.subr.bf16.mxu0 0
      %1827 = vmatpush1.bf16.msra.mxu0 0
      %1828 = vmatprep.subr.bf16.mxu0 0
      %1829 = vmatpush1.bf16.msra.mxu0 0
      %1830 = vmatprep.subr.bf16.mxu0 0
      %1831 = vmatpush1.bf16.msra.mxu0 0
      %1832 = vmatprep.subr.bf16.mxu0 0
      %1833 = vmatpush1.bf16.msra.mxu0 %v1816
      %1834 = vmatprep.subr.bf16.mxu0 0
      %1835 = vmatpush2.bf16.msra.mxu0 0
      %1836 = vmatprep.subr.bf16.mxu0 0
      %1837 = vmatpush2.bf16.msra.mxu0 0
      %1838 = vmatprep.subr.bf16.mxu0 0
      %1839 = vmatpush2.bf16.msra.mxu0 0
      %1840 = vmatprep.subr.bf16.mxu0 0
      %1841 = vmatpush2.bf16.msra.mxu0 0
      %1842 = vmatprep.subr.bf16.mxu0 0
      %1843 = vmatpush2.bf16.msra.mxu0 0
      %1844 = vmatprep.subr.bf16.mxu0 0
      %1845 = vmatpush2.bf16.msra.mxu0 0
      %1846 = vmatprep.subr.bf16.mxu0 0
      %1847 = vmatpush2.bf16.msra.mxu0 0
      %1848 = vmatprep.subr.bf16.mxu0 0
      %1849 = vmatpush2.bf16.msra.mxu0 0
      %1850 = vmatprep.mubr.bf16.mxu0 0
      %1851 = vmatmul.mubr.bf16.gmra.mxu0 %v1813
      %v1852 = vpop.f32.mrf.mxu0
      %v1853 = vadd.f32 0.0, %v1852
      %v1854 = vpop.f32.mrf.mxu0
      %v1855 = vpop.f32.mrf.mxu0
      %v1856 = vpop.f32.mrf.mxu0
      %1857 = vdwg.mxu0
      %1858 = vrot.lane.b32.xlu0 %v1123, 64
      %v1859 = vpop.permute.xlu0 %1858
      %v1861 = vsel %vm1618, %v1613, 0
      %v1864 = vsel %vm1622, %v1859, 0
      %1866 = vmatprep.subr.bf16.mxu0 0
      %1867 = vmatpush1.bf16.msra.mxu0 0
      %1868 = vmatprep.subr.bf16.mxu0 0
      %1869 = vmatpush1.bf16.msra.mxu0 0
      %1870 = vmatprep.subr.bf16.mxu0 0
      %1871 = vmatpush1.bf16.msra.mxu0 0
      %1872 = vmatprep.subr.bf16.mxu0 0
      %1873 = vmatpush1.bf16.msra.mxu0 0
      %1874 = vmatprep.subr.bf16.mxu0 0
      %1875 = vmatpush1.bf16.msra.mxu0 0
      %1876 = vmatprep.subr.bf16.mxu0 0
      %1877 = vmatpush1.bf16.msra.mxu0 0
      %1878 = vmatprep.subr.bf16.mxu0 0
      %1879 = vmatpush1.bf16.msra.mxu0 0
      %1880 = vmatprep.subr.bf16.mxu0 0
      %1881 = vmatpush1.bf16.msra.mxu0 %v1864
      %1882 = vmatprep.subr.bf16.mxu0 0
      %1883 = vmatpush2.bf16.msra.mxu0 0
      %1884 = vmatprep.subr.bf16.mxu0 0
      %1885 = vmatpush2.bf16.msra.mxu0 0
      %1886 = vmatprep.subr.bf16.mxu0 0
      %1887 = vmatpush2.bf16.msra.mxu0 0
      %1888 = vmatprep.subr.bf16.mxu0 0
      %1889 = vmatpush2.bf16.msra.mxu0 0
      %1890 = vmatprep.subr.bf16.mxu0 0
      %1891 = vmatpush2.bf16.msra.mxu0 0
      %1892 = vmatprep.subr.bf16.mxu0 0
      %1893 = vmatpush2.bf16.msra.mxu0 0
      %1894 = vmatprep.subr.bf16.mxu0 0
      %1895 = vmatpush2.bf16.msra.mxu0 0
      %1896 = vmatprep.subr.bf16.mxu0 0
      %1897 = vmatpush2.bf16.msra.mxu0 0
      %1898 = vmatprep.mubr.bf16.mxu0 0
      %1899 = vmatmul.mubr.bf16.gmra.mxu0 %v1861
      %v1900 = vpop.f32.mrf.mxu0
      %v1901 = vadd.f32 0.0, %v1900
      %v1902 = vpop.f32.mrf.mxu0
      %v1903 = vpop.f32.mrf.mxu0
      %v1904 = vpop.f32.mrf.mxu0
      %1905 = vdwg.mxu0
      %1906 = vrot.lane.b32.xlu0 %v1124, 64
      %v1907 = vpop.permute.xlu0 %1906
      %v1909 = vsel %vm1618, %v1614, 0
      %v1912 = vsel %vm1622, %v1907, 0
      %1914 = vmatprep.subr.bf16.mxu0 0
      %1915 = vmatpush1.bf16.msra.mxu0 0
      %1916 = vmatprep.subr.bf16.mxu0 0
      %1917 = vmatpush1.bf16.msra.mxu0 0
      %1918 = vmatprep.subr.bf16.mxu0 0
      %1919 = vmatpush1.bf16.msra.mxu0 0
      %1920 = vmatprep.subr.bf16.mxu0 0
      %1921 = vmatpush1.bf16.msra.mxu0 0
      %1922 = vmatprep.subr.bf16.mxu0 0
      %1923 = vmatpush1.bf16.msra.mxu0 0
      %1924 = vmatprep.subr.bf16.mxu0 0
      %1925 = vmatpush1.bf16.msra.mxu0 0
      %1926 = vmatprep.subr.bf16.mxu0 0
      %1927 = vmatpush1.bf16.msra.mxu0 0
      %1928 = vmatprep.subr.bf16.mxu0 0
      %1929 = vmatpush1.bf16.msra.mxu0 %v1912
      %1930 = vmatprep.subr.bf16.mxu0 0
      %1931 = vmatpush2.bf16.msra.mxu0 0
      %1932 = vmatprep.subr.bf16.mxu0 0
      %1933 = vmatpush2.bf16.msra.mxu0 0
      %1934 = vmatprep.subr.bf16.mxu0 0
      %1935 = vmatpush2.bf16.msra.mxu0 0
      %1936 = vmatprep.subr.bf16.mxu0 0
      %1937 = vmatpush2.bf16.msra.mxu0 0
      %1938 = vmatprep.subr.bf16.mxu0 0
      %1939 = vmatpush2.bf16.msra.mxu0 0
      %1940 = vmatprep.subr.bf16.mxu0 0
      %1941 = vmatpush2.bf16.msra.mxu0 0
      %1942 = vmatprep.subr.bf16.mxu0 0
      %1943 = vmatpush2.bf16.msra.mxu0 0
      %1944 = vmatprep.subr.bf16.mxu0 0
      %1945 = vmatpush2.bf16.msra.mxu0 0
      %1946 = vmatprep.mubr.bf16.mxu0 0
      %1947 = vmatmul.mubr.bf16.gmra.mxu0 %v1909
      %v1948 = vpop.f32.mrf.mxu0
      %v1949 = vadd.f32 0.0, %v1948
      %v1950 = vpop.f32.mrf.mxu0
      %v1951 = vpop.f32.mrf.mxu0
      %v1952 = vpop.f32.mrf.mxu0
      %1953 = vdwg.mxu0
      %1954 = vrot.lane.b32.xlu0 %v1125, 64
      %v1955 = vpop.permute.xlu0 %1954
      %v1957 = vsel %vm1618, %v1615, 0
      %v1960 = vsel %vm1622, %v1955, 0
      %1962 = vmatprep.subr.bf16.mxu0 0
      %1963 = vmatpush1.bf16.msra.mxu0 0
      %1964 = vmatprep.subr.bf16.mxu0 0
      %1965 = vmatpush1.bf16.msra.mxu0 0
      %1966 = vmatprep.subr.bf16.mxu0 0
      %1967 = vmatpush1.bf16.msra.mxu0 0
      %1968 = vmatprep.subr.bf16.mxu0 0
      %1969 = vmatpush1.bf16.msra.mxu0 0
      %1970 = vmatprep.subr.bf16.mxu0 0
      %1971 = vmatpush1.bf16.msra.mxu0 0
      %1972 = vmatprep.subr.bf16.mxu0 0
      %1973 = vmatpush1.bf16.msra.mxu0 0
      %1974 = vmatprep.subr.bf16.mxu0 0
      %1975 = vmatpush1.bf16.msra.mxu0 0
      %1976 = vmatprep.subr.bf16.mxu0 0
      %1977 = vmatpush1.bf16.msra.mxu0 %v1960
      %1978 = vmatprep.subr.bf16.mxu0 0
      %1979 = vmatpush2.bf16.msra.mxu0 0
      %1980 = vmatprep.subr.bf16.mxu0 0
      %1981 = vmatpush2.bf16.msra.mxu0 0
      %1982 = vmatprep.subr.bf16.mxu0 0
      %1983 = vmatpush2.bf16.msra.mxu0 0
      %1984 = vmatprep.subr.bf16.mxu0 0
      %1985 = vmatpush2.bf16.msra.mxu0 0
      %1986 = vmatprep.subr.bf16.mxu0 0
      %1987 = vmatpush2.bf16.msra.mxu0 0
      %1988 = vmatprep.subr.bf16.mxu0 0
      %1989 = vmatpush2.bf16.msra.mxu0 0
      %1990 = vmatprep.subr.bf16.mxu0 0
      %1991 = vmatpush2.bf16.msra.mxu0 0
      %1992 = vmatprep.subr.bf16.mxu0 0
      %1993 = vmatpush2.bf16.msra.mxu0 0
      %1994 = vmatprep.mubr.bf16.mxu0 0
      %1995 = vmatmul.mubr.bf16.gmra.mxu0 %v1957
      %v1996 = vpop.f32.mrf.mxu0
      %v1997 = vadd.f32 0.0, %v1996
      %v1998 = vpop.f32.mrf.mxu0
      %v1999 = vpop.f32.mrf.mxu0
      %v2000 = vpop.f32.mrf.mxu0
      %2001 = vdwg.mxu0
      %2002 = vrot.lane.b32.xlu0 %v1118, 112
      %v2003 = vpop.permute.xlu0 %2002
      %2004 = vrot.lane.b32.xlu0 %v1118, 80
      %v2005 = vpop.permute.xlu0 %2004
      %v2007 = vsel %vm1129, %v2003, 0
      %v2010 = vsel %vm1129, %v2005, 0
      %2012 = vmatprep.subr.bf16.mxu0 0
      %2013 = vmatpush1.bf16.xpose.msra.mxu0 0
      %2014 = vmatprep.subr.bf16.mxu0 0
      %2015 = vmatpush1.bf16.xpose.msra.mxu0 0
      %2016 = vmatprep.subr.bf16.mxu0 0
      %2017 = vmatpush1.bf16.xpose.msra.mxu0 0
      %2018 = vmatprep.subr.bf16.mxu0 0
      %2019 = vmatpush1.bf16.xpose.msra.mxu0 0
      %2020 = vmatprep.subr.bf16.mxu0 0
      %2021 = vmatpush1.bf16.xpose.msra.mxu0 0
      %2022 = vmatprep.subr.bf16.mxu0 0
      %2023 = vmatpush1.bf16.xpose.msra.mxu0 0
      %2024 = vmatprep.subr.bf16.mxu0 0
      %2025 = vmatpush1.bf16.xpose.msra.mxu0 0
      %2026 = vmatprep.subr.bf16.mxu0 0
      %2027 = vmatpush1.bf16.xpose.msra.mxu0 %v2010
      %2028 = vmatprep.subr.bf16.mxu0 0
      %2029 = vmatpush2.bf16.xpose.msra.mxu0 0
      %2030 = vmatprep.subr.bf16.mxu0 0
      %2031 = vmatpush2.bf16.xpose.msra.mxu0 0
      %2032 = vmatprep.subr.bf16.mxu0 0
      %2033 = vmatpush2.bf16.xpose.msra.mxu0 0
      %2034 = vmatprep.subr.bf16.mxu0 0
      %2035 = vmatpush2.bf16.xpose.msra.mxu0 0
      %2036 = vmatprep.subr.bf16.mxu0 0
      %2037 = vmatpush2.bf16.xpose.msra.mxu0 0
      %2038 = vmatprep.subr.bf16.mxu0 0
      %2039 = vmatpush2.bf16.xpose.msra.mxu0 0
      %2040 = vmatprep.subr.bf16.mxu0 0
      %2041 = vmatpush2.bf16.xpose.msra.mxu0 0
      %2042 = vmatprep.subr.bf16.mxu0 0
      %2043 = vmatpush2.bf16.xpose.msra.mxu0 0
      %2044 = vmatprep.mubr.bf16.mxu0 0
      %2045 = vmatmul.mubr.bf16.gmra.mxu0 %v2007
      %v2046 = vpop.f32.mrf.mxu0
      %v2047 = vadd.f32 0.0, %v2046
      %v2048 = vpop.f32.mrf.mxu0
      %v2049 = vpop.f32.mrf.mxu0
      %v2050 = vpop.f32.mrf.mxu0
      %2051 = vdwg.mxu0
      %2052 = vrot.lane.b32.xlu0 %v1119, 112
      %v2053 = vpop.permute.xlu0 %2052
      %2054 = vrot.lane.b32.xlu0 %v1119, 80
      %v2055 = vpop.permute.xlu0 %2054
      %v2057 = vsel %vm1129, %v2053, 0
      %v2060 = vsel %vm1129, %v2055, 0
      %2062 = vmatprep.subr.bf16.mxu0 0
      %2063 = vmatpush1.bf16.xpose.msra.mxu0 0
      %2064 = vmatprep.subr.bf16.mxu0 0
      %2065 = vmatpush1.bf16.xpose.msra.mxu0 0
      %2066 = vmatprep.subr.bf16.mxu0 0
      %2067 = vmatpush1.bf16.xpose.msra.mxu0 0
      %2068 = vmatprep.subr.bf16.mxu0 0
      %2069 = vmatpush1.bf16.xpose.msra.mxu0 0
      %2070 = vmatprep.subr.bf16.mxu0 0
      %2071 = vmatpush1.bf16.xpose.msra.mxu0 0
      %2072 = vmatprep.subr.bf16.mxu0 0
      %2073 = vmatpush1.bf16.xpose.msra.mxu0 0
      %2074 = vmatprep.subr.bf16.mxu0 0
      %2075 = vmatpush1.bf16.xpose.msra.mxu0 0
      %2076 = vmatprep.subr.bf16.mxu0 0
      %2077 = vmatpush1.bf16.xpose.msra.mxu0 %v2060
      %2078 = vmatprep.subr.bf16.mxu0 0
      %2079 = vmatpush2.bf16.xpose.msra.mxu0 0
      %2080 = vmatprep.subr.bf16.mxu0 0
      %2081 = vmatpush2.bf16.xpose.msra.mxu0 0
      %2082 = vmatprep.subr.bf16.mxu0 0
      %2083 = vmatpush2.bf16.xpose.msra.mxu0 0
      %2084 = vmatprep.subr.bf16.mxu0 0
      %2085 = vmatpush2.bf16.xpose.msra.mxu0 0
      %2086 = vmatprep.subr.bf16.mxu0 0
      %2087 = vmatpush2.bf16.xpose.msra.mxu0 0
      %2088 = vmatprep.subr.bf16.mxu0 0
      %2089 = vmatpush2.bf16.xpose.msra.mxu0 0
      %2090 = vmatprep.subr.bf16.mxu0 0
      %2091 = vmatpush2.bf16.xpose.msra.mxu0 0
      %2092 = vmatprep.subr.bf16.mxu0 0
      %2093 = vmatpush2.bf16.xpose.msra.mxu0 0
      %2094 = vmatprep.mubr.bf16.mxu0 0
      %2095 = vmatmul.mubr.bf16.gmra.mxu0 %v2057
      %v2096 = vpop.f32.mrf.mxu0
      %v2097 = vadd.f32 0.0, %v2096
      %v2098 = vpop.f32.mrf.mxu0
      %v2099 = vpop.f32.mrf.mxu0
      %v2100 = vpop.f32.mrf.mxu0
      %2101 = vdwg.mxu0
      %2102 = vrot.lane.b32.xlu0 %v1120, 112
      %v2103 = vpop.permute.xlu0 %2102
      %2104 = vrot.lane.b32.xlu0 %v1120, 80
      %v2105 = vpop.permute.xlu0 %2104
      %v2107 = vsel %vm1129, %v2103, 0
      %v2110 = vsel %vm1129, %v2105, 0
      %2112 = vmatprep.subr.bf16.mxu0 0
      %2113 = vmatpush1.bf16.xpose.msra.mxu0 0
      %2114 = vmatprep.subr.bf16.mxu0 0
      %2115 = vmatpush1.bf16.xpose.msra.mxu0 0
      %2116 = vmatprep.subr.bf16.mxu0 0
      %2117 = vmatpush1.bf16.xpose.msra.mxu0 0
      %2118 = vmatprep.subr.bf16.mxu0 0
      %2119 = vmatpush1.bf16.xpose.msra.mxu0 0
      %2120 = vmatprep.subr.bf16.mxu0 0
      %2121 = vmatpush1.bf16.xpose.msra.mxu0 0
      %2122 = vmatprep.subr.bf16.mxu0 0
      %2123 = vmatpush1.bf16.xpose.msra.mxu0 0
      %2124 = vmatprep.subr.bf16.mxu0 0
      %2125 = vmatpush1.bf16.xpose.msra.mxu0 0
      %2126 = vmatprep.subr.bf16.mxu0 0
      %2127 = vmatpush1.bf16.xpose.msra.mxu0 %v2110
      %2128 = vmatprep.subr.bf16.mxu0 0
      %2129 = vmatpush2.bf16.xpose.msra.mxu0 0
      %2130 = vmatprep.subr.bf16.mxu0 0
      %2131 = vmatpush2.bf16.xpose.msra.mxu0 0
      %2132 = vmatprep.subr.bf16.mxu0 0
      %2133 = vmatpush2.bf16.xpose.msra.mxu0 0
      %2134 = vmatprep.subr.bf16.mxu0 0
      %2135 = vmatpush2.bf16.xpose.msra.mxu0 0
      %2136 = vmatprep.subr.bf16.mxu0 0
      %2137 = vmatpush2.bf16.xpose.msra.mxu0 0
      %2138 = vmatprep.subr.bf16.mxu0 0
      %2139 = vmatpush2.bf16.xpose.msra.mxu0 0
      %2140 = vmatprep.subr.bf16.mxu0 0
      %2141 = vmatpush2.bf16.xpose.msra.mxu0 0
      %2142 = vmatprep.subr.bf16.mxu0 0
      %2143 = vmatpush2.bf16.xpose.msra.mxu0 0
      %2144 = vmatprep.mubr.bf16.mxu0 0
      %2145 = vmatmul.mubr.bf16.gmra.mxu0 %v2107
      %v2146 = vpop.f32.mrf.mxu0
      %v2147 = vadd.f32 0.0, %v2146
      %v2148 = vpop.f32.mrf.mxu0
      %v2149 = vpop.f32.mrf.mxu0
      %v2150 = vpop.f32.mrf.mxu0
      %2151 = vdwg.mxu0
      %2152 = vrot.lane.b32.xlu0 %v1121, 112
      %v2153 = vpop.permute.xlu0 %2152
      %2154 = vrot.lane.b32.xlu0 %v1121, 80
      %v2155 = vpop.permute.xlu0 %2154
      %v2157 = vsel %vm1129, %v2153, 0
      %v2160 = vsel %vm1129, %v2155, 0
      %2162 = vmatprep.subr.bf16.mxu0 0
      %2163 = vmatpush1.bf16.xpose.msra.mxu0 0
      %2164 = vmatprep.subr.bf16.mxu0 0
      %2165 = vmatpush1.bf16.xpose.msra.mxu0 0
      %2166 = vmatprep.subr.bf16.mxu0 0
      %2167 = vmatpush1.bf16.xpose.msra.mxu0 0
      %2168 = vmatprep.subr.bf16.mxu0 0
      %2169 = vmatpush1.bf16.xpose.msra.mxu0 0
      %2170 = vmatprep.subr.bf16.mxu0 0
      %2171 = vmatpush1.bf16.xpose.msra.mxu0 0
      %2172 = vmatprep.subr.bf16.mxu0 0
      %2173 = vmatpush1.bf16.xpose.msra.mxu0 0
      %2174 = vmatprep.subr.bf16.mxu0 0
      %2175 = vmatpush1.bf16.xpose.msra.mxu0 0
      %2176 = vmatprep.subr.bf16.mxu0 0
      %2177 = vmatpush1.bf16.xpose.msra.mxu0 %v2160
      %2178 = vmatprep.subr.bf16.mxu0 0
      %2179 = vmatpush2.bf16.xpose.msra.mxu0 0
      %2180 = vmatprep.subr.bf16.mxu0 0
      %2181 = vmatpush2.bf16.xpose.msra.mxu0 0
      %2182 = vmatprep.subr.bf16.mxu0 0
      %2183 = vmatpush2.bf16.xpose.msra.mxu0 0
      %2184 = vmatprep.subr.bf16.mxu0 0
      %2185 = vmatpush2.bf16.xpose.msra.mxu0 0
      %2186 = vmatprep.subr.bf16.mxu0 0
      %2187 = vmatpush2.bf16.xpose.msra.mxu0 0
      %2188 = vmatprep.subr.bf16.mxu0 0
      %2189 = vmatpush2.bf16.xpose.msra.mxu0 0
      %2190 = vmatprep.subr.bf16.mxu0 0
      %2191 = vmatpush2.bf16.xpose.msra.mxu0 0
      %2192 = vmatprep.subr.bf16.mxu0 0
      %2193 = vmatpush2.bf16.xpose.msra.mxu0 0
      %2194 = vmatprep.mubr.bf16.mxu0 0
      %2195 = vmatmul.mubr.bf16.gmra.mxu0 %v2157
      %v2196 = vpop.f32.mrf.mxu0
      %v2197 = vadd.f32 0.0, %v2196
      %v2198 = vpop.f32.mrf.mxu0
      %v2199 = vpop.f32.mrf.mxu0
      %v2200 = vpop.f32.mrf.mxu0
      %2201 = vdwg.mxu0
      %2202 = vrot.lane.b32.xlu0 %v1122, 112
      %v2203 = vpop.permute.xlu0 %2202
      %2204 = vrot.lane.b32.xlu0 %v1122, 80
      %v2205 = vpop.permute.xlu0 %2204
      %v2207 = vsel %vm1129, %v2203, 0
      %v2210 = vsel %vm1129, %v2205, 0
      %2212 = vmatprep.subr.bf16.mxu0 0
      %2213 = vmatpush1.bf16.xpose.msra.mxu0 0
      %2214 = vmatprep.subr.bf16.mxu0 0
      %2215 = vmatpush1.bf16.xpose.msra.mxu0 0
      %2216 = vmatprep.subr.bf16.mxu0 0
      %2217 = vmatpush1.bf16.xpose.msra.mxu0 0
      %2218 = vmatprep.subr.bf16.mxu0 0
      %2219 = vmatpush1.bf16.xpose.msra.mxu0 0
      %2220 = vmatprep.subr.bf16.mxu0 0
      %2221 = vmatpush1.bf16.xpose.msra.mxu0 0
      %2222 = vmatprep.subr.bf16.mxu0 0
      %2223 = vmatpush1.bf16.xpose.msra.mxu0 0
      %2224 = vmatprep.subr.bf16.mxu0 0
      %2225 = vmatpush1.bf16.xpose.msra.mxu0 0
      %2226 = vmatprep.subr.bf16.mxu0 0
      %2227 = vmatpush1.bf16.xpose.msra.mxu0 %v2210
      %2228 = vmatprep.subr.bf16.mxu0 0
      %2229 = vmatpush2.bf16.xpose.msra.mxu0 0
      %2230 = vmatprep.subr.bf16.mxu0 0
      %2231 = vmatpush2.bf16.xpose.msra.mxu0 0
      %2232 = vmatprep.subr.bf16.mxu0 0
      %2233 = vmatpush2.bf16.xpose.msra.mxu0 0
      %2234 = vmatprep.subr.bf16.mxu0 0
      %2235 = vmatpush2.bf16.xpose.msra.mxu0 0
      %2236 = vmatprep.subr.bf16.mxu0 0
      %2237 = vmatpush2.bf16.xpose.msra.mxu0 0
      %2238 = vmatprep.subr.bf16.mxu0 0
      %2239 = vmatpush2.bf16.xpose.msra.mxu0 0
      %2240 = vmatprep.subr.bf16.mxu0 0
      %2241 = vmatpush2.bf16.xpose.msra.mxu0 0
      %2242 = vmatprep.subr.bf16.mxu0 0
      %2243 = vmatpush2.bf16.xpose.msra.mxu0 0
      %2244 = vmatprep.mubr.bf16.mxu0 0
      %2245 = vmatmul.mubr.bf16.gmra.mxu0 %v2207
      %v2246 = vpop.f32.mrf.mxu0
      %v2247 = vadd.f32 0.0, %v2246
      %v2248 = vpop.f32.mrf.mxu0
      %v2249 = vpop.f32.mrf.mxu0
      %v2250 = vpop.f32.mrf.mxu0
      %2251 = vdwg.mxu0
      %2252 = vrot.lane.b32.xlu0 %v1123, 112
      %v2253 = vpop.permute.xlu0 %2252
      %2254 = vrot.lane.b32.xlu0 %v1123, 80
      %v2255 = vpop.permute.xlu0 %2254
      %v2257 = vsel %vm1129, %v2253, 0
      %v2260 = vsel %vm1129, %v2255, 0
      %2262 = vmatprep.subr.bf16.mxu0 0
      %2263 = vmatpush1.bf16.xpose.msra.mxu0 0
      %2264 = vmatprep.subr.bf16.mxu0 0
      %2265 = vmatpush1.bf16.xpose.msra.mxu0 0
      %2266 = vmatprep.subr.bf16.mxu0 0
      %2267 = vmatpush1.bf16.xpose.msra.mxu0 0
      %2268 = vmatprep.subr.bf16.mxu0 0
      %2269 = vmatpush1.bf16.xpose.msra.mxu0 0
      %2270 = vmatprep.subr.bf16.mxu0 0
      %2271 = vmatpush1.bf16.xpose.msra.mxu0 0
      %2272 = vmatprep.subr.bf16.mxu0 0
      %2273 = vmatpush1.bf16.xpose.msra.mxu0 0
      %2274 = vmatprep.subr.bf16.mxu0 0
      %2275 = vmatpush1.bf16.xpose.msra.mxu0 0
      %2276 = vmatprep.subr.bf16.mxu0 0
      %2277 = vmatpush1.bf16.xpose.msra.mxu0 %v2260
      %2278 = vmatprep.subr.bf16.mxu0 0
      %2279 = vmatpush2.bf16.xpose.msra.mxu0 0
      %2280 = vmatprep.subr.bf16.mxu0 0
      %2281 = vmatpush2.bf16.xpose.msra.mxu0 0
      %2282 = vmatprep.subr.bf16.mxu0 0
      %2283 = vmatpush2.bf16.xpose.msra.mxu0 0
      %2284 = vmatprep.subr.bf16.mxu0 0
      %2285 = vmatpush2.bf16.xpose.msra.mxu0 0
      %2286 = vmatprep.subr.bf16.mxu0 0
      %2287 = vmatpush2.bf16.xpose.msra.mxu0 0
      %2288 = vmatprep.subr.bf16.mxu0 0
      %2289 = vmatpush2.bf16.xpose.msra.mxu0 0
      %2290 = vmatprep.subr.bf16.mxu0 0
      %2291 = vmatpush2.bf16.xpose.msra.mxu0 0
      %2292 = vmatprep.subr.bf16.mxu0 0
      %2293 = vmatpush2.bf16.xpose.msra.mxu0 0
      %2294 = vmatprep.mubr.bf16.mxu0 0
      %2295 = vmatmul.mubr.bf16.gmra.mxu0 %v2257
      %v2296 = vpop.f32.mrf.mxu0
      %v2297 = vadd.f32 0.0, %v2296
      %v2298 = vpop.f32.mrf.mxu0
      %v2299 = vpop.f32.mrf.mxu0
      %v2300 = vpop.f32.mrf.mxu0
      %2301 = vdwg.mxu0
      %2302 = vrot.lane.b32.xlu0 %v1124, 112
      %v2303 = vpop.permute.xlu0 %2302
      %2304 = vrot.lane.b32.xlu0 %v1124, 80
      %v2305 = vpop.permute.xlu0 %2304
      %v2307 = vsel %vm1129, %v2303, 0
      %v2310 = vsel %vm1129, %v2305, 0
      %2312 = vmatprep.subr.bf16.mxu0 0
      %2313 = vmatpush1.bf16.xpose.msra.mxu0 0
      %2314 = vmatprep.subr.bf16.mxu0 0
      %2315 = vmatpush1.bf16.xpose.msra.mxu0 0
      %2316 = vmatprep.subr.bf16.mxu0 0
      %2317 = vmatpush1.bf16.xpose.msra.mxu0 0
      %2318 = vmatprep.subr.bf16.mxu0 0
      %2319 = vmatpush1.bf16.xpose.msra.mxu0 0
      %2320 = vmatprep.subr.bf16.mxu0 0
      %2321 = vmatpush1.bf16.xpose.msra.mxu0 0
      %2322 = vmatprep.subr.bf16.mxu0 0
      %2323 = vmatpush1.bf16.xpose.msra.mxu0 0
      %2324 = vmatprep.subr.bf16.mxu0 0
      %2325 = vmatpush1.bf16.xpose.msra.mxu0 0
      %2326 = vmatprep.subr.bf16.mxu0 0
      %2327 = vmatpush1.bf16.xpose.msra.mxu0 %v2310
      %2328 = vmatprep.subr.bf16.mxu0 0
      %2329 = vmatpush2.bf16.xpose.msra.mxu0 0
      %2330 = vmatprep.subr.bf16.mxu0 0
      %2331 = vmatpush2.bf16.xpose.msra.mxu0 0
      %2332 = vmatprep.subr.bf16.mxu0 0
      %2333 = vmatpush2.bf16.xpose.msra.mxu0 0
      %2334 = vmatprep.subr.bf16.mxu0 0
      %2335 = vmatpush2.bf16.xpose.msra.mxu0 0
      %2336 = vmatprep.subr.bf16.mxu0 0
      %2337 = vmatpush2.bf16.xpose.msra.mxu0 0
      %2338 = vmatprep.subr.bf16.mxu0 0
      %2339 = vmatpush2.bf16.xpose.msra.mxu0 0
      %2340 = vmatprep.subr.bf16.mxu0 0
      %2341 = vmatpush2.bf16.xpose.msra.mxu0 0
      %2342 = vmatprep.subr.bf16.mxu0 0
      %2343 = vmatpush2.bf16.xpose.msra.mxu0 0
      %2344 = vmatprep.mubr.bf16.mxu0 0
      %2345 = vmatmul.mubr.bf16.gmra.mxu0 %v2307
      %v2346 = vpop.f32.mrf.mxu0
      %v2347 = vadd.f32 0.0, %v2346
      %v2348 = vpop.f32.mrf.mxu0
      %v2349 = vpop.f32.mrf.mxu0
      %v2350 = vpop.f32.mrf.mxu0
      %2351 = vdwg.mxu0
      %2352 = vrot.lane.b32.xlu0 %v1125, 112
      %v2353 = vpop.permute.xlu0 %2352
      %2354 = vrot.lane.b32.xlu0 %v1125, 80
      %v2355 = vpop.permute.xlu0 %2354
      %v2357 = vsel %vm1129, %v2353, 0
      %v2360 = vsel %vm1129, %v2355, 0
      %2362 = vmatprep.subr.bf16.mxu0 0
      %2363 = vmatpush1.bf16.xpose.msra.mxu0 0
      %2364 = vmatprep.subr.bf16.mxu0 0
      %2365 = vmatpush1.bf16.xpose.msra.mxu0 0
      %2366 = vmatprep.subr.bf16.mxu0 0
      %2367 = vmatpush1.bf16.xpose.msra.mxu0 0
      %2368 = vmatprep.subr.bf16.mxu0 0
      %2369 = vmatpush1.bf16.xpose.msra.mxu0 0
      %2370 = vmatprep.subr.bf16.mxu0 0
      %2371 = vmatpush1.bf16.xpose.msra.mxu0 0
      %2372 = vmatprep.subr.bf16.mxu0 0
      %2373 = vmatpush1.bf16.xpose.msra.mxu0 0
      %2374 = vmatprep.subr.bf16.mxu0 0
      %2375 = vmatpush1.bf16.xpose.msra.mxu0 0
      %2376 = vmatprep.subr.bf16.mxu0 0
      %2377 = vmatpush1.bf16.xpose.msra.mxu0 %v2360
      %2378 = vmatprep.subr.bf16.mxu0 0
      %2379 = vmatpush2.bf16.xpose.msra.mxu0 0
      %2380 = vmatprep.subr.bf16.mxu0 0
      %2381 = vmatpush2.bf16.xpose.msra.mxu0 0
      %2382 = vmatprep.subr.bf16.mxu0 0
      %2383 = vmatpush2.bf16.xpose.msra.mxu0 0
      %2384 = vmatprep.subr.bf16.mxu0 0
      %2385 = vmatpush2.bf16.xpose.msra.mxu0 0
      %2386 = vmatprep.subr.bf16.mxu0 0
      %2387 = vmatpush2.bf16.xpose.msra.mxu0 0
      %2388 = vmatprep.subr.bf16.mxu0 0
      %2389 = vmatpush2.bf16.xpose.msra.mxu0 0
      %2390 = vmatprep.subr.bf16.mxu0 0
      %2391 = vmatpush2.bf16.xpose.msra.mxu0 0
      %2392 = vmatprep.subr.bf16.mxu0 0
      %2393 = vmatpush2.bf16.xpose.msra.mxu0 0
      %2394 = vmatprep.mubr.bf16.mxu0 0
      %2395 = vmatmul.mubr.bf16.gmra.mxu0 %v2357
      %v2396 = vpop.f32.mrf.mxu0
      %v2397 = vadd.f32 0.0, %v2396
      %v2398 = vpop.f32.mrf.mxu0
      %v2399 = vpop.f32.mrf.mxu0
      %v2400 = vpop.f32.mrf.mxu0
      %2401 = vdwg.mxu0
      %v2402 = vsel %vm1519, %v2047, -inf
      %2403 = vmax.xlane.f32.xlu0 %v2402
      %v2404 = vpop.xlane.xlu0 %2403
      %v2405 = vsel %vm1519, %v2097, -inf
      %2406 = vmax.xlane.f32.xlu0 %v2405
      %v2407 = vpop.xlane.xlu0 %2406
      %v2408 = vsel %vm1519, %v2147, -inf
      %2409 = vmax.xlane.f32.xlu0 %v2408
      %v2410 = vpop.xlane.xlu0 %2409
      %v2411 = vsel %vm1519, %v2197, -inf
      %2412 = vmax.xlane.f32.xlu0 %v2411
      %v2413 = vpop.xlane.xlu0 %2412
      %v2414 = vsel %vm1519, %v2247, -inf
      %2415 = vmax.xlane.f32.xlu0 %v2414
      %v2416 = vpop.xlane.xlu0 %2415
      %v2417 = vsel %vm1519, %v2297, -inf
      %2418 = vmax.xlane.f32.xlu0 %v2417
      %v2419 = vpop.xlane.xlu0 %2418
      %v2420 = vsel %vm1519, %v2347, -inf
      %2421 = vmax.xlane.f32.xlu0 %v2420
      %v2422 = vpop.xlane.xlu0 %2421
      %v2423 = vsel %vm1519, %v2397, -inf
      %2424 = vmax.xlane.f32.xlu0 %v2423
      %v2425 = vpop.xlane.xlu0 %2424
      %v2426 = vsub.f32 %v2047, %v2404
      %v2427 = vsub.f32 %v2097, %v2407
      %v2428 = vsub.f32 %v2147, %v2410
      %v2429 = vsub.f32 %v2197, %v2413
      %v2430 = vsub.f32 %v2247, %v2416
      %v2431 = vsub.f32 %v2297, %v2419
      %v2432 = vsub.f32 %v2347, %v2422
      %v2433 = vsub.f32 %v2397, %v2425
      %v2434 = vmul.f32 %v2426, 1.442695
      %v2435 = vpow.pop %v2434
      %v2436 = vmul.f32 %v2427, 1.442695
      %v2437 = vpow.pop %v2436
      %v2438 = vmul.f32 %v2428, 1.442695
      %v2439 = vpow.pop %v2438
      %v2440 = vmul.f32 %v2429, 1.442695
      %v2441 = vpow.pop %v2440
      %v2442 = vmul.f32 %v2430, 1.442695
      %v2443 = vpow.pop %v2442
      %v2444 = vmul.f32 %v2431, 1.442695
      %v2445 = vpow.pop %v2444
      %v2446 = vmul.f32 %v2432, 1.442695
      %v2447 = vpow.pop %v2446
      %v2448 = vmul.f32 %v2433, 1.442695
      %v2449 = vpow.pop %v2448
      %v2450 = vsel %vm1519, %v2435, 0.0
      %2451 = vadd.xlane.f32.xlu0 %v2450
      %v2452 = vpop.xlane.xlu0 %2451
      %v2453 = vsel %vm1519, %v2437, 0.0
      %2454 = vadd.xlane.f32.xlu0 %v2453
      %v2455 = vpop.xlane.xlu0 %2454
      %v2456 = vsel %vm1519, %v2439, 0.0
      %2457 = vadd.xlane.f32.xlu0 %v2456
      %v2458 = vpop.xlane.xlu0 %2457
      %v2459 = vsel %vm1519, %v2441, 0.0
      %2460 = vadd.xlane.f32.xlu0 %v2459
      %v2461 = vpop.xlane.xlu0 %2460
      %v2462 = vsel %vm1519, %v2443, 0.0
      %2463 = vadd.xlane.f32.xlu0 %v2462
      %v2464 = vpop.xlane.xlu0 %2463
      %v2465 = vsel %vm1519, %v2445, 0.0
      %2466 = vadd.xlane.f32.xlu0 %v2465
      %v2467 = vpop.xlane.xlu0 %2466
      %v2468 = vsel %vm1519, %v2447, 0.0
      %2469 = vadd.xlane.f32.xlu0 %v2468
      %v2470 = vpop.xlane.xlu0 %2469
      %v2471 = vsel %vm1519, %v2449, 0.0
      %2472 = vadd.xlane.f32.xlu0 %v2471
      %v2473 = vpop.xlane.xlu0 %2472
      %v2474 = vrcp.pop %v2452
      %v2475 = vrcp.pop %v2455
      %v2476 = vrcp.pop %v2458
      %v2477 = vrcp.pop %v2461
      %v2478 = vrcp.pop %v2464
      %v2479 = vrcp.pop %v2467
      %v2480 = vrcp.pop %v2470
      %v2481 = vrcp.pop %v2473
      %v2482 = vmul.f32 %v2435, %v2474
      %v2483 = vmul.f32 %v2437, %v2475
      %v2484 = vmul.f32 %v2439, %v2476
      %v2485 = vmul.f32 %v2441, %v2477
      %v2486 = vmul.f32 %v2443, %v2478
      %v2487 = vmul.f32 %v2445, %v2479
      %v2488 = vmul.f32 %v2447, %v2480
      %v2489 = vmul.f32 %v2449, %v2481
      %v2490 = vpack.c.bf16 %v2482, %v2482
      %v2491 = vpack.c.bf16 %v2483, %v2483
      %v2492 = vpack.c.bf16 %v2484, %v2484
      %v2493 = vpack.c.bf16 %v2485, %v2485
      %v2494 = vpack.c.bf16 %v2486, %v2486
      %v2495 = vpack.c.bf16 %v2487, %v2487
      %v2496 = vpack.c.bf16 %v2488, %v2488
      %v2497 = vpack.c.bf16 %v2489, %v2489
      %2498 = vrot.lane.b32.xlu0 %v1118, 48
      %v2499 = vpop.permute.xlu0 %2498
      %v2501 = vsel %vm1618, %v2490, 0
      %v2504 = vsel %vm1622, %v2499, 0
      %2506 = vmatprep.subr.bf16.mxu0 0
      %2507 = vmatpush1.bf16.msra.mxu0 0
      %2508 = vmatprep.subr.bf16.mxu0 0
      %2509 = vmatpush1.bf16.msra.mxu0 0
      %2510 = vmatprep.subr.bf16.mxu0 0
      %2511 = vmatpush1.bf16.msra.mxu0 0
      %2512 = vmatprep.subr.bf16.mxu0 0
      %2513 = vmatpush1.bf16.msra.mxu0 0
      %2514 = vmatprep.subr.bf16.mxu0 0
      %2515 = vmatpush1.bf16.msra.mxu0 0
      %2516 = vmatprep.subr.bf16.mxu0 0
      %2517 = vmatpush1.bf16.msra.mxu0 0
      %2518 = vmatprep.subr.bf16.mxu0 0
      %2519 = vmatpush1.bf16.msra.mxu0 0
      %2520 = vmatprep.subr.bf16.mxu0 0
      %2521 = vmatpush1.bf16.msra.mxu0 %v2504
      %2522 = vmatprep.subr.bf16.mxu0 0
      %2523 = vmatpush2.bf16.msra.mxu0 0
      %2524 = vmatprep.subr.bf16.mxu0 0
      %2525 = vmatpush2.bf16.msra.mxu0 0
      %2526 = vmatprep.subr.bf16.mxu0 0
      %2527 = vmatpush2.bf16.msra.mxu0 0
      %2528 = vmatprep.subr.bf16.mxu0 0
      %2529 = vmatpush2.bf16.msra.mxu0 0
      %2530 = vmatprep.subr.bf16.mxu0 0
      %2531 = vmatpush2.bf16.msra.mxu0 0
      %2532 = vmatprep.subr.bf16.mxu0 0
      %2533 = vmatpush2.bf16.msra.mxu0 0
      %2534 = vmatprep.subr.bf16.mxu0 0
      %2535 = vmatpush2.bf16.msra.mxu0 0
      %2536 = vmatprep.subr.bf16.mxu0 0
      %2537 = vmatpush2.bf16.msra.mxu0 0
      %2538 = vmatprep.mubr.bf16.mxu0 0
      %2539 = vmatmul.mubr.bf16.gmra.mxu0 %v2501
      %v2540 = vpop.f32.mrf.mxu0
      %v2541 = vadd.f32 0.0, %v2540
      %v2542 = vpop.f32.mrf.mxu0
      %v2543 = vpop.f32.mrf.mxu0
      %v2544 = vpop.f32.mrf.mxu0
      %2545 = vdwg.mxu0
      %2546 = vrot.lane.b32.xlu0 %v1119, 48
      %v2547 = vpop.permute.xlu0 %2546
      %v2549 = vsel %vm1618, %v2491, 0
      %v2552 = vsel %vm1622, %v2547, 0
      %2554 = vmatprep.subr.bf16.mxu0 0
      %2555 = vmatpush1.bf16.msra.mxu0 0
      %2556 = vmatprep.subr.bf16.mxu0 0
      %2557 = vmatpush1.bf16.msra.mxu0 0
      %2558 = vmatprep.subr.bf16.mxu0 0
      %2559 = vmatpush1.bf16.msra.mxu0 0
      %2560 = vmatprep.subr.bf16.mxu0 0
      %2561 = vmatpush1.bf16.msra.mxu0 0
      %2562 = vmatprep.subr.bf16.mxu0 0
      %2563 = vmatpush1.bf16.msra.mxu0 0
      %2564 = vmatprep.subr.bf16.mxu0 0
      %2565 = vmatpush1.bf16.msra.mxu0 0
      %2566 = vmatprep.subr.bf16.mxu0 0
      %2567 = vmatpush1.bf16.msra.mxu0 0
      %2568 = vmatprep.subr.bf16.mxu0 0
      %2569 = vmatpush1.bf16.msra.mxu0 %v2552
      %2570 = vmatprep.subr.bf16.mxu0 0
      %2571 = vmatpush2.bf16.msra.mxu0 0
      %2572 = vmatprep.subr.bf16.mxu0 0
      %2573 = vmatpush2.bf16.msra.mxu0 0
      %2574 = vmatprep.subr.bf16.mxu0 0
      %2575 = vmatpush2.bf16.msra.mxu0 0
      %2576 = vmatprep.subr.bf16.mxu0 0
      %2577 = vmatpush2.bf16.msra.mxu0 0
      %2578 = vmatprep.subr.bf16.mxu0 0
      %2579 = vmatpush2.bf16.msra.mxu0 0
      %2580 = vmatprep.subr.bf16.mxu0 0
      %2581 = vmatpush2.bf16.msra.mxu0 0
      %2582 = vmatprep.subr.bf16.mxu0 0
      %2583 = vmatpush2.bf16.msra.mxu0 0
      %2584 = vmatprep.subr.bf16.mxu0 0
      %2585 = vmatpush2.bf16.msra.mxu0 0
      %2586 = vmatprep.mubr.bf16.mxu0 0
      %2587 = vmatmul.mubr.bf16.gmra.mxu0 %v2549
      %v2588 = vpop.f32.mrf.mxu0
      %v2589 = vadd.f32 0.0, %v2588
      %v2590 = vpop.f32.mrf.mxu0
      %v2591 = vpop.f32.mrf.mxu0
      %v2592 = vpop.f32.mrf.mxu0
      %2593 = vdwg.mxu0
      %2594 = vrot.lane.b32.xlu0 %v1120, 48
      %v2595 = vpop.permute.xlu0 %2594
      %v2597 = vsel %vm1618, %v2492, 0
      %v2600 = vsel %vm1622, %v2595, 0
      %2602 = vmatprep.subr.bf16.mxu0 0
      %2603 = vmatpush1.bf16.msra.mxu0 0
      %2604 = vmatprep.subr.bf16.mxu0 0
      %2605 = vmatpush1.bf16.msra.mxu0 0
      %2606 = vmatprep.subr.bf16.mxu0 0
      %2607 = vmatpush1.bf16.msra.mxu0 0
      %2608 = vmatprep.subr.bf16.mxu0 0
      %2609 = vmatpush1.bf16.msra.mxu0 0
      %2610 = vmatprep.subr.bf16.mxu0 0
      %2611 = vmatpush1.bf16.msra.mxu0 0
      %2612 = vmatprep.subr.bf16.mxu0 0
      %2613 = vmatpush1.bf16.msra.mxu0 0
      %2614 = vmatprep.subr.bf16.mxu0 0
      %2615 = vmatpush1.bf16.msra.mxu0 0
      %2616 = vmatprep.subr.bf16.mxu0 0
      %2617 = vmatpush1.bf16.msra.mxu0 %v2600
      %2618 = vmatprep.subr.bf16.mxu0 0
      %2619 = vmatpush2.bf16.msra.mxu0 0
      %2620 = vmatprep.subr.bf16.mxu0 0
      %2621 = vmatpush2.bf16.msra.mxu0 0
      %2622 = vmatprep.subr.bf16.mxu0 0
      %2623 = vmatpush2.bf16.msra.mxu0 0
      %2624 = vmatprep.subr.bf16.mxu0 0
      %2625 = vmatpush2.bf16.msra.mxu0 0
      %2626 = vmatprep.subr.bf16.mxu0 0
      %2627 = vmatpush2.bf16.msra.mxu0 0
      %2628 = vmatprep.subr.bf16.mxu0 0
      %2629 = vmatpush2.bf16.msra.mxu0 0
      %2630 = vmatprep.subr.bf16.mxu0 0
      %2631 = vmatpush2.bf16.msra.mxu0 0
      %2632 = vmatprep.subr.bf16.mxu0 0
      %2633 = vmatpush2.bf16.msra.mxu0 0
      %2634 = vmatprep.mubr.bf16.mxu0 0
      %2635 = vmatmul.mubr.bf16.gmra.mxu0 %v2597
      %v2636 = vpop.f32.mrf.mxu0
      %v2637 = vadd.f32 0.0, %v2636
      %v2638 = vpop.f32.mrf.mxu0
      %v2639 = vpop.f32.mrf.mxu0
      %v2640 = vpop.f32.mrf.mxu0
      %2641 = vdwg.mxu0
      %2642 = vrot.lane.b32.xlu0 %v1121, 48
      %v2643 = vpop.permute.xlu0 %2642
      %v2645 = vsel %vm1618, %v2493, 0
      %v2648 = vsel %vm1622, %v2643, 0
      %2650 = vmatprep.subr.bf16.mxu0 0
      %2651 = vmatpush1.bf16.msra.mxu0 0
      %2652 = vmatprep.subr.bf16.mxu0 0
      %2653 = vmatpush1.bf16.msra.mxu0 0
      %2654 = vmatprep.subr.bf16.mxu0 0
      %2655 = vmatpush1.bf16.msra.mxu0 0
      %2656 = vmatprep.subr.bf16.mxu0 0
      %2657 = vmatpush1.bf16.msra.mxu0 0
      %2658 = vmatprep.subr.bf16.mxu0 0
      %2659 = vmatpush1.bf16.msra.mxu0 0
      %2660 = vmatprep.subr.bf16.mxu0 0
      %2661 = vmatpush1.bf16.msra.mxu0 0
      %2662 = vmatprep.subr.bf16.mxu0 0
      %2663 = vmatpush1.bf16.msra.mxu0 0
      %2664 = vmatprep.subr.bf16.mxu0 0
      %2665 = vmatpush1.bf16.msra.mxu0 %v2648
      %2666 = vmatprep.subr.bf16.mxu0 0
      %2667 = vmatpush2.bf16.msra.mxu0 0
      %2668 = vmatprep.subr.bf16.mxu0 0
      %2669 = vmatpush2.bf16.msra.mxu0 0
      %2670 = vmatprep.subr.bf16.mxu0 0
      %2671 = vmatpush2.bf16.msra.mxu0 0
      %2672 = vmatprep.subr.bf16.mxu0 0
      %2673 = vmatpush2.bf16.msra.mxu0 0
      %2674 = vmatprep.subr.bf16.mxu0 0
      %2675 = vmatpush2.bf16.msra.mxu0 0
      %2676 = vmatprep.subr.bf16.mxu0 0
      %2677 = vmatpush2.bf16.msra.mxu0 0
      %2678 = vmatprep.subr.bf16.mxu0 0
      %2679 = vmatpush2.bf16.msra.mxu0 0
      %2680 = vmatprep.subr.bf16.mxu0 0
      %2681 = vmatpush2.bf16.msra.mxu0 0
      %2682 = vmatprep.mubr.bf16.mxu0 0
      %2683 = vmatmul.mubr.bf16.gmra.mxu0 %v2645
      %v2684 = vpop.f32.mrf.mxu0
      %v2685 = vadd.f32 0.0, %v2684
      %v2686 = vpop.f32.mrf.mxu0
      %v2687 = vpop.f32.mrf.mxu0
      %v2688 = vpop.f32.mrf.mxu0
      %2689 = vdwg.mxu0
      %2690 = vrot.lane.b32.xlu0 %v1122, 48
      %v2691 = vpop.permute.xlu0 %2690
      %v2693 = vsel %vm1618, %v2494, 0
      %v2696 = vsel %vm1622, %v2691, 0
      %2698 = vmatprep.subr.bf16.mxu0 0
      %2699 = vmatpush1.bf16.msra.mxu0 0
      %2700 = vmatprep.subr.bf16.mxu0 0
      %2701 = vmatpush1.bf16.msra.mxu0 0
      %2702 = vmatprep.subr.bf16.mxu0 0
      %2703 = vmatpush1.bf16.msra.mxu0 0
      %2704 = vmatprep.subr.bf16.mxu0 0
      %2705 = vmatpush1.bf16.msra.mxu0 0
      %2706 = vmatprep.subr.bf16.mxu0 0
      %2707 = vmatpush1.bf16.msra.mxu0 0
      %2708 = vmatprep.subr.bf16.mxu0 0
      %2709 = vmatpush1.bf16.msra.mxu0 0
      %2710 = vmatprep.subr.bf16.mxu0 0
      %2711 = vmatpush1.bf16.msra.mxu0 0
      %2712 = vmatprep.subr.bf16.mxu0 0
      %2713 = vmatpush1.bf16.msra.mxu0 %v2696
      %2714 = vmatprep.subr.bf16.mxu0 0
      %2715 = vmatpush2.bf16.msra.mxu0 0
      %2716 = vmatprep.subr.bf16.mxu0 0
      %2717 = vmatpush2.bf16.msra.mxu0 0
      %2718 = vmatprep.subr.bf16.mxu0 0
      %2719 = vmatpush2.bf16.msra.mxu0 0
      %2720 = vmatprep.subr.bf16.mxu0 0
      %2721 = vmatpush2.bf16.msra.mxu0 0
      %2722 = vmatprep.subr.bf16.mxu0 0
      %2723 = vmatpush2.bf16.msra.mxu0 0
      %2724 = vmatprep.subr.bf16.mxu0 0
      %2725 = vmatpush2.bf16.msra.mxu0 0
      %2726 = vmatprep.subr.bf16.mxu0 0
      %2727 = vmatpush2.bf16.msra.mxu0 0
      %2728 = vmatprep.subr.bf16.mxu0 0
      %2729 = vmatpush2.bf16.msra.mxu0 0
      %2730 = vmatprep.mubr.bf16.mxu0 0
      %2731 = vmatmul.mubr.bf16.gmra.mxu0 %v2693
      %v2732 = vpop.f32.mrf.mxu0
      %v2733 = vadd.f32 0.0, %v2732
      %v2734 = vpop.f32.mrf.mxu0
      %v2735 = vpop.f32.mrf.mxu0
      %v2736 = vpop.f32.mrf.mxu0
      %2737 = vdwg.mxu0
      %2738 = vrot.lane.b32.xlu0 %v1123, 48
      %v2739 = vpop.permute.xlu0 %2738
      %v2741 = vsel %vm1618, %v2495, 0
      %v2744 = vsel %vm1622, %v2739, 0
      %2746 = vmatprep.subr.bf16.mxu0 0
      %2747 = vmatpush1.bf16.msra.mxu0 0
      %2748 = vmatprep.subr.bf16.mxu0 0
      %2749 = vmatpush1.bf16.msra.mxu0 0
      %2750 = vmatprep.subr.bf16.mxu0 0
      %2751 = vmatpush1.bf16.msra.mxu0 0
      %2752 = vmatprep.subr.bf16.mxu0 0
      %2753 = vmatpush1.bf16.msra.mxu0 0
      %2754 = vmatprep.subr.bf16.mxu0 0
      %2755 = vmatpush1.bf16.msra.mxu0 0
      %2756 = vmatprep.subr.bf16.mxu0 0
      %2757 = vmatpush1.bf16.msra.mxu0 0
      %2758 = vmatprep.subr.bf16.mxu0 0
      %2759 = vmatpush1.bf16.msra.mxu0 0
      %2760 = vmatprep.subr.bf16.mxu0 0
      %2761 = vmatpush1.bf16.msra.mxu0 %v2744
      %2762 = vmatprep.subr.bf16.mxu0 0
      %2763 = vmatpush2.bf16.msra.mxu0 0
      %2764 = vmatprep.subr.bf16.mxu0 0
      %2765 = vmatpush2.bf16.msra.mxu0 0
      %2766 = vmatprep.subr.bf16.mxu0 0
      %2767 = vmatpush2.bf16.msra.mxu0 0
      %2768 = vmatprep.subr.bf16.mxu0 0
      %2769 = vmatpush2.bf16.msra.mxu0 0
      %2770 = vmatprep.subr.bf16.mxu0 0
      %2771 = vmatpush2.bf16.msra.mxu0 0
      %2772 = vmatprep.subr.bf16.mxu0 0
      %2773 = vmatpush2.bf16.msra.mxu0 0
      %2774 = vmatprep.subr.bf16.mxu0 0
      %2775 = vmatpush2.bf16.msra.mxu0 0
      %2776 = vmatprep.subr.bf16.mxu0 0
      %2777 = vmatpush2.bf16.msra.mxu0 0
      %2778 = vmatprep.mubr.bf16.mxu0 0
      %2779 = vmatmul.mubr.bf16.gmra.mxu0 %v2741
      %v2780 = vpop.f32.mrf.mxu0
      %v2781 = vadd.f32 0.0, %v2780
      %v2782 = vpop.f32.mrf.mxu0
      %v2783 = vpop.f32.mrf.mxu0
      %v2784 = vpop.f32.mrf.mxu0
      %2785 = vdwg.mxu0
      %2786 = vrot.lane.b32.xlu0 %v1124, 48
      %v2787 = vpop.permute.xlu0 %2786
      %v2789 = vsel %vm1618, %v2496, 0
      %v2792 = vsel %vm1622, %v2787, 0
      %2794 = vmatprep.subr.bf16.mxu0 0
      %2795 = vmatpush1.bf16.msra.mxu0 0
      %2796 = vmatprep.subr.bf16.mxu0 0
      %2797 = vmatpush1.bf16.msra.mxu0 0
      %2798 = vmatprep.subr.bf16.mxu0 0
      %2799 = vmatpush1.bf16.msra.mxu0 0
      %2800 = vmatprep.subr.bf16.mxu0 0
      %2801 = vmatpush1.bf16.msra.mxu0 0
      %2802 = vmatprep.subr.bf16.mxu0 0
      %2803 = vmatpush1.bf16.msra.mxu0 0
      %2804 = vmatprep.subr.bf16.mxu0 0
      %2805 = vmatpush1.bf16.msra.mxu0 0
      %2806 = vmatprep.subr.bf16.mxu0 0
      %2807 = vmatpush1.bf16.msra.mxu0 0
      %2808 = vmatprep.subr.bf16.mxu0 0
      %2809 = vmatpush1.bf16.msra.mxu0 %v2792
      %2810 = vmatprep.subr.bf16.mxu0 0
      %2811 = vmatpush2.bf16.msra.mxu0 0
      %2812 = vmatprep.subr.bf16.mxu0 0
      %2813 = vmatpush2.bf16.msra.mxu0 0
      %2814 = vmatprep.subr.bf16.mxu0 0
      %2815 = vmatpush2.bf16.msra.mxu0 0
      %2816 = vmatprep.subr.bf16.mxu0 0
      %2817 = vmatpush2.bf16.msra.mxu0 0
      %2818 = vmatprep.subr.bf16.mxu0 0
      %2819 = vmatpush2.bf16.msra.mxu0 0
      %2820 = vmatprep.subr.bf16.mxu0 0
      %2821 = vmatpush2.bf16.msra.mxu0 0
      %2822 = vmatprep.subr.bf16.mxu0 0
      %2823 = vmatpush2.bf16.msra.mxu0 0
      %2824 = vmatprep.subr.bf16.mxu0 0
      %2825 = vmatpush2.bf16.msra.mxu0 0
      %2826 = vmatprep.mubr.bf16.mxu0 0
      %2827 = vmatmul.mubr.bf16.gmra.mxu0 %v2789
      %v2828 = vpop.f32.mrf.mxu0
      %v2829 = vadd.f32 0.0, %v2828
      %v2830 = vpop.f32.mrf.mxu0
      %v2831 = vpop.f32.mrf.mxu0
      %v2832 = vpop.f32.mrf.mxu0
      %2833 = vdwg.mxu0
      %2834 = vrot.lane.b32.xlu0 %v1125, 48
      %v2835 = vpop.permute.xlu0 %2834
      %v2837 = vsel %vm1618, %v2497, 0
      %v2840 = vsel %vm1622, %v2835, 0
      %2842 = vmatprep.subr.bf16.mxu0 0
      %2843 = vmatpush1.bf16.msra.mxu0 0
      %2844 = vmatprep.subr.bf16.mxu0 0
      %2845 = vmatpush1.bf16.msra.mxu0 0
      %2846 = vmatprep.subr.bf16.mxu0 0
      %2847 = vmatpush1.bf16.msra.mxu0 0
      %2848 = vmatprep.subr.bf16.mxu0 0
      %2849 = vmatpush1.bf16.msra.mxu0 0
      %2850 = vmatprep.subr.bf16.mxu0 0
      %2851 = vmatpush1.bf16.msra.mxu0 0
      %2852 = vmatprep.subr.bf16.mxu0 0
      %2853 = vmatpush1.bf16.msra.mxu0 0
      %2854 = vmatprep.subr.bf16.mxu0 0
      %2855 = vmatpush1.bf16.msra.mxu0 0
      %2856 = vmatprep.subr.bf16.mxu0 0
      %2857 = vmatpush1.bf16.msra.mxu0 %v2840
      %2858 = vmatprep.subr.bf16.mxu0 0
      %2859 = vmatpush2.bf16.msra.mxu0 0
      %2860 = vmatprep.subr.bf16.mxu0 0
      %2861 = vmatpush2.bf16.msra.mxu0 0
      %2862 = vmatprep.subr.bf16.mxu0 0
      %2863 = vmatpush2.bf16.msra.mxu0 0
      %2864 = vmatprep.subr.bf16.mxu0 0
      %2865 = vmatpush2.bf16.msra.mxu0 0
      %2866 = vmatprep.subr.bf16.mxu0 0
      %2867 = vmatpush2.bf16.msra.mxu0 0
      %2868 = vmatprep.subr.bf16.mxu0 0
      %2869 = vmatpush2.bf16.msra.mxu0 0
      %2870 = vmatprep.subr.bf16.mxu0 0
      %2871 = vmatpush2.bf16.msra.mxu0 0
      %2872 = vmatprep.subr.bf16.mxu0 0
      %2873 = vmatpush2.bf16.msra.mxu0 0
      %2874 = vmatprep.mubr.bf16.mxu0 0
      %2875 = vmatmul.mubr.bf16.gmra.mxu0 %v2837
      %v2876 = vpop.f32.mrf.mxu0
      %v2877 = vadd.f32 0.0, %v2876
      %v2878 = vpop.f32.mrf.mxu0
      %v2879 = vpop.f32.mrf.mxu0
      %v2880 = vpop.f32.mrf.mxu0
      %2881 = vdwg.mxu0
      %v2890 = vcombine.low %v1661, %v1709
      %v2891 = vcombine.low %v1757, %v1805
      %v2892 = vcombine.low %v1853, %v1901
      %v2893 = vcombine.low %v1949, %v1997
      %v2906 = vcombine.low %v2541, %v2589
      %v2907 = vcombine.low %v2637, %v2685
      %v2908 = vcombine.low %v2733, %v2781
      %v2909 = vcombine.low %v2829, %v2877
      %2910 = vrot.lane.b32.xlu0 %v2906, 16
      %v2911 = vpop.permute.xlu0 %2910
      %2912 = vrot.lane.b32.xlu0 %v2907, 16
      %v2913 = vpop.permute.xlu0 %2912
      %2914 = vrot.lane.b32.xlu0 %v2908, 16
      %v2915 = vpop.permute.xlu0 %2914
      %2916 = vrot.lane.b32.xlu0 %v2909, 16
      %v2917 = vpop.permute.xlu0 %2916
      %v2922 = vsel %vm1129, %v2890, %v2911
      %v2923 = vsel %vm1129, %v2891, %v2913
      %v2924 = vsel %vm1129, %v2892, %v2915
      %v2925 = vsel %vm1129, %v2893, %v2917
      %v2926 = vpack.c.bf16 %v2923, %v2922
      %v2927 = vpack.c.bf16 %v2925, %v2924
      %v2928 = vld [vmem:[%s734] sm:$0xf]
      %v2929 = vld [vmem:[%s734 + $0x4] sm:$0xf]
      %v2930 = vld [vmem:[%s734 + $0x8] sm:$0xf]
      %v2931 = vld [vmem:[%s734 + $0xc] sm:$0xf]
      %v2936 = vunpack.c.l.b16 %v2928
      %v2937 = vunpack.c.l.b16 %v2929
      %v2938 = vunpack.c.l.b16 %v2930
      %v2939 = vunpack.c.l.b16 %v2931
      %v2940 = vpack.c.b16 %v2937, %v2936
      %v2941 = vpack.c.b16 %v2939, %v2938
      %v2945 = vsel %vm959, %v2926, 0
      %v2948 = vsel %vm959, %v2927, 0
      %2950 = vmatprep.subr.bf16.mxu0 0
      %2951 = vmatpush1.bf16.msra.mxu0 0
      %2952 = vmatprep.subr.bf16.mxu0 0
      %2953 = vmatpush1.bf16.msra.mxu0 0
      %2954 = vmatprep.subr.bf16.mxu0 0
      %2955 = vmatpush1.bf16.msra.mxu0 0
      %2956 = vmatprep.subr.bf16.mxu0 0
      %2957 = vmatpush1.bf16.msra.mxu0 0
      %2958 = vmatprep.subr.bf16.mxu0 0
      %2959 = vmatpush1.bf16.msra.mxu0 0
      %2960 = vmatprep.subr.bf16.mxu0 0
      %2961 = vmatpush1.bf16.msra.mxu0 0
      %2962 = vmatprep.subr.bf16.mxu0 0
      %2963 = vmatpush1.bf16.msra.mxu0 %v2941
      %2964 = vmatprep.subr.bf16.mxu0 0
      %2965 = vmatpush1.bf16.msra.mxu0 %v2940
      %2966 = vmatprep.subr.bf16.mxu0 0
      %2967 = vmatpush2.bf16.msra.mxu0 0
      %2968 = vmatprep.subr.bf16.mxu0 0
      %2969 = vmatpush2.bf16.msra.mxu0 0
      %2970 = vmatprep.subr.bf16.mxu0 0
      %2971 = vmatpush2.bf16.msra.mxu0 0
      %2972 = vmatprep.subr.bf16.mxu0 0
      %2973 = vmatpush2.bf16.msra.mxu0 0
      %2974 = vmatprep.subr.bf16.mxu0 0
      %2975 = vmatpush2.bf16.msra.mxu0 0
      %2976 = vmatprep.subr.bf16.mxu0 0
      %2977 = vmatpush2.bf16.msra.mxu0 0
      %2978 = vmatprep.subr.bf16.mxu0 0
      %2979 = vmatpush2.bf16.msra.mxu0 0
      %2980 = vmatprep.subr.bf16.mxu0 0
      %2981 = vmatpush2.bf16.msra.mxu0 0
      %2982 = vmatprep.mubr.bf16.mxu0 0
      %2983 = vmatmul.mubr.bf16.gmra.mxu0 %v2945
      %v2984 = vpop.f32.mrf.mxu0
      %v2985 = vadd.f32 0.0, %v2984
      %v2986 = vpop.f32.mrf.mxu0
      %v2987 = vpop.f32.mrf.mxu0
      %v2988 = vadd.f32 0.0, %v2987
      %v2989 = vpop.f32.mrf.mxu0
      %2990 = vmatprep.mubr.bf16.mxu0 0
      %2991 = vmatmul.mubr.bf16.gmra.mxu0 %v2948
      %v2992 = vpop.f32.mrf.mxu0
      %v2993 = vadd.f32 0.0, %v2992
      %v2994 = vpop.f32.mrf.mxu0
      %v2995 = vpop.f32.mrf.mxu0
      %v2996 = vadd.f32 0.0, %v2995
      %v2997 = vpop.f32.mrf.mxu0
      %2998 = vdwg.mxu0
      %v2999 = vadd.f32 %v953, %v2985
      %v3000 = vadd.f32 %v954, %v2988
      %v3001 = vadd.f32 %v955, %v2993
      %v3002 = vadd.f32 %v956, %v2996
      %v3003 = vld [vmem:[%s737] sm:$0x1]
      %v3005 = vlaneseq
      %v3006 = vshrl.u32 %v3005, 7
      %v3007 = vsub.s32 0, %v3006
      %v3008 = vrot.slane %v3003, %v3007
      %v3010 = vadd.f32 %v2999, %v3008
      %v3011 = vadd.f32 %v3000, %v3008
      %v3012 = vadd.f32 %v3001, %v3008
      %v3013 = vadd.f32 %v3002, %v3008
      %v3014 = vld [vmem:[%s740] sm:$0x1]
      %v3015 = vld [vmem:[%s743] sm:$0x1]
      %v3016 = vsel %vm959, %v3010, 0.0
      %3017 = vadd.xlane.f32.xlu0 %v3016
      %v3018 = vpop.xlane.xlu0 %3017
      %v3019 = vsel %vm959, %v3011, 0.0
      %3020 = vadd.xlane.f32.xlu0 %v3019
      %v3021 = vpop.xlane.xlu0 %3020
      %v3022 = vsel %vm959, %v3012, 0.0
      %3023 = vadd.xlane.f32.xlu0 %v3022
      %v3024 = vpop.xlane.xlu0 %3023
      %v3025 = vsel %vm959, %v3013, 0.0
      %3026 = vadd.xlane.f32.xlu0 %v3025
      %v3027 = vpop.xlane.xlu0 %3026
      %v3028 = vmul.f32 %v3018, %v972
      %v3029 = vmul.f32 %v3021, %v972
      %v3030 = vmul.f32 %v3024, %v972
      %v3031 = vmul.f32 %v3027, %v972
      %v3032 = vsub.f32 %v3010, %v3028
      %v3033 = vsub.f32 %v3011, %v3029
      %v3034 = vsub.f32 %v3012, %v3030
      %v3035 = vsub.f32 %v3013, %v3031
      %v3036 = vmul.f32 %v3032, %v3032
      %v3037 = vmul.f32 %v3033, %v3033
      %v3038 = vmul.f32 %v3034, %v3034
      %v3039 = vmul.f32 %v3035, %v3035
      %v3040 = vsel %vm959, %v3036, 0.0
      %3041 = vadd.xlane.f32.xlu0 %v3040
      %v3042 = vpop.xlane.xlu0 %3041
      %v3043 = vsel %vm959, %v3037, 0.0
      %3044 = vadd.xlane.f32.xlu0 %v3043
      %v3045 = vpop.xlane.xlu0 %3044
      %v3046 = vsel %vm959, %v3038, 0.0
      %3047 = vadd.xlane.f32.xlu0 %v3046
      %v3048 = vpop.xlane.xlu0 %3047
      %v3049 = vsel %vm959, %v3039, 0.0
      %3050 = vadd.xlane.f32.xlu0 %v3049
      %v3051 = vpop.xlane.xlu0 %3050
      %v3052 = vmul.f32 %v3042, %v972
      %v3053 = vmul.f32 %v3045, %v972
      %v3054 = vmul.f32 %v3048, %v972
      %v3055 = vmul.f32 %v3051, %v972
      %v3056 = vadd.f32 %v3052, 1e-05
      %v3057 = vadd.f32 %v3053, 1e-05
      %v3058 = vadd.f32 %v3054, 1e-05
      %v3059 = vadd.f32 %v3055, 1e-05
      %v3060 = vrsqrt.pop %v3056
      %v3061 = vrsqrt.pop %v3057
      %v3062 = vrsqrt.pop %v3058
      %v3063 = vrsqrt.pop %v3059
      %v3064 = vmul.f32 %v3032, %v3060
      %v3065 = vmul.f32 %v3033, %v3061
      %v3066 = vmul.f32 %v3034, %v3062
      %v3067 = vmul.f32 %v3035, %v3063
      %v3069 = vlaneseq
      %v3070 = vshrl.u32 %v3069, 7
      %v3071 = vsub.s32 0, %v3070
      %v3072 = vrot.slane %v3014, %v3071
      %v3074 = vmul.f32 %v3064, %v3072
      %v3075 = vmul.f32 %v3065, %v3072
      %v3076 = vmul.f32 %v3066, %v3072
      %v3077 = vmul.f32 %v3067, %v3072
      %v3079 = vlaneseq
      %v3080 = vshrl.u32 %v3079, 7
      %v3081 = vsub.s32 0, %v3080
      %v3082 = vrot.slane %v3015, %v3081
      %v3084 = vadd.f32 %v3074, %v3082
      %v3085 = vadd.f32 %v3075, %v3082
      %v3086 = vadd.f32 %v3076, %v3082
      %v3087 = vadd.f32 %v3077, %v3082
      %v3088 = vpack.c.bf16 %v3085, %v3084
      %v3089 = vpack.c.bf16 %v3087, %v3086
      %v3090 = vld [vmem:[%s748] sm:$0xf]
      %v3091 = vld [vmem:[%s748 + $0x4] sm:$0xf]
      %v3092 = vld [vmem:[%s748 + $0x8] sm:$0xf]
      %v3093 = vld [vmem:[%s748 + $0xc] sm:$0xf]
      %v3094 = vld [vmem:[%s751] sm:$0x1]
      %v3096 = vlaneseq
      %v3097 = vshrl.u32 %v3096, 7
      %v3098 = vsub.s32 0, %v3097
      %v3099 = vrot.slane %v3094, %v3098
      %v3105 = vunpack.c.l.b16 %v3090
      %v3106 = vunpack.c.l.b16 %v3091
      %v3107 = vunpack.c.l.b16 %v3092
      %v3108 = vunpack.c.l.b16 %v3093
      %v3109 = vpack.c.b16 %v3106, %v3105
      %v3110 = vpack.c.b16 %v3108, %v3107
      %v3114 = vsel %vm959, %v3088, 0
      %v3117 = vsel %vm959, %v3089, 0
      %3119 = vmatprep.subr.bf16.mxu0 0
      %3120 = vmatpush1.bf16.msra.mxu0 0
      %3121 = vmatprep.subr.bf16.mxu0 0
      %3122 = vmatpush1.bf16.msra.mxu0 0
      %3123 = vmatprep.subr.bf16.mxu0 0
      %3124 = vmatpush1.bf16.msra.mxu0 0
      %3125 = vmatprep.subr.bf16.mxu0 0
      %3126 = vmatpush1.bf16.msra.mxu0 0
      %3127 = vmatprep.subr.bf16.mxu0 0
      %3128 = vmatpush1.bf16.msra.mxu0 0
      %3129 = vmatprep.subr.bf16.mxu0 0
      %3130 = vmatpush1.bf16.msra.mxu0 0
      %3131 = vmatprep.subr.bf16.mxu0 0
      %3132 = vmatpush1.bf16.msra.mxu0 %v3110
      %3133 = vmatprep.subr.bf16.mxu0 0
      %3134 = vmatpush1.bf16.msra.mxu0 %v3109
      %3135 = vmatprep.subr.bf16.mxu0 0
      %3136 = vmatpush2.bf16.msra.mxu0 0
      %3137 = vmatprep.subr.bf16.mxu0 0
      %3138 = vmatpush2.bf16.msra.mxu0 0
      %3139 = vmatprep.subr.bf16.mxu0 0
      %3140 = vmatpush2.bf16.msra.mxu0 0
      %3141 = vmatprep.subr.bf16.mxu0 0
      %3142 = vmatpush2.bf16.msra.mxu0 0
      %3143 = vmatprep.subr.bf16.mxu0 0
      %3144 = vmatpush2.bf16.msra.mxu0 0
      %3145 = vmatprep.subr.bf16.mxu0 0
      %3146 = vmatpush2.bf16.msra.mxu0 0
      %3147 = vmatprep.subr.bf16.mxu0 0
      %3148 = vmatpush2.bf16.msra.mxu0 0
      %3149 = vmatprep.subr.bf16.mxu0 0
      %3150 = vmatpush2.bf16.msra.mxu0 0
      %3151 = vmatprep.mubr.bf16.mxu0 0
      %3152 = vmatmul.mubr.bf16.gmra.mxu0 %v3114
      %v3153 = vpop.f32.mrf.mxu0
      %v3154 = vadd.f32 %v3099, %v3153
      %v3155 = vpop.f32.mrf.mxu0
      %v3156 = vpop.f32.mrf.mxu0
      %v3157 = vadd.f32 %v3099, %v3156
      %v3158 = vpop.f32.mrf.mxu0
      %3159 = vmatprep.mubr.bf16.mxu0 0
      %3160 = vmatmul.mubr.bf16.gmra.mxu0 %v3117
      %v3161 = vpop.f32.mrf.mxu0
      %v3162 = vadd.f32 %v3099, %v3161
      %v3163 = vpop.f32.mrf.mxu0
      %v3164 = vpop.f32.mrf.mxu0
      %v3165 = vadd.f32 %v3099, %v3164
      %v3166 = vpop.f32.mrf.mxu0
      %3167 = vdwg.mxu0
      %v3168 = vmul.f32 %v3154, 0.5
      %v3169 = vmul.f32 %v3157, 0.5
      %v3170 = vmul.f32 %v3162, 0.5
      %v3171 = vmul.f32 %v3165, 0.5
      %v3172 = vmul.f32 %v3154, 0.70710677
      %v3173 = vmul.f32 %v3157, 0.70710677
      %v3174 = vmul.f32 %v3162, 0.70710677
      %v3175 = vmul.f32 %v3165, 0.70710677
      %v3176 = verf.f32.pop %v3172
      %v3177 = verf.f32.pop %v3173
      %v3178 = verf.f32.pop %v3174
      %v3179 = verf.f32.pop %v3175
      %v3180 = vadd.f32 %v3176, 1.0
      %v3181 = vadd.f32 %v3177, 1.0
      %v3182 = vadd.f32 %v3178, 1.0
      %v3183 = vadd.f32 %v3179, 1.0
      %v3184 = vmul.f32 %v3168, %v3180
      %v3185 = vmul.f32 %v3169, %v3181
      %v3186 = vmul.f32 %v3170, %v3182
      %v3187 = vmul.f32 %v3171, %v3183
      %v3188 = vpack.c.bf16 %v3185, %v3184
      %v3189 = vpack.c.bf16 %v3187, %v3186
      %v3190 = vld [vmem:[%s756] sm:$0xf]
      %v3191 = vld [vmem:[%s756 + $0x4] sm:$0xf]
      %v3192 = vld [vmem:[%s756 + $0x8] sm:$0xf]
      %v3193 = vld [vmem:[%s756 + $0xc] sm:$0xf]
      %v3194 = vld [vmem:[%s756 + $0x10] sm:$0xf]
      %v3195 = vld [vmem:[%s756 + $0x14] sm:$0xf]
      %v3196 = vld [vmem:[%s756 + $0x18] sm:$0xf]
      %v3197 = vld [vmem:[%s756 + $0x1c] sm:$0xf]
      %v3198 = vld [vmem:[%s756 + $0x20] sm:$0xf]
      %v3199 = vld [vmem:[%s756 + $0x24] sm:$0xf]
      %v3200 = vld [vmem:[%s756 + $0x28] sm:$0xf]
      %v3201 = vld [vmem:[%s756 + $0x2c] sm:$0xf]
      %v3202 = vld [vmem:[%s756 + $0x30] sm:$0xf]
      %v3203 = vld [vmem:[%s756 + $0x34] sm:$0xf]
      %v3204 = vld [vmem:[%s756 + $0x38] sm:$0xf]
      %v3205 = vld [vmem:[%s756 + $0x3c] sm:$0xf]
      %v3222 = vunpack.c.l.b16 %v3190
      %v3223 = vunpack.c.l.b16 %v3191
      %v3224 = vunpack.c.l.b16 %v3192
      %v3225 = vunpack.c.l.b16 %v3193
      %v3226 = vunpack.c.l.b16 %v3194
      %v3227 = vunpack.c.l.b16 %v3195
      %v3228 = vunpack.c.l.b16 %v3196
      %v3229 = vunpack.c.l.b16 %v3197
      %v3230 = vunpack.c.l.b16 %v3198
      %v3231 = vunpack.c.l.b16 %v3199
      %v3232 = vunpack.c.l.b16 %v3200
      %v3233 = vunpack.c.l.b16 %v3201
      %v3234 = vunpack.c.l.b16 %v3202
      %v3235 = vunpack.c.l.b16 %v3203
      %v3236 = vunpack.c.l.b16 %v3204
      %v3237 = vunpack.c.l.b16 %v3205
      %v3238 = vpack.c.b16 %v3223, %v3222
      %v3239 = vpack.c.b16 %v3225, %v3224
      %v3240 = vpack.c.b16 %v3227, %v3226
      %v3241 = vpack.c.b16 %v3229, %v3228
      %v3242 = vpack.c.b16 %v3231, %v3230
      %v3243 = vpack.c.b16 %v3233, %v3232
      %v3244 = vpack.c.b16 %v3235, %v3234
      %v3245 = vpack.c.b16 %v3237, %v3236
      %3254 = vmatprep.subr.bf16.mxu0 0
      %3255 = vmatpush1.bf16.msra.mxu0 %v3245
      %3256 = vmatprep.subr.bf16.mxu0 0
      %3257 = vmatpush1.bf16.msra.mxu0 %v3244
      %3258 = vmatprep.subr.bf16.mxu0 0
      %3259 = vmatpush1.bf16.msra.mxu0 %v3243
      %3260 = vmatprep.subr.bf16.mxu0 0
      %3261 = vmatpush1.bf16.msra.mxu0 %v3242
      %3262 = vmatprep.subr.bf16.mxu0 0
      %3263 = vmatpush1.bf16.msra.mxu0 %v3241
      %3264 = vmatprep.subr.bf16.mxu0 0
      %3265 = vmatpush1.bf16.msra.mxu0 %v3240
      %3266 = vmatprep.subr.bf16.mxu0 0
      %3267 = vmatpush1.bf16.msra.mxu0 %v3239
      %3268 = vmatprep.subr.bf16.mxu0 0
      %3269 = vmatpush1.bf16.msra.mxu0 %v3238
      %3270 = vmatprep.subr.bf16.mxu0 0
      %3271 = vmatpush2.bf16.msra.mxu0 0
      %3272 = vmatprep.subr.bf16.mxu0 0
      %3273 = vmatpush2.bf16.msra.mxu0 0
      %3274 = vmatprep.subr.bf16.mxu0 0
      %3275 = vmatpush2.bf16.msra.mxu0 0
      %3276 = vmatprep.subr.bf16.mxu0 0
      %3277 = vmatpush2.bf16.msra.mxu0 0
      %3278 = vmatprep.subr.bf16.mxu0 0
      %3279 = vmatpush2.bf16.msra.mxu0 0
      %3280 = vmatprep.subr.bf16.mxu0 0
      %3281 = vmatpush2.bf16.msra.mxu0 0
      %3282 = vmatprep.subr.bf16.mxu0 0
      %3283 = vmatpush2.bf16.msra.mxu0 0
      %3284 = vmatprep.subr.bf16.mxu0 0
      %3285 = vmatpush2.bf16.msra.mxu0 0
      %3286 = vmatprep.mubr.bf16.mxu0 0
      %3287 = vmatmul.mubr.bf16.gmra.mxu0 %v3188
      %v3288 = vpop.f32.mrf.mxu0
      %v3289 = vadd.f32 0.0, %v3288
      %v3290 = vpop.f32.mrf.mxu0
      %v3291 = vpop.f32.mrf.mxu0
      %v3292 = vadd.f32 0.0, %v3291
      %v3293 = vpop.f32.mrf.mxu0
      %3294 = vmatprep.mubr.bf16.mxu0 0
      %3295 = vmatmul.mubr.bf16.gmra.mxu0 %v3189
      %v3296 = vpop.f32.mrf.mxu0
      %v3297 = vadd.f32 0.0, %v3296
      %v3298 = vpop.f32.mrf.mxu0
      %v3299 = vpop.f32.mrf.mxu0
      %v3300 = vadd.f32 0.0, %v3299
      %v3301 = vpop.f32.mrf.mxu0
      %3302 = vdwg.mxu0
      %v3303 = vadd.f32 %v3010, %v3289
      %v3304 = vadd.f32 %v3011, %v3292
      %v3305 = vadd.f32 %v3012, %v3297
      %v3306 = vadd.f32 %v3013, %v3300
      %v3307 = vld [vmem:[%s759] sm:$0x1]
      %v3309 = vlaneseq
      %v3310 = vshrl.u32 %v3309, 7
      %v3311 = vsub.s32 0, %v3310
      %v3312 = vrot.slane %v3307, %v3311
      %v3314 = vadd.f32 %v3303, %v3312
      %v3315 = vadd.f32 %v3304, %v3312
      %v3316 = vadd.f32 %v3305, %v3312
      %v3317 = vadd.f32 %v3306, %v3312
      %3318 = vst.msk [vmem:[#allocation2] sm:$0xff] %vm959, %v3314
      %3319 = vst.msk [vmem:[#allocation2 + $0x8] sm:$0xff] %vm959, %v3315
      %3320 = vst.msk [vmem:[#allocation2 + $0x10] sm:$0xff] %vm959, %v3316
      %3321 = vst.msk [vmem:[#allocation2 + $0x18] sm:$0xff] %vm959, %v3317
      %p3322 = scmp.eq.s32.totalorder %s33, 1
      // Predicated region
      $region93: #{vivit_forward.2} parent=87 // pred_check
        %p3323 = pneg %p3322
      $region94: #{vivit_forward.2} parent=87 // pred_check_branch
        %3325 = sbr.rel (%p3323) target = $region96
      $region95: #{vivit_forward.2} parent=87 // pred_region
        %v3326 = vld [vmem:[%s15] sm:$0x1]
        %v3327 = vld [vmem:[%s16] sm:$0x1]
        %v3328 = vsel %vm959, %v3314, 0.0
        %3329 = vadd.xlane.f32.xlu0 %v3328
        %v3330 = vpop.xlane.xlu0 %3329
        %v3331 = vsel %vm959, %v3315, 0.0
        %3332 = vadd.xlane.f32.xlu0 %v3331
        %v3333 = vpop.xlane.xlu0 %3332
        %v3334 = vsel %vm959, %v3316, 0.0
        %3335 = vadd.xlane.f32.xlu0 %v3334
        %v3336 = vpop.xlane.xlu0 %3335
        %v3337 = vsel %vm959, %v3317, 0.0
        %3338 = vadd.xlane.f32.xlu0 %v3337
        %v3339 = vpop.xlane.xlu0 %3338
        %v3340 = vmul.f32 %v3330, %v972
        %v3341 = vmul.f32 %v3333, %v972
        %v3342 = vmul.f32 %v3336, %v972
        %v3343 = vmul.f32 %v3339, %v972
        %v3344 = vsub.f32 %v3314, %v3340
        %v3345 = vsub.f32 %v3315, %v3341
        %v3346 = vsub.f32 %v3316, %v3342
        %v3347 = vsub.f32 %v3317, %v3343
        %v3348 = vmul.f32 %v3344, %v3344
        %v3349 = vmul.f32 %v3345, %v3345
        %v3350 = vmul.f32 %v3346, %v3346
        %v3351 = vmul.f32 %v3347, %v3347
        %v3352 = vsel %vm959, %v3348, 0.0
        %3353 = vadd.xlane.f32.xlu0 %v3352
        %v3354 = vpop.xlane.xlu0 %3353
        %v3355 = vsel %vm959, %v3349, 0.0
        %3356 = vadd.xlane.f32.xlu0 %v3355
        %v3357 = vpop.xlane.xlu0 %3356
        %v3358 = vsel %vm959, %v3350, 0.0
        %3359 = vadd.xlane.f32.xlu0 %v3358
        %v3360 = vpop.xlane.xlu0 %3359
        %v3361 = vsel %vm959, %v3351, 0.0
        %3362 = vadd.xlane.f32.xlu0 %v3361
        %v3363 = vpop.xlane.xlu0 %3362
        %v3364 = vmul.f32 %v3354, %v972
        %v3365 = vmul.f32 %v3357, %v972
        %v3366 = vmul.f32 %v3360, %v972
        %v3367 = vmul.f32 %v3363, %v972
        %v3368 = vadd.f32 %v3364, 1e-05
        %v3369 = vadd.f32 %v3365, 1e-05
        %v3370 = vadd.f32 %v3366, 1e-05
        %v3371 = vadd.f32 %v3367, 1e-05
        %v3372 = vrsqrt.pop %v3368
        %v3373 = vrsqrt.pop %v3369
        %v3374 = vrsqrt.pop %v3370
        %v3375 = vrsqrt.pop %v3371
        %v3376 = vmul.f32 %v3344, %v3372
        %v3377 = vmul.f32 %v3345, %v3373
        %v3378 = vmul.f32 %v3346, %v3374
        %v3379 = vmul.f32 %v3347, %v3375
        %v3381 = vlaneseq
        %v3382 = vshrl.u32 %v3381, 7
        %v3383 = vsub.s32 0, %v3382
        %v3384 = vrot.slane %v3326, %v3383
        %v3386 = vmul.f32 %v3376, %v3384
        %v3387 = vmul.f32 %v3377, %v3384
        %v3388 = vmul.f32 %v3378, %v3384
        %v3389 = vmul.f32 %v3379, %v3384
        %v3391 = vlaneseq
        %v3392 = vshrl.u32 %v3391, 7
        %v3393 = vsub.s32 0, %v3392
        %v3394 = vrot.slane %v3327, %v3393
        %v3396 = vadd.f32 %v3386, %v3394
        %v3397 = vadd.f32 %v3387, %v3394
        %v3398 = vadd.f32 %v3388, %v3394
        %v3399 = vadd.f32 %v3389, %v3394
        %v3404 = vcombine.high %v3396, %v3396
        %v3405 = vcombine.high %v3397, %v3397
        %v3406 = vcombine.high %v3398, %v3398
        %v3407 = vcombine.high %v3399, %v3399
        %vm3412 = vcmask 257024
        %v3413 = vsel %vm3412, %v3396, 0.0
        %v3414 = vrot.slane %v3413, 4
        %v3415 = vadd.f32 %v3413, %v3414
        %v3416 = vrot.slane %v3415, 2
        %v3417 = vadd.f32 %v3415, %v3416
        %v3418 = vrot.slane %v3417, 1
        %v3419 = vadd.f32 %v3417, %v3418
        %v3420 = vsel %vm3412, %v3404, 0.0
        %v3421 = vrot.slane %v3420, 4
        %v3422 = vadd.f32 %v3420, %v3421
        %v3423 = vrot.slane %v3422, 2
        %v3424 = vadd.f32 %v3422, %v3423
        %v3425 = vrot.slane %v3424, 1
        %v3426 = vadd.f32 %v3424, %v3425
        %v3427 = vsel %vm3412, %v3397, 0.0
        %v3428 = vrot.slane %v3427, 4
        %v3429 = vadd.f32 %v3427, %v3428
        %v3430 = vrot.slane %v3429, 2
        %v3431 = vadd.f32 %v3429, %v3430
        %v3432 = vrot.slane %v3431, 1
        %v3433 = vadd.f32 %v3431, %v3432
        %v3434 = vsel %vm3412, %v3405, 0.0
        %v3435 = vrot.slane %v3434, 4
        %v3436 = vadd.f32 %v3434, %v3435
        %v3437 = vrot.slane %v3436, 2
        %v3438 = vadd.f32 %v3436, %v3437
        %v3439 = vrot.slane %v3438, 1
        %v3440 = vadd.f32 %v3438, %v3439
        %v3441 = vsel %vm3412, %v3398, 0.0
        %v3442 = vrot.slane %v3441, 4
        %v3443 = vadd.f32 %v3441, %v3442
        %v3444 = vrot.slane %v3443, 2
        %v3445 = vadd.f32 %v3443, %v3444
        %v3446 = vrot.slane %v3445, 1
        %v3447 = vadd.f32 %v3445, %v3446
        %v3448 = vsel %vm3412, %v3406, 0.0
        %v3449 = vrot.slane %v3448, 4
        %v3450 = vadd.f32 %v3448, %v3449
        %v3451 = vrot.slane %v3450, 2
        %v3452 = vadd.f32 %v3450, %v3451
        %v3453 = vrot.slane %v3452, 1
        %v3454 = vadd.f32 %v3452, %v3453
        %v3455 = vsel %vm3412, %v3399, 0.0
        %v3456 = vrot.slane %v3455, 4
        %v3457 = vadd.f32 %v3455, %v3456
        %v3458 = vrot.slane %v3457, 2
        %v3459 = vadd.f32 %v3457, %v3458
        %v3460 = vrot.slane %v3459, 1
        %v3461 = vadd.f32 %v3459, %v3460
        %v3462 = vsel %vm3412, %v3407, 0.0
        %v3463 = vrot.slane %v3462, 4
        %v3464 = vadd.f32 %v3462, %v3463
        %v3465 = vrot.slane %v3464, 2
        %v3466 = vadd.f32 %v3464, %v3465
        %v3467 = vrot.slane %v3466, 1
        %v3468 = vadd.f32 %v3466, %v3467
        %v3469 = vrcp.pop 4.0
        %v3470 = vmul.f32 %v3419, %v3469
        %v3471 = vmul.f32 %v3426, %v3469
        %v3472 = vmul.f32 %v3433, %v3469
        %v3473 = vmul.f32 %v3440, %v3469
        %v3474 = vmul.f32 %v3447, %v3469
        %v3475 = vmul.f32 %v3454, %v3469
        %v3476 = vmul.f32 %v3461, %v3469
        %v3477 = vmul.f32 %v3468, %v3469
        %vm3486 = vcmask 1041409
        %v3487 = vsel %vm3486, %v3471, %v3470
        %vm3488 = vcmask 1042434
        %v3489 = vsel %vm3488, %v3472, %v3487
        %vm3490 = vcmask 1043459
        %v3491 = vsel %vm3490, %v3473, %v3489
        %vm3492 = vcmask 1044484
        %v3493 = vsel %vm3492, %v3474, %v3491
        %vm3494 = vcmask 1045509
        %v3495 = vsel %vm3494, %v3475, %v3493
        %vm3496 = vcmask 1046534
        %v3497 = vsel %vm3496, %v3476, %v3495
        %vm3498 = vcmask 1047559
        %v3499 = vsel %vm3498, %v3477, %v3497
        %3501 = vst.msk [vmem:[%s763] sm:$0xff] %vm959, %v3499
      $region96: #{vivit_forward.2} parent=87 // pred_fallthru
        _
      %p3502 = scmp.lt.s32.totalorder %s32, 0
      %s3503 = scalar_select %p3502, %s32, 0
      %s3504 = smul.addr %s3503, 8
      %s3505 = scalar_lea.vmem %s17, %s3504
      // Predicated region
      $region97: #{vivit_forward.2} parent=87 // pred_check
        %p3506 = pneg %p480
      $region98: #{vivit_forward.2} parent=87 // pred_check_branch
        %3508 = sbr.rel (%p3506) target = $region100
      $region99: #{vivit_forward.2} parent=87 // pred_region
        _
      $region100: #{vivit_forward.2} parent=87 // pred_fallthru
        _
      // Predicated region
      $region101: #{vivit_forward.2} parent=87 // pred_check
        %p3509 = pneg %p480
      $region102: #{vivit_forward.2} parent=87 // pred_check_branch
        %3511 = sbr.rel (%p3509) target = $region104
      $region103: #{vivit_forward.2} parent=87 // pred_region
        %p3512 = scmp.lt.s32.totalorder %s32, 0
        %s3513 = scalar_select %p3512, %s32, 0
        %s3514 = smul.addr %s3513, 8
        %s3515 = scalar_lea.vmem %s17, %s3514
      $region104: #{vivit_forward.2} parent=87 // pred_fallthru
        _
    $region88: #{vivit_forward.2} parent=5 // pred_fallthru
      _
    %p3516 = scmp.le.s32.totalorder 2, %s23
    // Predicated region
    $region105: #{vivit_forward.2} parent=5 // pred_check
      %p3517 = pneg %p3516
    $region106: #{vivit_forward.2} parent=5 // pred_check_branch
      %3519 = sbr.rel (%p3517) target = $region108
    $region107: #{vivit_forward.2} parent=5 // pred_region
      %s3520 = ssub.s32 %s23, 2
    $region108: #{vivit_forward.2} parent=5 // pred_fallthru
      _
  $region6: #{vivit_forward.2} parent=0 // loop_footer
    %s27 = sadd.s32 1, %s23
  $region7: #{vivit_forward.2} parent=0 // loop_footer_branch
    %22 = sbr.rel target = $region3
  $region8: #{vivit_forward.2} parent=0 // loop_exit
    _

</llo_original>
